<compile_context>
chip_gen: v7x
topology: tpu7x:2x2x1
jax: 0.10.0
libtpu: 0.0.40
codegen_flags: <defaults>
</compile_context>

<pallas_src>
import math

import jax
import jax.numpy as jnp
from jax.experimental import pallas as pl
from jax.experimental.pallas import tpu as pltpu

# ---------------------------------------------------------------------------
# parameter packing indices
# ---------------------------------------------------------------------------
# square (E, E) weights packed into W_sq[7, E, E]
W_Q, W_PM2, W_PB2, W_WE1, W_WE2, W_OUT, W_FFN = range(7)

# (E,) vectors packed into V_all[_NUM_V, E]
(LN_G, LN_B, B_Q, LNQ_G, LNQ_B, LNK_G, LNK_B,
 LNPM_G, LNPM_B, LNPB_G, LNPB_B, LNWE_G, LNWE_B,
 B_PM2, B_PB2, B_WE1, B_WE2, B_OUT, B_FFN) = range(19)
_NUM_V = 19

# (2E,) vectors packed into V2_all[2, 2E]
B_KV, B_P1 = range(2)   # b_k|b_v   and   b_pmult1|b_pbias1

_LN_GAMMA_IDS = (LN_G, LNQ_G, LNK_G, LNPM_G, LNPB_G, LNWE_G)
_LN_BETA_IDS = (LN_B, LNQ_B, LNK_B, LNPM_B, LNPB_B, LNWE_B)


# ---------------------------------------------------------------------------
# in-kernel math helpers (traced inside the Pallas kernel)
# ---------------------------------------------------------------------------
def _layernorm(x, g, b, eps=1e-5):
    mu = jnp.mean(x, axis=-1, keepdims=True)
    var = jnp.mean((x - mu) ** 2, axis=-1, keepdims=True)
    return (x - mu) * jax.lax.rsqrt(var + eps) * g + b


def _mish(x):
    # mish(x) = x * tanh(softplus(x)), numerically-stable softplus
    sp = jnp.where(x > 20.0, x, jnp.log1p(jnp.exp(jnp.minimum(x, 20.0))))
    return x * jnp.tanh(sp)


# ---------------------------------------------------------------------------
# Pallas kernel: one grid step == one (batch, query-tile) slab
# ---------------------------------------------------------------------------
def _pst_v2_kernel(xf_ref, xt_ref, df_ref, dt_ref, pos_ref,
                   wsq_ref, wkv_ref, wp1_ref, v_ref, v2_ref,
                   y_ref, pos_out_ref):
    N = xf_ref.shape[1]          # all points
    TI = xt_ref.shape[1]         # query tile rows
    E = xf_ref.shape[2]

    xf = xf_ref[0]               # (N, E)   all points (for k, v)
    xt = xt_ref[0]               # (TI, E)  query tile rows (for q, residual)
    dist_j = df_ref[0]           # (N, 1)   softmax column weights
    dist_i = dt_ref[0]           # (TI, 1)  row mask

    pos2d = pos_ref[0]           # (TI*N, E) contiguous pair rows
    cdt = pos2d.dtype            # pairwise MXU compute dtype (f32 or bf16)

    V = v_ref[...]               # (_NUM_V, E)
    V2 = v2_ref[...]             # (2, 2E)

    def vec(i):
        return V[i:i + 1, :]     # (1, E), broadcasts over rows

    # ----------------------- encoder pre-LN (self.ln, shared) --------------
    xf_n = _layernorm(xf, vec(LN_G), vec(LN_B))
    xt_n = _layernorm(xt, vec(LN_G), vec(LN_B))   # == rows of xf_n for this tile

    # ----------------------- VectorAttention projections -------------------
    # q only for the tile rows; k|v fused as a single (E, 2E) matmul.
    q = _mish(_layernorm(
        jnp.dot(xt_n, wsq_ref[W_Q], preferred_element_type=jnp.float32) + vec(B_Q),
        vec(LNQ_G), vec(LNQ_B)))                                    # (TI, E)
    kv = jnp.dot(xf_n, wkv_ref[...],
                 preferred_element_type=jnp.float32) + V2[B_KV:B_KV + 1, :]
    k = _mish(_layernorm(kv[:, :E], vec(LNK_G), vec(LNK_B)))        # (N, E)
    v = kv[:, E:]                                                   # (N, E)

    # ----------------------- fused positional layer-1 (pmult | pbias) ------
    h = jnp.dot(pos2d, wp1_ref[...].astype(cdt),
                preferred_element_type=jnp.float32) + V2[B_P1:B_P1 + 1, :]
    h_pm = _mish(_layernorm(h[:, :E], vec(LNPM_G), vec(LNPM_B)))
    h_pb = _mish(_layernorm(h[:, E:], vec(LNPB_G), vec(LNPB_B)))
    pem = jnp.dot(h_pm.astype(cdt), wsq_ref[W_PM2].astype(cdt),
                  preferred_element_type=jnp.float32) + vec(B_PM2)  # (TI*N, E)
    peb = jnp.dot(h_pb.astype(cdt), wsq_ref[W_PB2].astype(cdt),
                  preferred_element_type=jnp.float32) + vec(B_PB2)  # (TI*N, E)

    # relation_qk[i, j] = (k[j] - q[i]) * pem[i, j] + peb[i, j]  (single pass)
    base = (k[None, :, :] - q[:, None, :]).reshape(TI * N, E)
    rel2d = base * pem + peb                                        # (TI*N, E)

    # ----------------------- weight encoding -------------------------------
    hw = _mish(_layernorm(
        jnp.dot(rel2d.astype(cdt), wsq_ref[W_WE1].astype(cdt),
                preferred_element_type=jnp.float32) + vec(B_WE1),
        vec(LNWE_G), vec(LNWE_B)))
    w = (jnp.dot(hw.astype(cdt), wsq_ref[W_WE2].astype(cdt),
                 preferred_element_type=jnp.float32)
         + vec(B_WE2)).reshape(TI, N, E)

    # --------- distribution-weighted softmax over j (dim=-2 in torch) ------
    maxes = jnp.max(w, axis=1, keepdims=True)                       # (TI, 1, E)
    w_exp = jnp.exp(w - maxes) * dist_j.reshape(1, N, 1)            # (TI, N, E)
    denom = jnp.sum(w_exp, axis=1, keepdims=True)                   # (TI, 1, E)
    probs = w_exp * pl.reciprocal(denom, approx=True)

    # einsum('b i j k, b j k -> b i k').  Columns with dist_j == 0 are already
    # zero inside probs, so the original (dist_i * dist_j > 0) mask reduces to
    # a post-reduction dist_i > 0 factor (distribution weights are >= 0).
    att = jnp.sum(probs * v[None, :, :], axis=1)                    # (TI, E)
    att = att * (dist_i > 0.0).astype(att.dtype)

    # ----------------------- encoder tail -----------------------------------
    out1 = xt + jnp.dot(att, wsq_ref[W_OUT],
                        preferred_element_type=jnp.float32) + vec(B_OUT)
    out2 = _layernorm(out1, vec(LN_G), vec(LN_B))
    out2 = _mish(jnp.dot(out2, wsq_ref[W_FFN],
                         preferred_element_type=jnp.float32) + vec(B_FFN))
    y_ref[0] = _layernorm(out1 + out2, vec(LN_G), vec(LN_B))

    pos_out_ref[0] = rel2d.astype(pos_out_ref.dtype)


# ---------------------------------------------------------------------------
# tile-size selection: keep ~16 live f32 copies of the (TI, N, E) slab small
# enough for v7x's 64 MiB VMEM (and the scoped limit everywhere).
# ---------------------------------------------------------------------------
def _choose_tile_i(N, E, budget_bytes=36 << 20):
    per_row = 16 * N * E * 4
    max_ti = max(1, budget_bytes // per_row)
    if N <= max_ti or N % 8 != 0:
        return N
    divs = [t for t in range(8, N, 8) if N % t == 0]
    fitting = [t for t in divs if t <= max_ti]
    if fitting:
        return max(fitting)
    return min(divs) if divs else N


# ---------------------------------------------------------------------------
# wrapper
# ---------------------------------------------------------------------------
def pst_v2_encoder(x, distribution, pos, params, *, tile_i=None,
                   pairwise_dtype=jnp.float32):
    """Returns (encoded_features, updated_pos) matching the PyTorch forward.

    pairwise_dtype=jnp.bfloat16 halves the dominant pos/rel HBM streams and
    runs the pairwise MXU matmuls in bf16 (recommended on v6e / v7x).
    """
    W_sq, W_kv, W_p1, V_all, V2_all = params
    B, N, E = x.shape
    assert pos.shape == (B, N, N, E)
    assert distribution.shape == (B, N, 1)

    TI = _choose_tile_i(N, E) if tile_i is None else tile_i
    assert N % TI == 0 and (TI % 8 == 0 or TI == N), (N, TI)
    NI = N // TI

    x = x.astype(jnp.float32)
    distribution = distribution.astype(jnp.float32)
    # pairwise tensors as contiguous pair-rows: (B, N*N, E)  (free reshape)
    pos_pairs = pos.astype(pairwise_dtype).reshape(B, N * N, E)

    # explicit VMEM budget derived from the chosen tile (default scoped limits
    # are 16/32 MiB, far below physical); capped to stay v7x-safe.
    pair_elems = TI * N * E
    pw_isize = jnp.dtype(pairwise_dtype).itemsize
    est = (2 * 2 * pair_elems * pw_isize          # pos-in + rel-out, double-buffered
           + 12 * pair_elems * 4                  # f32 pairwise intermediates
           + 6 * N * E * 4                        # per-point tensors
           + 2 * 4 * (11 * E * E + (_NUM_V + 4) * E))   # weights, double-buffered
    vmem_limit = int(min(max(est * 3 // 2, 32 << 20), 96 << 20))

    y, pos_out_pairs = pl.pallas_call(
        _pst_v2_kernel,
        out_shape=(
            jax.ShapeDtypeStruct((B, N, E), jnp.float32),
            jax.ShapeDtypeStruct((B, N * N, E), pairwise_dtype),
        ),
        grid_spec=pltpu.PrefetchScalarGridSpec(
            num_scalar_prefetch=0,
            grid=(B, NI),                                   # i-tile axis innermost
            in_specs=[
                pl.BlockSpec((1, N, E), lambda b, i: (b, 0, 0)),          # x (all rows)
                pl.BlockSpec((1, TI, E), lambda b, i: (b, i, 0)),         # x (tile rows)
                pl.BlockSpec((1, N, 1), lambda b, i: (b, 0, 0)),          # dist (all rows)
                pl.BlockSpec((1, TI, 1), lambda b, i: (b, i, 0)),         # dist (tile rows)
                pl.BlockSpec((1, TI * N, E), lambda b, i: (b, i, 0)),     # pos pair rows
                pl.BlockSpec((7, E, E), lambda b, i: (0, 0, 0)),          # W_sq (const)
                pl.BlockSpec((E, 2 * E), lambda b, i: (0, 0)),            # W_kv (const)
                pl.BlockSpec((E, 2 * E), lambda b, i: (0, 0)),            # W_p1 (const)
                pl.BlockSpec((_NUM_V, E), lambda b, i: (0, 0)),           # V_all (const)
                pl.BlockSpec((2, 2 * E), lambda b, i: (0, 0)),            # V2_all (const)
            ],
            out_specs=[
                pl.BlockSpec((1, TI, E), lambda b, i: (b, i, 0)),         # y
                pl.BlockSpec((1, TI * N, E), lambda b, i: (b, i, 0)),     # relation_qk
            ],
        ),
        compiler_params=pltpu.CompilerParams(
            dimension_semantics=("parallel", "parallel"),
            vmem_limit_bytes=vmem_limit),
    )(x, x, distribution, distribution, pos_pairs,
      W_sq, W_kv, W_p1, V_all, V2_all)

    return y, pos_out_pairs.reshape(B, N, N, E)


# ---------------------------------------------------------------------------
# deterministic synthetic parameter init (num_heads = 1)
# ---------------------------------------------------------------------------
def init_params(embedding_dim, key):
    E = embedding_dim
    ks = jax.random.split(key, 5)
    W_sq = jax.random.normal(ks[0], (7, E, E), jnp.float32) / math.sqrt(E)
    W_kv = jax.random.normal(ks[1], (E, 2 * E), jnp.float32) / math.sqrt(E)   # k | v
    W_p1 = jax.random.normal(ks[2], (E, 2 * E), jnp.float32) / math.sqrt(E)   # pm1 | pb1
    V_all = jax.random.normal(ks[3], (_NUM_V, E), jnp.float32) * 0.02
    V2_all = jax.random.normal(ks[4], (2, 2 * E), jnp.float32) * 0.02
    # LayerNorm affine params: gamma = 1, beta = 0
    V_all = V_all.at[jnp.array(_LN_GAMMA_IDS)].set(1.0)
    V_all = V_all.at[jnp.array(_LN_BETA_IDS)].set(0.0)
    return W_sq, W_kv, W_p1, V_all, V2_all


# ---------------------------------------------------------------------------
# pure-JAX reference (mirrors the PyTorch forward exactly) for validation
# ---------------------------------------------------------------------------
def _reference(x, distribution, pos, params):
    W_sq, W_kv, W_p1, V_all, V2_all = params
    E = x.shape[-1]

    def ln(z, g, b, eps=1e-5):
        mu = z.mean(-1, keepdims=True)
        var = ((z - mu) ** 2).mean(-1, keepdims=True)
        return (z - mu) / jnp.sqrt(var + eps) * g + b

    def mish(z):
        return z * jnp.tanh(jax.nn.softplus(z))

    x_norm = ln(x, V_all[LN_G], V_all[LN_B])
    q = mish(ln(x_norm @ W_sq[W_Q] + V_all[B_Q], V_all[LNQ_G], V_all[LNQ_B]))
    kv = x_norm @ W_kv + V2_all[B_KV]
    k = mish(ln(kv[..., :E], V_all[LNK_G], V_all[LNK_B]))
    v = kv[..., E:]

    h = pos @ W_p1 + V2_all[B_P1]
    pem = mish(ln(h[..., :E], V_all[LNPM_G], V_all[LNPM_B])) @ W_sq[W_PM2] + V_all[B_PM2]
    peb = mish(ln(h[..., E:], V_all[LNPB_G], V_all[LNPB_B])) @ W_sq[W_PB2] + V_all[B_PB2]
    rel = (k[:, None, :, :] - q[:, :, None, :]) * pem + peb

    w = mish(ln(rel @ W_sq[W_WE1] + V_all[B_WE1],
                V_all[LNWE_G], V_all[LNWE_B])) @ W_sq[W_WE2] + V_all[B_WE2]
    maxes = w.max(axis=2, keepdims=True)
    w_exp = jnp.exp(w - maxes) * distribution[:, None, :, :]
    probs = w_exp / w_exp.sum(axis=2, keepdims=True)
    mask = (distribution * jnp.swapaxes(distribution, -1, -2)) > 0
    probs = probs * mask[..., None]
    att = jnp.einsum('bijk,bjk->bik', probs, v)

    out1 = x + att @ W_sq[W_OUT] + V_all[B_OUT]
    out2 = mish(ln(out1, V_all[LN_G], V_all[LN_B]) @ W_sq[W_FFN] + V_all[B_FFN])
    return ln(out1 + out2, V_all[LN_G], V_all[LN_B]), rel


if __name__ == "__main__":
    B, N, E = 2, 16, 32   # batch, set size, embedding_dim (num_heads = 1)

    key = jax.random.PRNGKey(0)
    k_x, k_pos, k_d, k_p = jax.random.split(key, 4)

    x = jax.random.normal(k_x, (B, N, E), jnp.float32)
    pos = jax.random.normal(k_pos, (B, N, N, E), jnp.float32) * 0.5
    distribution = jnp.abs(jax.random.normal(k_d, (B, N, 1), jnp.float32))
    # zero out one point per batch to exercise the (dist_i * dist_j > 0) mask
    distribution = distribution.at[:, -1, :].set(0.0)

    params = init_params(E, k_p)

    # f32 path; tile_i=8 -> grid (B, 2) exercises the query-tiling pipeline
    y, pos_out = pst_v2_encoder(x, distribution, pos, params, tile_i=8)
    jax.block_until_ready((y, pos_out))
    assert y.shape == (B, N, E) and pos_out.shape == (B, N, N, E)

    y_ref, rel_ref = _reference(x, distribution, pos, params)
    assert jnp.allclose(y, y_ref, rtol=5e-2, atol=5e-2)
    assert jnp.allclose(pos_out, rel_ref, rtol=5e-2, atol=5e-2)

    # bf16 pairwise path (halves pos/rel HBM traffic, bf16 MXU — for v6e/v7x)
    y16, pos16 = pst_v2_encoder(x, distribution, pos, params, tile_i=8,
                                pairwise_dtype=jnp.bfloat16)
    jax.block_until_ready((y16, pos16))
    assert y16.shape == (B, N, E) and pos16.dtype == jnp.bfloat16

    print("KERNEL_OK")
</pallas_src>

<mosaic_0001>
module attributes {stable_mosaic.version = 11 : i64} {
  func.func @_pst_v2_kernel(%arg0: i32, %arg1: i32, %arg2: memref<1x16x32xf32, #tpu.memory_space<vmem>>, %arg3: memref<1x8x32xf32, #tpu.memory_space<vmem>>, %arg4: memref<1x16x1xf32, #tpu.memory_space<vmem>>, %arg5: memref<1x8x1xf32, #tpu.memory_space<vmem>>, %arg6: memref<1x128x32xf32, #tpu.memory_space<vmem>>, %arg7: memref<7x32x32xf32, #tpu.memory_space<vmem>>, %arg8: memref<32x64xf32, #tpu.memory_space<vmem>>, %arg9: memref<32x64xf32, #tpu.memory_space<vmem>>, %arg10: memref<19x32xf32, #tpu.memory_space<vmem>>, %arg11: memref<2x64xf32, #tpu.memory_space<vmem>>, %arg12: memref<1x8x32xf32, #tpu.memory_space<vmem>>, %arg13: memref<1x128x32xf32, #tpu.memory_space<vmem>>) attributes {dimension_semantics = [#tpu.dimension_semantics<parallel>, #tpu.dimension_semantics<parallel>], iteration_bounds = array<i64: 2, 2>, scalar_prefetch = 0 : i64, scratch_operands = 0 : i64, tpu.core_type = #tpu.core_type<tc>, window_params = [{transform_indices = @transform_0, window_bounds = array<i64: 1, 16, 32>}, {transform_indices = @transform_1, window_bounds = array<i64: 1, 8, 32>}, {transform_indices = @transform_2, window_bounds = array<i64: 1, 16, 1>}, {transform_indices = @transform_3, window_bounds = array<i64: 1, 8, 1>}, {transform_indices = @transform_4, window_bounds = array<i64: 1, 128, 32>}, {pipeline_mode = #tpu.pipeline_mode<synchronous>, transform_indices = @transform_5, window_bounds = array<i64: 7, 32, 32>}, {pipeline_mode = #tpu.pipeline_mode<synchronous>, transform_indices = @transform_6, window_bounds = array<i64: 32, 64>}, {pipeline_mode = #tpu.pipeline_mode<synchronous>, transform_indices = @transform_7, window_bounds = array<i64: 32, 64>}, {pipeline_mode = #tpu.pipeline_mode<synchronous>, transform_indices = @transform_8, window_bounds = array<i64: 19, 32>}, {pipeline_mode = #tpu.pipeline_mode<synchronous>, transform_indices = @transform_9, window_bounds = array<i64: 2, 64>}, {transform_indices = @transform_10, window_bounds = array<i64: 1, 8, 32>}, {transform_indices = @transform_11, window_bounds = array<i64: 1, 128, 32>}]} {
    %c0 = arith.constant 0 : index
    %c0_0 = arith.constant 0 : index
    %c0_1 = arith.constant 0 : index
    %0 = vector.load %arg2[%c0, %c0_0, %c0_1] : memref<1x16x32xf32, #tpu.memory_space<vmem>>, vector<1x16x32xf32>
    %1 = vector.shape_cast %0 : vector<1x16x32xf32> to vector<16x32xf32>
    %c0_2 = arith.constant 0 : index
    %c0_3 = arith.constant 0 : index
    %c0_4 = arith.constant 0 : index
    %2 = vector.load %arg3[%c0_2, %c0_3, %c0_4] : memref<1x8x32xf32, #tpu.memory_space<vmem>>, vector<1x8x32xf32>
    %3 = vector.shape_cast %2 : vector<1x8x32xf32> to vector<8x32xf32>
    %c0_5 = arith.constant 0 : index
    %c0_6 = arith.constant 0 : index
    %c0_7 = arith.constant 0 : index
    %4 = vector.load %arg4[%c0_5, %c0_6, %c0_7] : memref<1x16x1xf32, #tpu.memory_space<vmem>>, vector<1x16x1xf32>
    %5 = vector.shape_cast %4 : vector<1x16x1xf32> to vector<16x1xf32>
    %c0_8 = arith.constant 0 : index
    %c0_9 = arith.constant 0 : index
    %c0_10 = arith.constant 0 : index
    %6 = vector.load %arg5[%c0_8, %c0_9, %c0_10] : memref<1x8x1xf32, #tpu.memory_space<vmem>>, vector<1x8x1xf32>
    %7 = vector.shape_cast %6 : vector<1x8x1xf32> to vector<8x1xf32>
    %c0_11 = arith.constant 0 : index
    %c0_12 = arith.constant 0 : index
    %c0_13 = arith.constant 0 : index
    %8 = vector.load %arg6[%c0_11, %c0_12, %c0_13] : memref<1x128x32xf32, #tpu.memory_space<vmem>>, vector<1x128x32xf32>
    %9 = vector.shape_cast %8 : vector<1x128x32xf32> to vector<128x32xf32>
    %c0_14 = arith.constant 0 : index
    %c0_15 = arith.constant 0 : index
    %10 = vector.load %arg10[%c0_14, %c0_15] : memref<19x32xf32, #tpu.memory_space<vmem>>, vector<19x32xf32>
    %c0_16 = arith.constant 0 : index
    %c0_17 = arith.constant 0 : index
    %11 = vector.load %arg11[%c0_16, %c0_17] : memref<2x64xf32, #tpu.memory_space<vmem>>, vector<2x64xf32>
    %12 = vector.extract_strided_slice %10 {offsets = [0, 0], sizes = [1, 32], strides = [1, 1]} : vector<19x32xf32> to vector<1x32xf32>
    %13 = vector.extract_strided_slice %10 {offsets = [1, 0], sizes = [1, 32], strides = [1, 1]} : vector<19x32xf32> to vector<1x32xf32>
    %cst = arith.constant dense<0.000000e+00> : vector<16xf32>
    %14 = vector.multi_reduction <add>, %1, %cst [1] : vector<16x32xf32> to vector<16xf32>
    %15 = vector.shape_cast %14 : vector<16xf32> to vector<16x1xf32>
    %cst_18 = arith.constant 3.200000e+01 : f32
    %16 = vector.broadcast %cst_18 : f32 to vector<16x1xf32>
    %17 = arith.divf %15, %16 : vector<16x1xf32>
    %18 = vector.broadcast %17 : vector<16x1xf32> to vector<16x32xf32>
    %19 = arith.subf %1, %18 : vector<16x32xf32>
    %20 = arith.mulf %19, %19 : vector<16x32xf32>
    %cst_19 = arith.constant dense<0.000000e+00> : vector<16xf32>
    %21 = vector.multi_reduction <add>, %20, %cst_19 [1] : vector<16x32xf32> to vector<16xf32>
    %22 = vector.shape_cast %21 : vector<16xf32> to vector<16x1xf32>
    %cst_20 = arith.constant 3.200000e+01 : f32
    %23 = vector.broadcast %cst_20 : f32 to vector<16x1xf32>
    %24 = arith.divf %22, %23 : vector<16x1xf32>
    %25 = vector.broadcast %17 : vector<16x1xf32> to vector<16x32xf32>
    %26 = arith.subf %1, %25 : vector<16x32xf32>
    %cst_21 = arith.constant 9.99999974E-6 : f32
    %27 = vector.broadcast %cst_21 : f32 to vector<16x1xf32>
    %28 = arith.addf %24, %27 : vector<16x1xf32>
    %29 = math.rsqrt %28 : vector<16x1xf32>
    %30 = vector.broadcast %29 : vector<16x1xf32> to vector<16x32xf32>
    %31 = arith.mulf %26, %30 : vector<16x32xf32>
    %32 = vector.broadcast %12 : vector<1x32xf32> to vector<16x32xf32>
    %33 = arith.mulf %31, %32 : vector<16x32xf32>
    %34 = vector.broadcast %13 : vector<1x32xf32> to vector<16x32xf32>
    %35 = arith.addf %33, %34 : vector<16x32xf32>
    %36 = vector.extract_strided_slice %10 {offsets = [0, 0], sizes = [1, 32], strides = [1, 1]} : vector<19x32xf32> to vector<1x32xf32>
    %37 = vector.extract_strided_slice %10 {offsets = [1, 0], sizes = [1, 32], strides = [1, 1]} : vector<19x32xf32> to vector<1x32xf32>
    %cst_22 = arith.constant dense<0.000000e+00> : vector<8xf32>
    %38 = vector.multi_reduction <add>, %3, %cst_22 [1] : vector<8x32xf32> to vector<8xf32>
    %39 = vector.shape_cast %38 : vector<8xf32> to vector<8x1xf32>
    %cst_23 = arith.constant 3.200000e+01 : f32
    %40 = vector.broadcast %cst_23 : f32 to vector<8x1xf32>
    %41 = arith.divf %39, %40 : vector<8x1xf32>
    %42 = vector.broadcast %41 : vector<8x1xf32> to vector<8x32xf32>
    %43 = arith.subf %3, %42 : vector<8x32xf32>
    %44 = arith.mulf %43, %43 : vector<8x32xf32>
    %cst_24 = arith.constant dense<0.000000e+00> : vector<8xf32>
    %45 = vector.multi_reduction <add>, %44, %cst_24 [1] : vector<8x32xf32> to vector<8xf32>
    %46 = vector.shape_cast %45 : vector<8xf32> to vector<8x1xf32>
    %cst_25 = arith.constant 3.200000e+01 : f32
    %47 = vector.broadcast %cst_25 : f32 to vector<8x1xf32>
    %48 = arith.divf %46, %47 : vector<8x1xf32>
    %49 = vector.broadcast %41 : vector<8x1xf32> to vector<8x32xf32>
    %50 = arith.subf %3, %49 : vector<8x32xf32>
    %cst_26 = arith.constant 9.99999974E-6 : f32
    %51 = vector.broadcast %cst_26 : f32 to vector<8x1xf32>
    %52 = arith.addf %48, %51 : vector<8x1xf32>
    %53 = math.rsqrt %52 : vector<8x1xf32>
    %54 = vector.broadcast %53 : vector<8x1xf32> to vector<8x32xf32>
    %55 = arith.mulf %50, %54 : vector<8x32xf32>
    %56 = vector.broadcast %36 : vector<1x32xf32> to vector<8x32xf32>
    %57 = arith.mulf %55, %56 : vector<8x32xf32>
    %58 = vector.broadcast %37 : vector<1x32xf32> to vector<8x32xf32>
    %59 = arith.addf %57, %58 : vector<8x32xf32>
    %c0_27 = arith.constant 0 : index
    %c0_28 = arith.constant 0 : index
    %c0_29 = arith.constant 0 : index
    %60 = vector.load %arg7[%c0_27, %c0_28, %c0_29] : memref<7x32x32xf32, #tpu.memory_space<vmem>>, vector<1x32x32xf32>
    %61 = vector.shape_cast %60 : vector<1x32x32xf32> to vector<32x32xf32>
    %cst_30 = arith.constant dense<0.000000e+00> : vector<8x32xf32>
    %62 = tpu.matmul %59, %61, %cst_30 {dimension_numbers = #tpu.dot_dimension_numbers<[1], [0], [0], [1], [0, 0, 1, 1], [], []>} : vector<8x32xf32>, vector<32x32xf32>, vector<8x32xf32> -> vector<8x32xf32>
    %63 = vector.extract_strided_slice %10 {offsets = [2, 0], sizes = [1, 32], strides = [1, 1]} : vector<19x32xf32> to vector<1x32xf32>
    %64 = vector.broadcast %63 : vector<1x32xf32> to vector<8x32xf32>
    %65 = arith.addf %62, %64 : vector<8x32xf32>
    %66 = vector.extract_strided_slice %10 {offsets = [3, 0], sizes = [1, 32], strides = [1, 1]} : vector<19x32xf32> to vector<1x32xf32>
    %67 = vector.extract_strided_slice %10 {offsets = [4, 0], sizes = [1, 32], strides = [1, 1]} : vector<19x32xf32> to vector<1x32xf32>
    %cst_31 = arith.constant dense<0.000000e+00> : vector<8xf32>
    %68 = vector.multi_reduction <add>, %65, %cst_31 [1] : vector<8x32xf32> to vector<8xf32>
    %69 = vector.shape_cast %68 : vector<8xf32> to vector<8x1xf32>
    %cst_32 = arith.constant 3.200000e+01 : f32
    %70 = vector.broadcast %cst_32 : f32 to vector<8x1xf32>
    %71 = arith.divf %69, %70 : vector<8x1xf32>
    %72 = vector.broadcast %71 : vector<8x1xf32> to vector<8x32xf32>
    %73 = arith.subf %65, %72 : vector<8x32xf32>
    %74 = arith.mulf %73, %73 : vector<8x32xf32>
    %cst_33 = arith.constant dense<0.000000e+00> : vector<8xf32>
    %75 = vector.multi_reduction <add>, %74, %cst_33 [1] : vector<8x32xf32> to vector<8xf32>
    %76 = vector.shape_cast %75 : vector<8xf32> to vector<8x1xf32>
    %cst_34 = arith.constant 3.200000e+01 : f32
    %77 = vector.broadcast %cst_34 : f32 to vector<8x1xf32>
    %78 = arith.divf %76, %77 : vector<8x1xf32>
    %79 = vector.broadcast %71 : vector<8x1xf32> to vector<8x32xf32>
    %80 = arith.subf %65, %79 : vector<8x32xf32>
    %cst_35 = arith.constant 9.99999974E-6 : f32
    %81 = vector.broadcast %cst_35 : f32 to vector<8x1xf32>
    %82 = arith.addf %78, %81 : vector<8x1xf32>
    %83 = math.rsqrt %82 : vector<8x1xf32>
    %84 = vector.broadcast %83 : vector<8x1xf32> to vector<8x32xf32>
    %85 = arith.mulf %80, %84 : vector<8x32xf32>
    %86 = vector.broadcast %66 : vector<1x32xf32> to vector<8x32xf32>
    %87 = arith.mulf %85, %86 : vector<8x32xf32>
    %88 = vector.broadcast %67 : vector<1x32xf32> to vector<8x32xf32>
    %89 = arith.addf %87, %88 : vector<8x32xf32>
    %cst_36 = arith.constant 2.000000e+01 : f32
    %90 = vector.broadcast %cst_36 : f32 to vector<8x32xf32>
    %91 = arith.cmpf ogt, %89, %90 : vector<8x32xf32>
    %cst_37 = arith.constant 2.000000e+01 : f32
    %92 = vector.broadcast %cst_37 : f32 to vector<8x32xf32>
    %93 = arith.minimumf %89, %92 : vector<8x32xf32>
    %94 = math.exp %93 : vector<8x32xf32>
    %95 = math.log1p %94 : vector<8x32xf32>
    %96 = arith.select %91, %89, %95 : vector<8x32xi1>, vector<8x32xf32>
    %97 = math.tanh %96 : vector<8x32xf32>
    %98 = arith.mulf %89, %97 : vector<8x32xf32>
    %c0_38 = arith.constant 0 : index
    %c0_39 = arith.constant 0 : index
    %99 = vector.load %arg8[%c0_38, %c0_39] : memref<32x64xf32, #tpu.memory_space<vmem>>, vector<32x64xf32>
    %cst_40 = arith.constant dense<0.000000e+00> : vector<16x64xf32>
    %100 = tpu.matmul %35, %99, %cst_40 {dimension_numbers = #tpu.dot_dimension_numbers<[1], [0], [0], [1], [0, 0, 1, 1], [], []>} : vector<16x32xf32>, vector<32x64xf32>, vector<16x64xf32> -> vector<16x64xf32>
    %101 = vector.extract_strided_slice %11 {offsets = [0, 0], sizes = [1, 64], strides = [1, 1]} : vector<2x64xf32> to vector<1x64xf32>
    %102 = vector.broadcast %101 : vector<1x64xf32> to vector<16x64xf32>
    %103 = arith.addf %100, %102 : vector<16x64xf32>
    %104 = vector.extract_strided_slice %103 {offsets = [0, 0], sizes = [16, 32], strides = [1, 1]} : vector<16x64xf32> to vector<16x32xf32>
    %105 = vector.extract_strided_slice %10 {offsets = [5, 0], sizes = [1, 32], strides = [1, 1]} : vector<19x32xf32> to vector<1x32xf32>
    %106 = vector.extract_strided_slice %10 {offsets = [6, 0], sizes = [1, 32], strides = [1, 1]} : vector<19x32xf32> to vector<1x32xf32>
    %cst_41 = arith.constant dense<0.000000e+00> : vector<16xf32>
    %107 = vector.multi_reduction <add>, %104, %cst_41 [1] : vector<16x32xf32> to vector<16xf32>
    %108 = vector.shape_cast %107 : vector<16xf32> to vector<16x1xf32>
    %cst_42 = arith.constant 3.200000e+01 : f32
    %109 = vector.broadcast %cst_42 : f32 to vector<16x1xf32>
    %110 = arith.divf %108, %109 : vector<16x1xf32>
    %111 = vector.broadcast %110 : vector<16x1xf32> to vector<16x32xf32>
    %112 = arith.subf %104, %111 : vector<16x32xf32>
    %113 = arith.mulf %112, %112 : vector<16x32xf32>
    %cst_43 = arith.constant dense<0.000000e+00> : vector<16xf32>
    %114 = vector.multi_reduction <add>, %113, %cst_43 [1] : vector<16x32xf32> to vector<16xf32>
    %115 = vector.shape_cast %114 : vector<16xf32> to vector<16x1xf32>
    %cst_44 = arith.constant 3.200000e+01 : f32
    %116 = vector.broadcast %cst_44 : f32 to vector<16x1xf32>
    %117 = arith.divf %115, %116 : vector<16x1xf32>
    %118 = vector.broadcast %110 : vector<16x1xf32> to vector<16x32xf32>
    %119 = arith.subf %104, %118 : vector<16x32xf32>
    %cst_45 = arith.constant 9.99999974E-6 : f32
    %120 = vector.broadcast %cst_45 : f32 to vector<16x1xf32>
    %121 = arith.addf %117, %120 : vector<16x1xf32>
    %122 = math.rsqrt %121 : vector<16x1xf32>
    %123 = vector.broadcast %122 : vector<16x1xf32> to vector<16x32xf32>
    %124 = arith.mulf %119, %123 : vector<16x32xf32>
    %125 = vector.broadcast %105 : vector<1x32xf32> to vector<16x32xf32>
    %126 = arith.mulf %124, %125 : vector<16x32xf32>
    %127 = vector.broadcast %106 : vector<1x32xf32> to vector<16x32xf32>
    %128 = arith.addf %126, %127 : vector<16x32xf32>
    %cst_46 = arith.constant 2.000000e+01 : f32
    %129 = vector.broadcast %cst_46 : f32 to vector<16x32xf32>
    %130 = arith.cmpf ogt, %128, %129 : vector<16x32xf32>
    %cst_47 = arith.constant 2.000000e+01 : f32
    %131 = vector.broadcast %cst_47 : f32 to vector<16x32xf32>
    %132 = arith.minimumf %128, %131 : vector<16x32xf32>
    %133 = math.exp %132 : vector<16x32xf32>
    %134 = math.log1p %133 : vector<16x32xf32>
    %135 = arith.select %130, %128, %134 : vector<16x32xi1>, vector<16x32xf32>
    %136 = math.tanh %135 : vector<16x32xf32>
    %137 = arith.mulf %128, %136 : vector<16x32xf32>
    %138 = vector.extract_strided_slice %103 {offsets = [0, 32], sizes = [16, 32], strides = [1, 1]} : vector<16x64xf32> to vector<16x32xf32>
    %c0_48 = arith.constant 0 : index
    %c0_49 = arith.constant 0 : index
    %139 = vector.load %arg9[%c0_48, %c0_49] : memref<32x64xf32, #tpu.memory_space<vmem>>, vector<32x64xf32>
    %cst_50 = arith.constant dense<0.000000e+00> : vector<128x64xf32>
    %140 = tpu.matmul %9, %139, %cst_50 {dimension_numbers = #tpu.dot_dimension_numbers<[1], [0], [0], [1], [0, 0, 1, 1], [], []>} : vector<128x32xf32>, vector<32x64xf32>, vector<128x64xf32> -> vector<128x64xf32>
    %141 = vector.extract_strided_slice %11 {offsets = [1, 0], sizes = [1, 64], strides = [1, 1]} : vector<2x64xf32> to vector<1x64xf32>
    %142 = vector.broadcast %141 : vector<1x64xf32> to vector<128x64xf32>
    %143 = arith.addf %140, %142 : vector<128x64xf32>
    %144 = vector.extract_strided_slice %143 {offsets = [0, 0], sizes = [128, 32], strides = [1, 1]} : vector<128x64xf32> to vector<128x32xf32>
    %145 = vector.extract_strided_slice %10 {offsets = [7, 0], sizes = [1, 32], strides = [1, 1]} : vector<19x32xf32> to vector<1x32xf32>
    %146 = vector.extract_strided_slice %10 {offsets = [8, 0], sizes = [1, 32], strides = [1, 1]} : vector<19x32xf32> to vector<1x32xf32>
    %cst_51 = arith.constant dense<0.000000e+00> : vector<128xf32>
    %147 = vector.multi_reduction <add>, %144, %cst_51 [1] : vector<128x32xf32> to vector<128xf32>
    %148 = vector.shape_cast %147 : vector<128xf32> to vector<128x1xf32>
    %cst_52 = arith.constant 3.200000e+01 : f32
    %149 = vector.broadcast %cst_52 : f32 to vector<128x1xf32>
    %150 = arith.divf %148, %149 : vector<128x1xf32>
    %151 = vector.broadcast %150 : vector<128x1xf32> to vector<128x32xf32>
    %152 = arith.subf %144, %151 : vector<128x32xf32>
    %153 = arith.mulf %152, %152 : vector<128x32xf32>
    %cst_53 = arith.constant dense<0.000000e+00> : vector<128xf32>
    %154 = vector.multi_reduction <add>, %153, %cst_53 [1] : vector<128x32xf32> to vector<128xf32>
    %155 = vector.shape_cast %154 : vector<128xf32> to vector<128x1xf32>
    %cst_54 = arith.constant 3.200000e+01 : f32
    %156 = vector.broadcast %cst_54 : f32 to vector<128x1xf32>
    %157 = arith.divf %155, %156 : vector<128x1xf32>
    %158 = vector.broadcast %150 : vector<128x1xf32> to vector<128x32xf32>
    %159 = arith.subf %144, %158 : vector<128x32xf32>
    %cst_55 = arith.constant 9.99999974E-6 : f32
    %160 = vector.broadcast %cst_55 : f32 to vector<128x1xf32>
    %161 = arith.addf %157, %160 : vector<128x1xf32>
    %162 = math.rsqrt %161 : vector<128x1xf32>
    %163 = vector.broadcast %162 : vector<128x1xf32> to vector<128x32xf32>
    %164 = arith.mulf %159, %163 : vector<128x32xf32>
    %165 = vector.broadcast %145 : vector<1x32xf32> to vector<128x32xf32>
    %166 = arith.mulf %164, %165 : vector<128x32xf32>
    %167 = vector.broadcast %146 : vector<1x32xf32> to vector<128x32xf32>
    %168 = arith.addf %166, %167 : vector<128x32xf32>
    %cst_56 = arith.constant 2.000000e+01 : f32
    %169 = vector.broadcast %cst_56 : f32 to vector<128x32xf32>
    %170 = arith.cmpf ogt, %168, %169 : vector<128x32xf32>
    %cst_57 = arith.constant 2.000000e+01 : f32
    %171 = vector.broadcast %cst_57 : f32 to vector<128x32xf32>
    %172 = arith.minimumf %168, %171 : vector<128x32xf32>
    %173 = math.exp %172 : vector<128x32xf32>
    %174 = math.log1p %173 : vector<128x32xf32>
    %175 = arith.select %170, %168, %174 : vector<128x32xi1>, vector<128x32xf32>
    %176 = math.tanh %175 : vector<128x32xf32>
    %177 = arith.mulf %168, %176 : vector<128x32xf32>
    %178 = vector.extract_strided_slice %143 {offsets = [0, 32], sizes = [128, 32], strides = [1, 1]} : vector<128x64xf32> to vector<128x32xf32>
    %179 = vector.extract_strided_slice %10 {offsets = [9, 0], sizes = [1, 32], strides = [1, 1]} : vector<19x32xf32> to vector<1x32xf32>
    %180 = vector.extract_strided_slice %10 {offsets = [10, 0], sizes = [1, 32], strides = [1, 1]} : vector<19x32xf32> to vector<1x32xf32>
    %cst_58 = arith.constant dense<0.000000e+00> : vector<128xf32>
    %181 = vector.multi_reduction <add>, %178, %cst_58 [1] : vector<128x32xf32> to vector<128xf32>
    %182 = vector.shape_cast %181 : vector<128xf32> to vector<128x1xf32>
    %cst_59 = arith.constant 3.200000e+01 : f32
    %183 = vector.broadcast %cst_59 : f32 to vector<128x1xf32>
    %184 = arith.divf %182, %183 : vector<128x1xf32>
    %185 = vector.broadcast %184 : vector<128x1xf32> to vector<128x32xf32>
    %186 = arith.subf %178, %185 : vector<128x32xf32>
    %187 = arith.mulf %186, %186 : vector<128x32xf32>
    %cst_60 = arith.constant dense<0.000000e+00> : vector<128xf32>
    %188 = vector.multi_reduction <add>, %187, %cst_60 [1] : vector<128x32xf32> to vector<128xf32>
    %189 = vector.shape_cast %188 : vector<128xf32> to vector<128x1xf32>
    %cst_61 = arith.constant 3.200000e+01 : f32
    %190 = vector.broadcast %cst_61 : f32 to vector<128x1xf32>
    %191 = arith.divf %189, %190 : vector<128x1xf32>
    %192 = vector.broadcast %184 : vector<128x1xf32> to vector<128x32xf32>
    %193 = arith.subf %178, %192 : vector<128x32xf32>
    %cst_62 = arith.constant 9.99999974E-6 : f32
    %194 = vector.broadcast %cst_62 : f32 to vector<128x1xf32>
    %195 = arith.addf %191, %194 : vector<128x1xf32>
    %196 = math.rsqrt %195 : vector<128x1xf32>
    %197 = vector.broadcast %196 : vector<128x1xf32> to vector<128x32xf32>
    %198 = arith.mulf %193, %197 : vector<128x32xf32>
    %199 = vector.broadcast %179 : vector<1x32xf32> to vector<128x32xf32>
    %200 = arith.mulf %198, %199 : vector<128x32xf32>
    %201 = vector.broadcast %180 : vector<1x32xf32> to vector<128x32xf32>
    %202 = arith.addf %200, %201 : vector<128x32xf32>
    %cst_63 = arith.constant 2.000000e+01 : f32
    %203 = vector.broadcast %cst_63 : f32 to vector<128x32xf32>
    %204 = arith.cmpf ogt, %202, %203 : vector<128x32xf32>
    %cst_64 = arith.constant 2.000000e+01 : f32
    %205 = vector.broadcast %cst_64 : f32 to vector<128x32xf32>
    %206 = arith.minimumf %202, %205 : vector<128x32xf32>
    %207 = math.exp %206 : vector<128x32xf32>
    %208 = math.log1p %207 : vector<128x32xf32>
    %209 = arith.select %204, %202, %208 : vector<128x32xi1>, vector<128x32xf32>
    %210 = math.tanh %209 : vector<128x32xf32>
    %211 = arith.mulf %202, %210 : vector<128x32xf32>
    %c1 = arith.constant 1 : index
    %c0_65 = arith.constant 0 : index
    %c0_66 = arith.constant 0 : index
    %212 = vector.load %arg7[%c1, %c0_65, %c0_66] : memref<7x32x32xf32, #tpu.memory_space<vmem>>, vector<1x32x32xf32>
    %213 = vector.shape_cast %212 : vector<1x32x32xf32> to vector<32x32xf32>
    %cst_67 = arith.constant dense<0.000000e+00> : vector<128x32xf32>
    %214 = tpu.matmul %177, %213, %cst_67 {dimension_numbers = #tpu.dot_dimension_numbers<[1], [0], [0], [1], [0, 0, 1, 1], [], []>} : vector<128x32xf32>, vector<32x32xf32>, vector<128x32xf32> -> vector<128x32xf32>
    %215 = vector.extract_strided_slice %10 {offsets = [13, 0], sizes = [1, 32], strides = [1, 1]} : vector<19x32xf32> to vector<1x32xf32>
    %216 = vector.broadcast %215 : vector<1x32xf32> to vector<128x32xf32>
    %217 = arith.addf %214, %216 : vector<128x32xf32>
    %c2 = arith.constant 2 : index
    %c0_68 = arith.constant 0 : index
    %c0_69 = arith.constant 0 : index
    %218 = vector.load %arg7[%c2, %c0_68, %c0_69] : memref<7x32x32xf32, #tpu.memory_space<vmem>>, vector<1x32x32xf32>
    %219 = vector.shape_cast %218 : vector<1x32x32xf32> to vector<32x32xf32>
    %cst_70 = arith.constant dense<0.000000e+00> : vector<128x32xf32>
    %220 = tpu.matmul %211, %219, %cst_70 {dimension_numbers = #tpu.dot_dimension_numbers<[1], [0], [0], [1], [0, 0, 1, 1], [], []>} : vector<128x32xf32>, vector<32x32xf32>, vector<128x32xf32> -> vector<128x32xf32>
    %221 = vector.extract_strided_slice %10 {offsets = [14, 0], sizes = [1, 32], strides = [1, 1]} : vector<19x32xf32> to vector<1x32xf32>
    %222 = vector.broadcast %221 : vector<1x32xf32> to vector<128x32xf32>
    %223 = arith.addf %220, %222 : vector<128x32xf32>
    %224 = vector.shape_cast %137 : vector<16x32xf32> to vector<1x16x32xf32>
    %225 = vector.shape_cast %98 : vector<8x32xf32> to vector<8x1x32xf32>
    %226 = vector.broadcast %224 : vector<1x16x32xf32> to vector<8x16x32xf32>
    %227 = vector.broadcast %225 : vector<8x1x32xf32> to vector<8x16x32xf32>
    %228 = arith.subf %226, %227 : vector<8x16x32xf32>
    %229 = vector.shape_cast %228 : vector<8x16x32xf32> to vector<128x32xf32>
    %230 = arith.mulf %229, %217 : vector<128x32xf32>
    %231 = arith.addf %230, %223 : vector<128x32xf32>
    %c3 = arith.constant 3 : index
    %c0_71 = arith.constant 0 : index
    %c0_72 = arith.constant 0 : index
    %232 = vector.load %arg7[%c3, %c0_71, %c0_72] : memref<7x32x32xf32, #tpu.memory_space<vmem>>, vector<1x32x32xf32>
    %233 = vector.shape_cast %232 : vector<1x32x32xf32> to vector<32x32xf32>
    %cst_73 = arith.constant dense<0.000000e+00> : vector<128x32xf32>
    %234 = tpu.matmul %231, %233, %cst_73 {dimension_numbers = #tpu.dot_dimension_numbers<[1], [0], [0], [1], [0, 0, 1, 1], [], []>} : vector<128x32xf32>, vector<32x32xf32>, vector<128x32xf32> -> vector<128x32xf32>
    %235 = vector.extract_strided_slice %10 {offsets = [15, 0], sizes = [1, 32], strides = [1, 1]} : vector<19x32xf32> to vector<1x32xf32>
    %236 = vector.broadcast %235 : vector<1x32xf32> to vector<128x32xf32>
    %237 = arith.addf %234, %236 : vector<128x32xf32>
    %238 = vector.extract_strided_slice %10 {offsets = [11, 0], sizes = [1, 32], strides = [1, 1]} : vector<19x32xf32> to vector<1x32xf32>
    %239 = vector.extract_strided_slice %10 {offsets = [12, 0], sizes = [1, 32], strides = [1, 1]} : vector<19x32xf32> to vector<1x32xf32>
    %cst_74 = arith.constant dense<0.000000e+00> : vector<128xf32>
    %240 = vector.multi_reduction <add>, %237, %cst_74 [1] : vector<128x32xf32> to vector<128xf32>
    %241 = vector.shape_cast %240 : vector<128xf32> to vector<128x1xf32>
    %cst_75 = arith.constant 3.200000e+01 : f32
    %242 = vector.broadcast %cst_75 : f32 to vector<128x1xf32>
    %243 = arith.divf %241, %242 : vector<128x1xf32>
    %244 = vector.broadcast %243 : vector<128x1xf32> to vector<128x32xf32>
    %245 = arith.subf %237, %244 : vector<128x32xf32>
    %246 = arith.mulf %245, %245 : vector<128x32xf32>
    %cst_76 = arith.constant dense<0.000000e+00> : vector<128xf32>
    %247 = vector.multi_reduction <add>, %246, %cst_76 [1] : vector<128x32xf32> to vector<128xf32>
    %248 = vector.shape_cast %247 : vector<128xf32> to vector<128x1xf32>
    %cst_77 = arith.constant 3.200000e+01 : f32
    %249 = vector.broadcast %cst_77 : f32 to vector<128x1xf32>
    %250 = arith.divf %248, %249 : vector<128x1xf32>
    %251 = vector.broadcast %243 : vector<128x1xf32> to vector<128x32xf32>
    %252 = arith.subf %237, %251 : vector<128x32xf32>
    %cst_78 = arith.constant 9.99999974E-6 : f32
    %253 = vector.broadcast %cst_78 : f32 to vector<128x1xf32>
    %254 = arith.addf %250, %253 : vector<128x1xf32>
    %255 = math.rsqrt %254 : vector<128x1xf32>
    %256 = vector.broadcast %255 : vector<128x1xf32> to vector<128x32xf32>
    %257 = arith.mulf %252, %256 : vector<128x32xf32>
    %258 = vector.broadcast %238 : vector<1x32xf32> to vector<128x32xf32>
    %259 = arith.mulf %257, %258 : vector<128x32xf32>
    %260 = vector.broadcast %239 : vector<1x32xf32> to vector<128x32xf32>
    %261 = arith.addf %259, %260 : vector<128x32xf32>
    %cst_79 = arith.constant 2.000000e+01 : f32
    %262 = vector.broadcast %cst_79 : f32 to vector<128x32xf32>
    %263 = arith.cmpf ogt, %261, %262 : vector<128x32xf32>
    %cst_80 = arith.constant 2.000000e+01 : f32
    %264 = vector.broadcast %cst_80 : f32 to vector<128x32xf32>
    %265 = arith.minimumf %261, %264 : vector<128x32xf32>
    %266 = math.exp %265 : vector<128x32xf32>
    %267 = math.log1p %266 : vector<128x32xf32>
    %268 = arith.select %263, %261, %267 : vector<128x32xi1>, vector<128x32xf32>
    %269 = math.tanh %268 : vector<128x32xf32>
    %270 = arith.mulf %261, %269 : vector<128x32xf32>
    %c4 = arith.constant 4 : index
    %c0_81 = arith.constant 0 : index
    %c0_82 = arith.constant 0 : index
    %271 = vector.load %arg7[%c4, %c0_81, %c0_82] : memref<7x32x32xf32, #tpu.memory_space<vmem>>, vector<1x32x32xf32>
    %272 = vector.shape_cast %271 : vector<1x32x32xf32> to vector<32x32xf32>
    %cst_83 = arith.constant dense<0.000000e+00> : vector<128x32xf32>
    %273 = tpu.matmul %270, %272, %cst_83 {dimension_numbers = #tpu.dot_dimension_numbers<[1], [0], [0], [1], [0, 0, 1, 1], [], []>} : vector<128x32xf32>, vector<32x32xf32>, vector<128x32xf32> -> vector<128x32xf32>
    %274 = vector.extract_strided_slice %10 {offsets = [16, 0], sizes = [1, 32], strides = [1, 1]} : vector<19x32xf32> to vector<1x32xf32>
    %275 = vector.broadcast %274 : vector<1x32xf32> to vector<128x32xf32>
    %276 = arith.addf %273, %275 : vector<128x32xf32>
    %277 = vector.shape_cast %276 : vector<128x32xf32> to vector<8x16x32xf32>
    %cst_84 = arith.constant dense<0xFF800000> : vector<8x32xf32>
    %278 = vector.multi_reduction <maximumf>, %277, %cst_84 [1] : vector<8x16x32xf32> to vector<8x32xf32>
    %279 = vector.shape_cast %278 : vector<8x32xf32> to vector<8x1x32xf32>
    %280 = vector.broadcast %279 : vector<8x1x32xf32> to vector<8x16x32xf32>
    %281 = arith.subf %277, %280 : vector<8x16x32xf32>
    %282 = math.exp %281 : vector<8x16x32xf32>
    %283 = vector.shape_cast %5 : vector<16x1xf32> to vector<1x16x1xf32>
    %284 = vector.broadcast %283 : vector<1x16x1xf32> to vector<8x16x32xf32>
    %285 = arith.mulf %282, %284 : vector<8x16x32xf32>
    %cst_85 = arith.constant dense<0.000000e+00> : vector<8x32xf32>
    %286 = vector.multi_reduction <add>, %285, %cst_85 [1] : vector<8x16x32xf32> to vector<8x32xf32>
    %287 = vector.shape_cast %286 : vector<8x32xf32> to vector<8x1x32xf32>
    %288 = tpu.reciprocal %287 {approx = true} : vector<8x1x32xf32> -> vector<8x1x32xf32>
    %289 = vector.broadcast %288 : vector<8x1x32xf32> to vector<8x16x32xf32>
    %290 = arith.mulf %285, %289 : vector<8x16x32xf32>
    %291 = vector.shape_cast %138 : vector<16x32xf32> to vector<1x16x32xf32>
    %292 = vector.broadcast %291 : vector<1x16x32xf32> to vector<8x16x32xf32>
    %293 = arith.mulf %290, %292 : vector<8x16x32xf32>
    %cst_86 = arith.constant dense<0.000000e+00> : vector<8x32xf32>
    %294 = vector.multi_reduction <add>, %293, %cst_86 [1] : vector<8x16x32xf32> to vector<8x32xf32>
    %cst_87 = arith.constant 0.000000e+00 : f32
    %295 = vector.broadcast %cst_87 : f32 to vector<8x1xf32>
    %296 = arith.cmpf ogt, %7, %295 : vector<8x1xf32>
    %297 = arith.extui %296 : vector<8x1xi1> to vector<8x1xi32>
    %298 = arith.sitofp %297 : vector<8x1xi32> to vector<8x1xf32>
    %299 = vector.broadcast %298 : vector<8x1xf32> to vector<8x32xf32>
    %300 = arith.mulf %294, %299 : vector<8x32xf32>
    %c5 = arith.constant 5 : index
    %c0_88 = arith.constant 0 : index
    %c0_89 = arith.constant 0 : index
    %301 = vector.load %arg7[%c5, %c0_88, %c0_89] : memref<7x32x32xf32, #tpu.memory_space<vmem>>, vector<1x32x32xf32>
    %302 = vector.shape_cast %301 : vector<1x32x32xf32> to vector<32x32xf32>
    %cst_90 = arith.constant dense<0.000000e+00> : vector<8x32xf32>
    %303 = tpu.matmul %300, %302, %cst_90 {dimension_numbers = #tpu.dot_dimension_numbers<[1], [0], [0], [1], [0, 0, 1, 1], [], []>} : vector<8x32xf32>, vector<32x32xf32>, vector<8x32xf32> -> vector<8x32xf32>
    %304 = arith.addf %3, %303 : vector<8x32xf32>
    %305 = vector.extract_strided_slice %10 {offsets = [17, 0], sizes = [1, 32], strides = [1, 1]} : vector<19x32xf32> to vector<1x32xf32>
    %306 = vector.broadcast %305 : vector<1x32xf32> to vector<8x32xf32>
    %307 = arith.addf %304, %306 : vector<8x32xf32>
    %308 = vector.extract_strided_slice %10 {offsets = [0, 0], sizes = [1, 32], strides = [1, 1]} : vector<19x32xf32> to vector<1x32xf32>
    %309 = vector.extract_strided_slice %10 {offsets = [1, 0], sizes = [1, 32], strides = [1, 1]} : vector<19x32xf32> to vector<1x32xf32>
    %cst_91 = arith.constant dense<0.000000e+00> : vector<8xf32>
    %310 = vector.multi_reduction <add>, %307, %cst_91 [1] : vector<8x32xf32> to vector<8xf32>
    %311 = vector.shape_cast %310 : vector<8xf32> to vector<8x1xf32>
    %cst_92 = arith.constant 3.200000e+01 : f32
    %312 = vector.broadcast %cst_92 : f32 to vector<8x1xf32>
    %313 = arith.divf %311, %312 : vector<8x1xf32>
    %314 = vector.broadcast %313 : vector<8x1xf32> to vector<8x32xf32>
    %315 = arith.subf %307, %314 : vector<8x32xf32>
    %316 = arith.mulf %315, %315 : vector<8x32xf32>
    %cst_93 = arith.constant dense<0.000000e+00> : vector<8xf32>
    %317 = vector.multi_reduction <add>, %316, %cst_93 [1] : vector<8x32xf32> to vector<8xf32>
    %318 = vector.shape_cast %317 : vector<8xf32> to vector<8x1xf32>
    %cst_94 = arith.constant 3.200000e+01 : f32
    %319 = vector.broadcast %cst_94 : f32 to vector<8x1xf32>
    %320 = arith.divf %318, %319 : vector<8x1xf32>
    %321 = vector.broadcast %313 : vector<8x1xf32> to vector<8x32xf32>
    %322 = arith.subf %307, %321 : vector<8x32xf32>
    %cst_95 = arith.constant 9.99999974E-6 : f32
    %323 = vector.broadcast %cst_95 : f32 to vector<8x1xf32>
    %324 = arith.addf %320, %323 : vector<8x1xf32>
    %325 = math.rsqrt %324 : vector<8x1xf32>
    %326 = vector.broadcast %325 : vector<8x1xf32> to vector<8x32xf32>
    %327 = arith.mulf %322, %326 : vector<8x32xf32>
    %328 = vector.broadcast %308 : vector<1x32xf32> to vector<8x32xf32>
    %329 = arith.mulf %327, %328 : vector<8x32xf32>
    %330 = vector.broadcast %309 : vector<1x32xf32> to vector<8x32xf32>
    %331 = arith.addf %329, %330 : vector<8x32xf32>
    %c6 = arith.constant 6 : index
    %c0_96 = arith.constant 0 : index
    %c0_97 = arith.constant 0 : index
    %332 = vector.load %arg7[%c6, %c0_96, %c0_97] : memref<7x32x32xf32, #tpu.memory_space<vmem>>, vector<1x32x32xf32>
    %333 = vector.shape_cast %332 : vector<1x32x32xf32> to vector<32x32xf32>
    %cst_98 = arith.constant dense<0.000000e+00> : vector<8x32xf32>
    %334 = tpu.matmul %331, %333, %cst_98 {dimension_numbers = #tpu.dot_dimension_numbers<[1], [0], [0], [1], [0, 0, 1, 1], [], []>} : vector<8x32xf32>, vector<32x32xf32>, vector<8x32xf32> -> vector<8x32xf32>
    %335 = vector.extract_strided_slice %10 {offsets = [18, 0], sizes = [1, 32], strides = [1, 1]} : vector<19x32xf32> to vector<1x32xf32>
    %336 = vector.broadcast %335 : vector<1x32xf32> to vector<8x32xf32>
    %337 = arith.addf %334, %336 : vector<8x32xf32>
    %cst_99 = arith.constant 2.000000e+01 : f32
    %338 = vector.broadcast %cst_99 : f32 to vector<8x32xf32>
    %339 = arith.cmpf ogt, %337, %338 : vector<8x32xf32>
    %cst_100 = arith.constant 2.000000e+01 : f32
    %340 = vector.broadcast %cst_100 : f32 to vector<8x32xf32>
    %341 = arith.minimumf %337, %340 : vector<8x32xf32>
    %342 = math.exp %341 : vector<8x32xf32>
    %343 = math.log1p %342 : vector<8x32xf32>
    %344 = arith.select %339, %337, %343 : vector<8x32xi1>, vector<8x32xf32>
    %345 = math.tanh %344 : vector<8x32xf32>
    %346 = arith.mulf %337, %345 : vector<8x32xf32>
    %347 = arith.addf %307, %346 : vector<8x32xf32>
    %348 = vector.extract_strided_slice %10 {offsets = [0, 0], sizes = [1, 32], strides = [1, 1]} : vector<19x32xf32> to vector<1x32xf32>
    %349 = vector.extract_strided_slice %10 {offsets = [1, 0], sizes = [1, 32], strides = [1, 1]} : vector<19x32xf32> to vector<1x32xf32>
    %cst_101 = arith.constant dense<0.000000e+00> : vector<8xf32>
    %350 = vector.multi_reduction <add>, %347, %cst_101 [1] : vector<8x32xf32> to vector<8xf32>
    %351 = vector.shape_cast %350 : vector<8xf32> to vector<8x1xf32>
    %cst_102 = arith.constant 3.200000e+01 : f32
    %352 = vector.broadcast %cst_102 : f32 to vector<8x1xf32>
    %353 = arith.divf %351, %352 : vector<8x1xf32>
    %354 = vector.broadcast %353 : vector<8x1xf32> to vector<8x32xf32>
    %355 = arith.subf %347, %354 : vector<8x32xf32>
    %356 = arith.mulf %355, %355 : vector<8x32xf32>
    %cst_103 = arith.constant dense<0.000000e+00> : vector<8xf32>
    %357 = vector.multi_reduction <add>, %356, %cst_103 [1] : vector<8x32xf32> to vector<8xf32>
    %358 = vector.shape_cast %357 : vector<8xf32> to vector<8x1xf32>
    %cst_104 = arith.constant 3.200000e+01 : f32
    %359 = vector.broadcast %cst_104 : f32 to vector<8x1xf32>
    %360 = arith.divf %358, %359 : vector<8x1xf32>
    %361 = vector.broadcast %353 : vector<8x1xf32> to vector<8x32xf32>
    %362 = arith.subf %347, %361 : vector<8x32xf32>
    %cst_105 = arith.constant 9.99999974E-6 : f32
    %363 = vector.broadcast %cst_105 : f32 to vector<8x1xf32>
    %364 = arith.addf %360, %363 : vector<8x1xf32>
    %365 = math.rsqrt %364 : vector<8x1xf32>
    %366 = vector.broadcast %365 : vector<8x1xf32> to vector<8x32xf32>
    %367 = arith.mulf %362, %366 : vector<8x32xf32>
    %368 = vector.broadcast %348 : vector<1x32xf32> to vector<8x32xf32>
    %369 = arith.mulf %367, %368 : vector<8x32xf32>
    %370 = vector.broadcast %349 : vector<1x32xf32> to vector<8x32xf32>
    %371 = arith.addf %369, %370 : vector<8x32xf32>
    %c0_106 = arith.constant 0 : index
    %c0_107 = arith.constant 0 : index
    %c0_108 = arith.constant 0 : index
    %372 = vector.load %arg12[%c0_106, %c0_107, %c0_108] : memref<1x8x32xf32, #tpu.memory_space<vmem>>, vector<1x8x32xf32>
    %373 = vector.shape_cast %372 : vector<1x8x32xf32> to vector<8x32xf32>
    %374 = vector.shape_cast %371 : vector<8x32xf32> to vector<1x8x32xf32>
    tpu.vector_store %arg12[%c0_106, %c0_107, %c0_108], %374 {strides = array<i32>} : memref<1x8x32xf32, #tpu.memory_space<vmem>>, vector<1x8x32xf32>,
    %c0_109 = arith.constant 0 : index
    %c0_110 = arith.constant 0 : index
    %c0_111 = arith.constant 0 : index
    %375 = vector.load %arg13[%c0_109, %c0_110, %c0_111] : memref<1x128x32xf32, #tpu.memory_space<vmem>>, vector<1x128x32xf32>
    %376 = vector.shape_cast %375 : vector<1x128x32xf32> to vector<128x32xf32>
    %377 = vector.shape_cast %231 : vector<128x32xf32> to vector<1x128x32xf32>
    tpu.vector_store %arg13[%c0_109, %c0_110, %c0_111], %377 {strides = array<i32>} : memref<1x128x32xf32, #tpu.memory_space<vmem>>, vector<1x128x32xf32>,
    return
  }
  func.func @transform_0(%arg0: i32, %arg1: i32) -> (i32, i32, i32) {
    %c0_i32 = arith.constant 0 : i32
    %c0_i32_0 = arith.constant 0 : i32
    %c0_i32_1 = arith.constant 0 : i32
    return %arg0, %c0_i32, %c0_i32_0 : i32, i32, i32
  }
  func.func @transform_1(%arg0: i32, %arg1: i32) -> (i32, i32, i32) {
    %c0_i32 = arith.constant 0 : i32
    %c0_i32_0 = arith.constant 0 : i32
    return %arg0, %arg1, %c0_i32 : i32, i32, i32
  }
  func.func @transform_2(%arg0: i32, %arg1: i32) -> (i32, i32, i32) {
    %c0_i32 = arith.constant 0 : i32
    %c0_i32_0 = arith.constant 0 : i32
    %c0_i32_1 = arith.constant 0 : i32
    return %arg0, %c0_i32, %c0_i32_0 : i32, i32, i32
  }
  func.func @transform_3(%arg0: i32, %arg1: i32) -> (i32, i32, i32) {
    %c0_i32 = arith.constant 0 : i32
    %c0_i32_0 = arith.constant 0 : i32
    return %arg0, %arg1, %c0_i32 : i32, i32, i32
  }
  func.func @transform_4(%arg0: i32, %arg1: i32) -> (i32, i32, i32) {
    %c0_i32 = arith.constant 0 : i32
    %c0_i32_0 = arith.constant 0 : i32
    return %arg0, %arg1, %c0_i32 : i32, i32, i32
  }
  func.func @transform_5(%arg0: i32, %arg1: i32) -> (i32, i32, i32) {
    %c0_i32 = arith.constant 0 : i32
    %c0_i32_0 = arith.constant 0 : i32
    %c0_i32_1 = arith.constant 0 : i32
    %c0_i32_2 = arith.constant 0 : i32
    return %c0_i32, %c0_i32_0, %c0_i32_1 : i32, i32, i32
  }
  func.func @transform_6(%arg0: i32, %arg1: i32) -> (i32, i32) {
    %c0_i32 = arith.constant 0 : i32
    %c0_i32_0 = arith.constant 0 : i32
    %c0_i32_1 = arith.constant 0 : i32
    return %c0_i32, %c0_i32_0 : i32, i32
  }
  func.func @transform_7(%arg0: i32, %arg1: i32) -> (i32, i32) {
    %c0_i32 = arith.constant 0 : i32
    %c0_i32_0 = arith.constant 0 : i32
    %c0_i32_1 = arith.constant 0 : i32
    return %c0_i32, %c0_i32_0 : i32, i32
  }
  func.func @transform_8(%arg0: i32, %arg1: i32) -> (i32, i32) {
    %c0_i32 = arith.constant 0 : i32
    %c0_i32_0 = arith.constant 0 : i32
    %c0_i32_1 = arith.constant 0 : i32
    return %c0_i32, %c0_i32_0 : i32, i32
  }
  func.func @transform_9(%arg0: i32, %arg1: i32) -> (i32, i32) {
    %c0_i32 = arith.constant 0 : i32
    %c0_i32_0 = arith.constant 0 : i32
    %c0_i32_1 = arith.constant 0 : i32
    return %c0_i32, %c0_i32_0 : i32, i32
  }
  func.func @transform_10(%arg0: i32, %arg1: i32) -> (i32, i32, i32) {
    %c0_i32 = arith.constant 0 : i32
    %c0_i32_0 = arith.constant 0 : i32
    return %arg0, %arg1, %c0_i32 : i32, i32, i32
  }
  func.func @transform_11(%arg0: i32, %arg1: i32) -> (i32, i32, i32) {
    %c0_i32 = arith.constant 0 : i32
    %c0_i32_0 = arith.constant 0 : i32
    return %arg0, %arg1, %c0_i32 : i32, i32, i32
  }
}

</mosaic_0001>

<llo_original>
// kernel: tpu_custom_call.1
$region0: #{tpu_custom_call.1}
  #allocation0 [shape = 'u32[]', space=smem, size = 0x4, offset = 0x4, fixed_abs, tag = 'smem constant byte address 0x4 - core index']
  #allocation1 [shape = 'u32[144,128]{1,0:T(1,128)}', space=vmem, size = 0x12000, scoped, tag = 'internal scratch']
  %s0 = inlined_call_operand.vmem [shape: f32[2,16,32], index: 0, kind: input, shape index: {}]
  %s1 = inlined_call_operand.vmem [shape: f32[2,16,32], index: 1, kind: input, shape index: {}]
  %s2 = inlined_call_operand.vmem [shape: f32[2,16,1], index: 2, kind: input, shape index: {}]
  %s3 = inlined_call_operand.vmem [shape: f32[2,16,1], index: 3, kind: input, shape index: {}]
  %s4 = inlined_call_operand.vmem [shape: f32[2,256,32], index: 4, kind: input, shape index: {}]
  %s5 = inlined_call_operand.vmem [shape: f32[7,32,32], index: 5, kind: input, shape index: {}]
  %s6 = inlined_call_operand.vmem [shape: f32[32,64], index: 6, kind: input, shape index: {}]
  %s7 = inlined_call_operand.vmem [shape: f32[32,64], index: 7, kind: input, shape index: {}]
  %s8 = inlined_call_operand.vmem [shape: f32[19,32], index: 8, kind: input, shape index: {}]
  %s9 = inlined_call_operand.vmem [shape: f32[2,64], index: 9, kind: input, shape index: {}]
  %s10 = inlined_call_operand.hbm [shape: f32[2,16,32], index: 10, kind: output, shape index: {0}]
  %s11 = inlined_call_operand.vmem [shape: f32[2,256,32], index: 11, kind: output, shape index: {1}]
  %12 = xla_tuple %s10, %s11
  %s13 = sld [smem:[#allocation0]]
  $region81: #{tpu_custom_call.1} parent=0
    _
  %s15 = ssub.s32 1, %s13
  %s16 = scalar_select 0, %s15, %s13
  $region1: #{tpu_custom_call.1} parent=0
    #allocation2 [shape = 'u8[8192]{0}', space=vmem, size = 0x2000, scoped, tag = 'output window, operand 0']
    #allocation3 [shape = 's32[2]{0}', space=sflag, size = 0x8, scoped, tag = 'scoped memory for tpu_custom_call.1']
    %17 = vsyncpa [#allocation3], 0
    %s18 = scalar_lea.sflag [#allocation3], 1
    %19 = vsyncpa %s18, 0
    loop: start=0, step=1, limit=6
    $region2: #{tpu_custom_call.1} parent=1 // loop_pre_header
      _
    $region3: #{tpu_custom_call.1} parent=1 // loop_header
      %s21 = sphi 0, %s25
      %p22 = scmp.ge.s32.totalorder %s21, 6
      %s28 = sphi 0, %s40
      %s29 = sphi 0, %s36
      %s30 = sphi 0, %s28
      %s31 = sphi 0, %s29
      %s32 = sphi 0, %s30
      %s33 = sphi 0, %s31
      %s43 = sphi 0, %s45
      %s46 = sphi 0, %s43
      %s47 = sphi 0, %s46
      %s63 = sphi 0, %s47
      %s71 = sphi 0, %s73
      %s74 = sphi 0, %s71
      %s75 = sphi 0, %s74
      %s91 = sphi 0, %s75
      %s97 = sphi 0, %s99
      %s100 = sphi 0, %s97
      %s101 = sphi 0, %s100
      %s117 = sphi 0, %s101
      %s125 = sphi 0, %s127
      %s128 = sphi 0, %s125
      %s129 = sphi 0, %s128
      %s145 = sphi 0, %s129
      %s153 = sphi 0, %s155
      %s156 = sphi 0, %s153
      %s157 = sphi 0, %s156
      %s173 = sphi 0, %s157
      %s177 = sphi 0, %s177
      %s179 = sphi 0, %s177
      %s180 = sphi 0, %s179
      %s194 = sphi 0, %s180
      %s198 = sphi 0, %s198
      %s200 = sphi 0, %s198
      %s201 = sphi 0, %s200
      %s215 = sphi 0, %s201
      %s219 = sphi 0, %s219
      %s221 = sphi 0, %s219
      %s222 = sphi 0, %s221
      %s236 = sphi 0, %s222
      %s240 = sphi 0, %s240
      %s242 = sphi 0, %s240
      %s243 = sphi 0, %s242
      %s257 = sphi 0, %s243
      %s261 = sphi 0, %s261
      %s263 = sphi 0, %s261
      %s264 = sphi 0, %s263
      %s278 = sphi 0, %s264
      %s286 = sphi 0, %s288
      %s289 = sphi 0, %s286
      %s290 = sphi 0, %s289
      %s306 = sphi 0, %s290
      %s314 = sphi 0, %s316
      %s317 = sphi 0, %s314
      %s318 = sphi 0, %s317
      %s334 = sphi 0, %s318
    $region4: #{tpu_custom_call.1} parent=1 // loop_header_branch
      %24 = sbr.rel (%p22) target = $region8
    $region5: #{tpu_custom_call.1} parent=1 // loop_body
      %s26 = ssub.s32 %s21, 1
      %s27 = ssub.s32 %s21, 2
      %s34 = sadd.s32 1, %s29
      %p35 = scmp.ge.s32.totalorder %s34, 2
      %s36 = scalar_select %p35, 0, %s34
      %s37 = sadd.s32 1, %s28
      %s38 = scalar_select %p35, %s37, %s28
      %p39 = scmp.ge.s32.totalorder %s38, 2
      %s40 = scalar_select %p39, 0, %s38
      %s41 = ssub.s32 %s28, %s40
      %p42 = scmp.eq.s32.totalorder %s41, 0
      %s44 = sadd.s32 %s43, 1
      %s45 = scalar_select %p42, %s43, %s44
      %p48 = pneg %p42
      %p49 = scmp.eq.s32.totalorder %s21, 3
      %p50 = por %p48, %p49
      %p51 = scmp.ne.s32.totalorder %s43, %s46
      %p52 = scmp.eq.s32.totalorder %s21, 0
      %p53 = por %p51, %p52
      %p54 = scmp.ne.s32.totalorder %s43, %s46
      %p55 = scmp.eq.s32.totalorder %s26, 3
      %p56 = por %p54, %p55
      %p57 = scmp.ne.s32.totalorder %s46, %s47
      %p58 = scmp.eq.s32.totalorder %s26, 0
      %p59 = por %p57, %p58
      %p60 = scmp.ne.s32.totalorder %s46, %s47
      %p61 = scmp.eq.s32.totalorder %s27, 3
      %p62 = por %p60, %p61
      %p64 = scmp.ne.s32.totalorder %s47, %s63
      %p65 = scmp.eq.s32.totalorder %s27, 0
      %p66 = por %p64, %p65
      %s67 = ssub.s32 %s28, %s40
      %s68 = ssub.s32 %s29, %s36
      %s69 = sor.u32 %s67, %s68
      %p70 = scmp.eq.s32.totalorder %s69, 0
      %s72 = sadd.s32 %s71, 1
      %s73 = scalar_select %p70, %s71, %s72
      %p76 = pneg %p70
      %p77 = scmp.eq.s32.totalorder %s21, 3
      %p78 = por %p76, %p77
      %p79 = scmp.ne.s32.totalorder %s71, %s74
      %p80 = scmp.eq.s32.totalorder %s21, 0
      %p81 = por %p79, %p80
      %p82 = scmp.ne.s32.totalorder %s71, %s74
      %p83 = scmp.eq.s32.totalorder %s26, 3
      %p84 = por %p82, %p83
      %p85 = scmp.ne.s32.totalorder %s74, %s75
      %p86 = scmp.eq.s32.totalorder %s26, 0
      %p87 = por %p85, %p86
      %p88 = scmp.ne.s32.totalorder %s74, %s75
      %p89 = scmp.eq.s32.totalorder %s27, 3
      %p90 = por %p88, %p89
      %p92 = scmp.ne.s32.totalorder %s75, %s91
      %p93 = scmp.eq.s32.totalorder %s27, 0
      %p94 = por %p92, %p93
      %s95 = ssub.s32 %s28, %s40
      %p96 = scmp.eq.s32.totalorder %s95, 0
      %s98 = sadd.s32 %s97, 1
      %s99 = scalar_select %p96, %s97, %s98
      %p102 = pneg %p96
      %p103 = scmp.eq.s32.totalorder %s21, 3
      %p104 = por %p102, %p103
      %p105 = scmp.ne.s32.totalorder %s97, %s100
      %p106 = scmp.eq.s32.totalorder %s21, 0
      %p107 = por %p105, %p106
      %p108 = scmp.ne.s32.totalorder %s97, %s100
      %p109 = scmp.eq.s32.totalorder %s26, 3
      %p110 = por %p108, %p109
      %p111 = scmp.ne.s32.totalorder %s100, %s101
      %p112 = scmp.eq.s32.totalorder %s26, 0
      %p113 = por %p111, %p112
      %p114 = scmp.ne.s32.totalorder %s100, %s101
      %p115 = scmp.eq.s32.totalorder %s27, 3
      %p116 = por %p114, %p115
      %p118 = scmp.ne.s32.totalorder %s101, %s117
      %p119 = scmp.eq.s32.totalorder %s27, 0
      %p120 = por %p118, %p119
      %s121 = ssub.s32 %s28, %s40
      %s122 = ssub.s32 %s29, %s36
      %s123 = sor.u32 %s121, %s122
      %p124 = scmp.eq.s32.totalorder %s123, 0
      %s126 = sadd.s32 %s125, 1
      %s127 = scalar_select %p124, %s125, %s126
      %p130 = pneg %p124
      %p131 = scmp.eq.s32.totalorder %s21, 3
      %p132 = por %p130, %p131
      %p133 = scmp.ne.s32.totalorder %s125, %s128
      %p134 = scmp.eq.s32.totalorder %s21, 0
      %p135 = por %p133, %p134
      %p136 = scmp.ne.s32.totalorder %s125, %s128
      %p137 = scmp.eq.s32.totalorder %s26, 3
      %p138 = por %p136, %p137
      %p139 = scmp.ne.s32.totalorder %s128, %s129
      %p140 = scmp.eq.s32.totalorder %s26, 0
      %p141 = por %p139, %p140
      %p142 = scmp.ne.s32.totalorder %s128, %s129
      %p143 = scmp.eq.s32.totalorder %s27, 3
      %p144 = por %p142, %p143
      %p146 = scmp.ne.s32.totalorder %s129, %s145
      %p147 = scmp.eq.s32.totalorder %s27, 0
      %p148 = por %p146, %p147
      %s149 = ssub.s32 %s28, %s40
      %s150 = ssub.s32 %s29, %s36
      %s151 = sor.u32 %s149, %s150
      %p152 = scmp.eq.s32.totalorder %s151, 0
      %s154 = sadd.s32 %s153, 1
      %s155 = scalar_select %p152, %s153, %s154
      %p158 = pneg %p152
      %p159 = scmp.eq.s32.totalorder %s21, 3
      %p160 = por %p158, %p159
      %p161 = scmp.ne.s32.totalorder %s153, %s156
      %p162 = scmp.eq.s32.totalorder %s21, 0
      %p163 = por %p161, %p162
      %p164 = scmp.ne.s32.totalorder %s153, %s156
      %p165 = scmp.eq.s32.totalorder %s26, 3
      %p166 = por %p164, %p165
      %p167 = scmp.ne.s32.totalorder %s156, %s157
      %p168 = scmp.eq.s32.totalorder %s26, 0
      %p169 = por %p167, %p168
      %p170 = scmp.ne.s32.totalorder %s156, %s157
      %p171 = scmp.eq.s32.totalorder %s27, 3
      %p172 = por %p170, %p171
      %p174 = scmp.ne.s32.totalorder %s157, %s173
      %p175 = scmp.eq.s32.totalorder %s27, 0
      %p176 = por %p174, %p175
      %s178 = sadd.s32 %s177, 1
      %p181 = scmp.eq.s32.totalorder %s21, 3
      %p182 = scmp.ne.s32.totalorder %s177, %s179
      %p183 = scmp.eq.s32.totalorder %s21, 0
      %p184 = por %p182, %p183
      %p185 = scmp.ne.s32.totalorder %s177, %s179
      %p186 = scmp.eq.s32.totalorder %s26, 3
      %p187 = por %p185, %p186
      %p188 = scmp.ne.s32.totalorder %s179, %s180
      %p189 = scmp.eq.s32.totalorder %s26, 0
      %p190 = por %p188, %p189
      %p191 = scmp.ne.s32.totalorder %s179, %s180
      %p192 = scmp.eq.s32.totalorder %s27, 3
      %p193 = por %p191, %p192
      %p195 = scmp.ne.s32.totalorder %s180, %s194
      %p196 = scmp.eq.s32.totalorder %s27, 0
      %p197 = por %p195, %p196
      %s199 = sadd.s32 %s198, 1
      %p202 = scmp.eq.s32.totalorder %s21, 3
      %p203 = scmp.ne.s32.totalorder %s198, %s200
      %p204 = scmp.eq.s32.totalorder %s21, 0
      %p205 = por %p203, %p204
      %p206 = scmp.ne.s32.totalorder %s198, %s200
      %p207 = scmp.eq.s32.totalorder %s26, 3
      %p208 = por %p206, %p207
      %p209 = scmp.ne.s32.totalorder %s200, %s201
      %p210 = scmp.eq.s32.totalorder %s26, 0
      %p211 = por %p209, %p210
      %p212 = scmp.ne.s32.totalorder %s200, %s201
      %p213 = scmp.eq.s32.totalorder %s27, 3
      %p214 = por %p212, %p213
      %p216 = scmp.ne.s32.totalorder %s201, %s215
      %p217 = scmp.eq.s32.totalorder %s27, 0
      %p218 = por %p216, %p217
      %s220 = sadd.s32 %s219, 1
      %p223 = scmp.eq.s32.totalorder %s21, 3
      %p224 = scmp.ne.s32.totalorder %s219, %s221
      %p225 = scmp.eq.s32.totalorder %s21, 0
      %p226 = por %p224, %p225
      %p227 = scmp.ne.s32.totalorder %s219, %s221
      %p228 = scmp.eq.s32.totalorder %s26, 3
      %p229 = por %p227, %p228
      %p230 = scmp.ne.s32.totalorder %s221, %s222
      %p231 = scmp.eq.s32.totalorder %s26, 0
      %p232 = por %p230, %p231
      %p233 = scmp.ne.s32.totalorder %s221, %s222
      %p234 = scmp.eq.s32.totalorder %s27, 3
      %p235 = por %p233, %p234
      %p237 = scmp.ne.s32.totalorder %s222, %s236
      %p238 = scmp.eq.s32.totalorder %s27, 0
      %p239 = por %p237, %p238
      %s241 = sadd.s32 %s240, 1
      %p244 = scmp.eq.s32.totalorder %s21, 3
      %p245 = scmp.ne.s32.totalorder %s240, %s242
      %p246 = scmp.eq.s32.totalorder %s21, 0
      %p247 = por %p245, %p246
      %p248 = scmp.ne.s32.totalorder %s240, %s242
      %p249 = scmp.eq.s32.totalorder %s26, 3
      %p250 = por %p248, %p249
      %p251 = scmp.ne.s32.totalorder %s242, %s243
      %p252 = scmp.eq.s32.totalorder %s26, 0
      %p253 = por %p251, %p252
      %p254 = scmp.ne.s32.totalorder %s242, %s243
      %p255 = scmp.eq.s32.totalorder %s27, 3
      %p256 = por %p254, %p255
      %p258 = scmp.ne.s32.totalorder %s243, %s257
      %p259 = scmp.eq.s32.totalorder %s27, 0
      %p260 = por %p258, %p259
      %s262 = sadd.s32 %s261, 1
      %p265 = scmp.eq.s32.totalorder %s21, 3
      %p266 = scmp.ne.s32.totalorder %s261, %s263
      %p267 = scmp.eq.s32.totalorder %s21, 0
      %p268 = por %p266, %p267
      %p269 = scmp.ne.s32.totalorder %s261, %s263
      %p270 = scmp.eq.s32.totalorder %s26, 3
      %p271 = por %p269, %p270
      %p272 = scmp.ne.s32.totalorder %s263, %s264
      %p273 = scmp.eq.s32.totalorder %s26, 0
      %p274 = por %p272, %p273
      %p275 = scmp.ne.s32.totalorder %s263, %s264
      %p276 = scmp.eq.s32.totalorder %s27, 3
      %p277 = por %p275, %p276
      %p279 = scmp.ne.s32.totalorder %s264, %s278
      %p280 = scmp.eq.s32.totalorder %s27, 0
      %p281 = por %p279, %p280
      %s282 = ssub.s32 %s28, %s40
      %s283 = ssub.s32 %s29, %s36
      %s284 = sor.u32 %s282, %s283
      %p285 = scmp.eq.s32.totalorder %s284, 0
      %s287 = sadd.s32 %s286, 1
      %s288 = scalar_select %p285, %s286, %s287
      %p291 = pneg %p285
      %p292 = scmp.eq.s32.totalorder %s21, 3
      %p293 = por %p291, %p292
      %p294 = scmp.ne.s32.totalorder %s286, %s289
      %p295 = scmp.eq.s32.totalorder %s21, 0
      %p296 = por %p294, %p295
      %p297 = scmp.ne.s32.totalorder %s286, %s289
      %p298 = scmp.eq.s32.totalorder %s26, 3
      %p299 = por %p297, %p298
      %p300 = scmp.ne.s32.totalorder %s289, %s290
      %p301 = scmp.eq.s32.totalorder %s26, 0
      %p302 = por %p300, %p301
      %p303 = scmp.ne.s32.totalorder %s289, %s290
      %p304 = scmp.eq.s32.totalorder %s27, 3
      %p305 = por %p303, %p304
      %p307 = scmp.ne.s32.totalorder %s290, %s306
      %p308 = scmp.eq.s32.totalorder %s27, 0
      %p309 = por %p307, %p308
      %s310 = ssub.s32 %s28, %s40
      %s311 = ssub.s32 %s29, %s36
      %s312 = sor.u32 %s310, %s311
      %p313 = scmp.eq.s32.totalorder %s312, 0
      %s315 = sadd.s32 %s314, 1
      %s316 = scalar_select %p313, %s314, %s315
      %p319 = pneg %p313
      %p320 = scmp.eq.s32.totalorder %s21, 3
      %p321 = por %p319, %p320
      %p322 = scmp.ne.s32.totalorder %s314, %s317
      %p323 = scmp.eq.s32.totalorder %s21, 0
      %p324 = por %p322, %p323
      %p325 = scmp.ne.s32.totalorder %s314, %s317
      %p326 = scmp.eq.s32.totalorder %s26, 3
      %p327 = por %p325, %p326
      %p328 = scmp.ne.s32.totalorder %s317, %s318
      %p329 = scmp.eq.s32.totalorder %s26, 0
      %p330 = por %p328, %p329
      %p331 = scmp.ne.s32.totalorder %s317, %s318
      %p332 = scmp.eq.s32.totalorder %s27, 3
      %p333 = por %p331, %p332
      %p335 = scmp.ne.s32.totalorder %s318, %s334
      %p336 = scmp.eq.s32.totalorder %s27, 0
      %p337 = por %p335, %p336
      %p338 = scmp.le.s32.totalorder 1, %s21
      %p339 = scmp.lt.s32.totalorder %s21, 5
      %p340 = pnand %p338, %p339
      %p341 = pneg %p340
      // Predicated region
      $region9: #{tpu_custom_call.1} parent=5 // pred_check
        _
      $region10: #{tpu_custom_call.1} parent=5 // pred_check_branch
        %343 = sbr.rel (%p340) target = $region12
      $region11: #{tpu_custom_call.1} parent=5 // pred_region
        %s344 = ssub.s32 %s21, 1
        // Predicated region
        $region13: #{tpu_custom_call.1} parent=11 // pred_check
          %p345 = pneg %p190
        $region14: #{tpu_custom_call.1} parent=11 // pred_check_branch
          %347 = sbr.rel (%p345) target = $region16
        $region15: #{tpu_custom_call.1} parent=11 // pred_region
          _
        $region16: #{tpu_custom_call.1} parent=11 // pred_fallthru
          _
        // Predicated region
        $region17: #{tpu_custom_call.1} parent=11 // pred_check
          %p348 = pneg %p211
        $region18: #{tpu_custom_call.1} parent=11 // pred_check_branch
          %350 = sbr.rel (%p348) target = $region20
        $region19: #{tpu_custom_call.1} parent=11 // pred_region
          _
        $region20: #{tpu_custom_call.1} parent=11 // pred_fallthru
          _
        // Predicated region
        $region21: #{tpu_custom_call.1} parent=11 // pred_check
          %p351 = pneg %p232
        $region22: #{tpu_custom_call.1} parent=11 // pred_check_branch
          %353 = sbr.rel (%p351) target = $region24
        $region23: #{tpu_custom_call.1} parent=11 // pred_region
          _
        $region24: #{tpu_custom_call.1} parent=11 // pred_fallthru
          _
        // Predicated region
        $region25: #{tpu_custom_call.1} parent=11 // pred_check
          %p354 = pneg %p253
        $region26: #{tpu_custom_call.1} parent=11 // pred_check_branch
          %356 = sbr.rel (%p354) target = $region28
        $region27: #{tpu_custom_call.1} parent=11 // pred_region
          _
        $region28: #{tpu_custom_call.1} parent=11 // pred_fallthru
          _
        // Predicated region
        $region29: #{tpu_custom_call.1} parent=11 // pred_check
          %p357 = pneg %p274
        $region30: #{tpu_custom_call.1} parent=11 // pred_check_branch
          %359 = sbr.rel (%p357) target = $region32
        $region31: #{tpu_custom_call.1} parent=11 // pred_region
          _
        $region32: #{tpu_custom_call.1} parent=11 // pred_fallthru
          _
      $region12: #{tpu_custom_call.1} parent=5 // pred_fallthru
        _
      %p360 = scmp.lt.s32.totalorder %s21, 4
      // Predicated region
      $region33: #{tpu_custom_call.1} parent=5 // pred_check
        %p361 = pneg %p360
      $region34: #{tpu_custom_call.1} parent=5 // pred_check_branch
        %363 = sbr.rel (%p361) target = $region36
      $region35: #{tpu_custom_call.1} parent=5 // pred_region
        // Predicated region
        $region37: #{tpu_custom_call.1} parent=35 // pred_check
          %p364 = pneg %p53
        $region38: #{tpu_custom_call.1} parent=35 // pred_check_branch
          %366 = sbr.rel (%p364) target = $region40
        $region39: #{tpu_custom_call.1} parent=35 // pred_region
          %p367 = scmp.lt.s32.totalorder %s28, 1
          %s368 = scalar_select %p367, %s28, 1
          %s369 = smul.addr %s368, 2
          %s370 = smul.addr %s369, 8
          %s371 = scalar_lea.vmem %s0, %s370
        $region40: #{tpu_custom_call.1} parent=35 // pred_fallthru
          _
        // Predicated region
        $region41: #{tpu_custom_call.1} parent=35 // pred_check
          %p372 = pneg %p81
        $region42: #{tpu_custom_call.1} parent=35 // pred_check_branch
          %374 = sbr.rel (%p372) target = $region44
        $region43: #{tpu_custom_call.1} parent=35 // pred_region
          %p375 = scmp.lt.s32.totalorder %s28, 1
          %s376 = scalar_select %p375, %s28, 1
          %p377 = scmp.lt.s32.totalorder %s29, 1
          %s378 = scalar_select %p377, %s29, 1
          %s379 = smul.addr %s376, 2
          %s380 = sadd.s32 %s378, %s379
          %s381 = smul.addr %s380, 8
          %s382 = scalar_lea.vmem %s1, %s381
        $region44: #{tpu_custom_call.1} parent=35 // pred_fallthru
          _
        // Predicated region
        $region45: #{tpu_custom_call.1} parent=35 // pred_check
          %p383 = pneg %p107
        $region46: #{tpu_custom_call.1} parent=35 // pred_check_branch
          %385 = sbr.rel (%p383) target = $region48
        $region47: #{tpu_custom_call.1} parent=35 // pred_region
          %p386 = scmp.lt.s32.totalorder %s28, 1
          %s387 = scalar_select %p386, %s28, 1
          %s388 = smul.addr %s387, 2
          %s389 = smul.addr %s388, 8
          %s390 = scalar_lea.vmem %s2, %s389
        $region48: #{tpu_custom_call.1} parent=35 // pred_fallthru
          _
        // Predicated region
        $region49: #{tpu_custom_call.1} parent=35 // pred_check
          %p391 = pneg %p135
        $region50: #{tpu_custom_call.1} parent=35 // pred_check_branch
          %393 = sbr.rel (%p391) target = $region52
        $region51: #{tpu_custom_call.1} parent=35 // pred_region
          %p394 = scmp.lt.s32.totalorder %s28, 1
          %s395 = scalar_select %p394, %s28, 1
          %p396 = scmp.lt.s32.totalorder %s29, 1
          %s397 = scalar_select %p396, %s29, 1
          %s398 = smul.addr %s395, 2
          %s399 = sadd.s32 %s397, %s398
          %s400 = smul.addr %s399, 8
          %s401 = scalar_lea.vmem %s3, %s400
        $region52: #{tpu_custom_call.1} parent=35 // pred_fallthru
          _
        // Predicated region
        $region53: #{tpu_custom_call.1} parent=35 // pred_check
          %p402 = pneg %p163
        $region54: #{tpu_custom_call.1} parent=35 // pred_check_branch
          %404 = sbr.rel (%p402) target = $region56
        $region55: #{tpu_custom_call.1} parent=35 // pred_region
          %s405 = smul.u32 16, %s29
          %p406 = scmp.lt.s32.totalorder %s28, 1
          %s407 = scalar_select %p406, %s28, 1
          %p408 = scmp.lt.s32.totalorder %s405, 31
          %s409 = scalar_select %p408, %s405, 31
          %s410 = smul.addr %s407, 32
          %s411 = sadd.s32 %s409, %s410
          %s412 = smul.addr %s411, 8
          %s413 = scalar_lea.vmem %s4, %s412
          %s414 = smul.u32 16, %s29
        $region56: #{tpu_custom_call.1} parent=35 // pred_fallthru
          _
      $region36: #{tpu_custom_call.1} parent=5 // pred_fallthru
        _
      %p415 = scmp.le.s32.totalorder 1, %s21
      %p416 = scmp.lt.s32.totalorder %s21, 5
      %p417 = pnand %p415, %p416
      %p418 = pneg %p417
      // Predicated region
      $region57: #{tpu_custom_call.1} parent=5 // pred_check
        _
      $region58: #{tpu_custom_call.1} parent=5 // pred_check_branch
        %420 = sbr.rel (%p417) target = $region60
      $region59: #{tpu_custom_call.1} parent=5 // pred_region
        %s421 = ssub.s32 %s21, 1
        %p422 = scmp.lt.s32.totalorder %s30, 1
        %s423 = scalar_select %p422, %s30, 1
        %s424 = smul.addr %s423, 2
        %s425 = smul.addr %s424, 8
        %s426 = scalar_lea.vmem %s0, %s425
        %p427 = pneg %p59
        %p428 = pneg %p56
        %p429 = scmp.lt.s32.totalorder %s30, 1
        %s430 = scalar_select %p429, %s30, 1
        %p431 = scmp.lt.s32.totalorder %s31, 1
        %s432 = scalar_select %p431, %s31, 1
        %s433 = smul.addr %s430, 2
        %s434 = sadd.s32 %s432, %s433
        %s435 = smul.addr %s434, 8
        %s436 = scalar_lea.vmem %s1, %s435
        %p437 = pneg %p87
        %p438 = pneg %p84
        %p439 = scmp.lt.s32.totalorder %s30, 1
        %s440 = scalar_select %p439, %s30, 1
        %s441 = smul.addr %s440, 2
        %s442 = smul.addr %s441, 8
        %s443 = scalar_lea.vmem %s2, %s442
        %p444 = pneg %p113
        %p445 = pneg %p110
        %p446 = scmp.lt.s32.totalorder %s30, 1
        %s447 = scalar_select %p446, %s30, 1
        %p448 = scmp.lt.s32.totalorder %s31, 1
        %s449 = scalar_select %p448, %s31, 1
        %s450 = smul.addr %s447, 2
        %s451 = sadd.s32 %s449, %s450
        %s452 = smul.addr %s451, 8
        %s453 = scalar_lea.vmem %s3, %s452
        %p454 = pneg %p141
        %p455 = pneg %p138
        %s456 = smul.u32 16, %s31
        %p457 = scmp.lt.s32.totalorder %s30, 1
        %s458 = scalar_select %p457, %s30, 1
        %p459 = scmp.lt.s32.totalorder %s456, 31
        %s460 = scalar_select %p459, %s456, 31
        %s461 = smul.addr %s458, 32
        %s462 = sadd.s32 %s460, %s461
        %s463 = smul.addr %s462, 8
        %s464 = scalar_lea.vmem %s4, %s463
        %p465 = pneg %p169
        %p466 = pneg %p166
        %p467 = pneg %p190
        %p468 = pneg %p187
        %p469 = pneg %p211
        %p470 = pneg %p208
        %p471 = pneg %p232
        %p472 = pneg %p229
        %p473 = pneg %p253
        %p474 = pneg %p250
        %p475 = pneg %p274
        %p476 = pneg %p271
        %p477 = pneg %p302
        %p478 = pneg %p299
        %s479 = sand.u32 %s289, 1
        %s480 = scalar_lea.sflag [#allocation3], %s479
        %s481 = sand.u32 %s289, 1
        %s482 = smul.addr %s481, 8
        %s483 = scalar_lea.vmem [#allocation2], %s482
        %p484 = pneg %p330
        %p485 = pneg %p327
        %s486 = smul.u32 16, %s31
        %p487 = scmp.lt.s32.totalorder %s30, 1
        %s488 = scalar_select %p487, %s30, 1
        %p489 = scmp.lt.s32.totalorder %s486, 31
        %s490 = scalar_select %p489, %s486, 31
        %s491 = smul.addr %s488, 32
        %s492 = sadd.s32 %s490, %s491
        %s493 = smul.addr %s492, 8
        %s494 = scalar_lea.vmem %s11, %s493
        %p495 = scmp.lt.s32.totalorder %s30, 1
        %s496 = scalar_select %p495, %s30, 1
        %s497 = smul.addr %s496, 2
        %s498 = smul.addr %s497, 8
        %s499 = scalar_lea.vmem %s0, %s498
        %p500 = scmp.lt.s32.totalorder %s30, 1
        %s501 = scalar_select %p500, %s30, 1
        %p502 = scmp.lt.s32.totalorder %s31, 1
        %s503 = scalar_select %p502, %s31, 1
        %s504 = smul.addr %s501, 2
        %s505 = sadd.s32 %s503, %s504
        %s506 = smul.addr %s505, 8
        %s507 = scalar_lea.vmem %s1, %s506
        %p508 = scmp.lt.s32.totalorder %s30, 1
        %s509 = scalar_select %p508, %s30, 1
        %s510 = smul.addr %s509, 2
        %s511 = smul.addr %s510, 8
        %s512 = scalar_lea.vmem %s2, %s511
        %p513 = scmp.lt.s32.totalorder %s30, 1
        %s514 = scalar_select %p513, %s30, 1
        %p515 = scmp.lt.s32.totalorder %s31, 1
        %s516 = scalar_select %p515, %s31, 1
        %s517 = smul.addr %s514, 2
        %s518 = sadd.s32 %s516, %s517
        %s519 = smul.addr %s518, 8
        %s520 = scalar_lea.vmem %s3, %s519
        %s521 = smul.u32 16, %s31
        %p522 = scmp.lt.s32.totalorder %s30, 1
        %s523 = scalar_select %p522, %s30, 1
        %p524 = scmp.lt.s32.totalorder %s521, 31
        %s525 = scalar_select %p524, %s521, 31
        %s526 = smul.addr %s523, 32
        %s527 = sadd.s32 %s525, %s526
        %s528 = smul.addr %s527, 8
        %s529 = scalar_lea.vmem %s4, %s528
        %s530 = smul.u32 16, %s31
        %s531 = smul.u32 16, %s31
        %p532 = scmp.lt.s32.totalorder %s30, 1
        %s533 = scalar_select %p532, %s30, 1
        %p534 = scmp.lt.s32.totalorder %s531, 31
        %s535 = scalar_select %p534, %s531, 31
        %s536 = smul.addr %s533, 32
        %s537 = sadd.s32 %s535, %s536
        %s538 = smul.addr %s537, 8
        %s539 = scalar_lea.vmem %s11, %s538
        %s540 = smul.u32 16, %s31
        %v541 = vld [vmem:[%s499] sm:$0xff]
        %v542 = vld [vmem:[%s499 + $0x8] sm:$0xff]
        %v543 = vld [vmem:[%s507] sm:$0xff]
        %v544 = vld [vmem:[%s512] sm:$0xff]
        %v545 = vld [vmem:[%s512 + $0x8] sm:$0xff]
        %v546 = vld [vmem:[%s520] sm:$0xff]
        %v547 = vld [vmem:[%s529] sm:$0xff]
        %v548 = vld [vmem:[%s529 + $0x8] sm:$0xff]
        %v549 = vld [vmem:[%s529 + $0x10] sm:$0xff]
        %v550 = vld [vmem:[%s529 + $0x18] sm:$0xff]
        %v551 = vld [vmem:[%s529 + $0x20] sm:$0xff]
        %v552 = vld [vmem:[%s529 + $0x28] sm:$0xff]
        %v553 = vld [vmem:[%s529 + $0x30] sm:$0xff]
        %v554 = vld [vmem:[%s529 + $0x38] sm:$0xff]
        %v555 = vld [vmem:[%s529 + $0x40] sm:$0xff]
        %v556 = vld [vmem:[%s529 + $0x48] sm:$0xff]
        %v557 = vld [vmem:[%s529 + $0x50] sm:$0xff]
        %v558 = vld [vmem:[%s529 + $0x58] sm:$0xff]
        %v559 = vld [vmem:[%s529 + $0x60] sm:$0xff]
        %v560 = vld [vmem:[%s529 + $0x68] sm:$0xff]
        %v561 = vld [vmem:[%s529 + $0x70] sm:$0xff]
        %v562 = vld [vmem:[%s529 + $0x78] sm:$0xff]
        %v563 = vld [vmem:[%s8] sm:$0xff]
        %v564 = vld [vmem:[%s8 + $0x8] sm:$0xff]
        %v565 = vld [vmem:[%s8 + $0x10] sm:$0x7]
        %v566 = vld [vmem:[%s9] sm:$0x3]
        %vm567 = vcmask 261120
        %v568 = vsel %vm567, %v541, 0.0
        %569 = vadd.xlane.f32.xlu0 %v568
        %v570 = vpop.xlane.xlu0 %569
        %v571 = vsel %vm567, %v542, 0.0
        %572 = vadd.xlane.f32.xlu0 %v571
        %v573 = vpop.xlane.xlu0 %572
        %v574 = vrcp.pop 32.0
        %v575 = vmul.f32 %v570, %v574
        %v576 = vmul.f32 %v573, %v574
        %v577 = vsub.f32 %v541, %v575
        %v578 = vsub.f32 %v542, %v576
        %v579 = vmul.f32 %v577, %v577
        %v580 = vmul.f32 %v578, %v578
        %v581 = vsel %vm567, %v579, 0.0
        %582 = vadd.xlane.f32.xlu0 %v581
        %v583 = vpop.xlane.xlu0 %582
        %v584 = vsel %vm567, %v580, 0.0
        %585 = vadd.xlane.f32.xlu0 %v584
        %v586 = vpop.xlane.xlu0 %585
        %v587 = vmul.f32 %v583, %v574
        %v588 = vmul.f32 %v586, %v574
        %v589 = vadd.f32 %v587, 1e-05
        %v590 = vadd.f32 %v588, 1e-05
        %v591 = vrsqrt.pop %v589
        %v592 = vrsqrt.pop %v590
        %v593 = vmul.f32 %v577, %v591
        %v594 = vmul.f32 %v578, %v592
        %v595 = vlaneseq
        %v596 = vshrl.u32 %v595, 7
        %v597 = vsub.s32 0, %v596
        %v598 = vrot.slane %v563, %v597
        %v599 = vmul.f32 %v593, %v598
        %v600 = vmul.f32 %v594, %v598
        %v601 = vlaneseq
        %v602 = vshrl.u32 %v601, 7
        %v603 = vsub.s32 1, %v602
        %v604 = vrot.slane %v563, %v603
        %v605 = vadd.f32 %v599, %v604
        %v606 = vadd.f32 %v600, %v604
        %v607 = vsel %vm567, %v543, 0.0
        %608 = vadd.xlane.f32.xlu0 %v607
        %v609 = vpop.xlane.xlu0 %608
        %v610 = vmul.f32 %v609, %v574
        %v611 = vsub.f32 %v543, %v610
        %v612 = vmul.f32 %v611, %v611
        %v613 = vsel %vm567, %v612, 0.0
        %614 = vadd.xlane.f32.xlu0 %v613
        %v615 = vpop.xlane.xlu0 %614
        %v616 = vmul.f32 %v615, %v574
        %v617 = vadd.f32 %v616, 1e-05
        %v618 = vrsqrt.pop %v617
        %v619 = vmul.f32 %v611, %v618
        %v620 = vmul.f32 %v619, %v598
        %v621 = vadd.f32 %v620, %v604
        %v622 = vld [vmem:[%s5] sm:$0xff]
        %v623 = vld [vmem:[%s5 + $0x8] sm:$0xff]
        %v624 = vld [vmem:[%s5 + $0x10] sm:$0xff]
        %v625 = vld [vmem:[%s5 + $0x18] sm:$0xff]
        %v626 = vlaneseq
        %v627 = vshrl.u32 %v626, 7
        %v628 = vsub.s32 2, %v627
        %v629 = vrot.slane %v563, %v628
        %v631 = vsel %vm567, %v621, 0
        %633 = vmatprep.subr.mxu0 0.0
        %634 = vmatpush1.msra.mxu0 %v622
        %635 = vmatprep.subr.mxu0 0.0
        %636 = vmatpush1.msra.mxu0 %v623
        %637 = vmatprep.subr.mxu0 0.0
        %638 = vmatpush1.msra.mxu0 %v624
        %639 = vmatprep.subr.mxu0 0.0
        %640 = vmatpush1.msra.mxu0 %v625
        %641 = vmatprep.subr.mxu0 0.0
        %642 = vmatpush1.msra.mxu0 0.0
        %643 = vmatprep.subr.mxu0 0.0
        %644 = vmatpush1.msra.mxu0 0.0
        %645 = vmatprep.subr.mxu0 0.0
        %646 = vmatpush1.msra.mxu0 0.0
        %647 = vmatprep.subr.mxu0 0.0
        %648 = vmatpush1.msra.mxu0 0.0
        %649 = vmatprep.subr.mxu0 0.0
        %650 = vmatpush1.msra.mxu0 0.0
        %651 = vmatprep.subr.mxu0 0.0
        %652 = vmatpush1.msra.mxu0 0.0
        %653 = vmatprep.subr.mxu0 0.0
        %654 = vmatpush1.msra.mxu0 0.0
        %655 = vmatprep.subr.mxu0 0.0
        %656 = vmatpush1.msra.mxu0 0.0
        %657 = vmatprep.subr.mxu0 0.0
        %658 = vmatpush1.msra.mxu0 0.0
        %659 = vmatprep.subr.mxu0 0.0
        %660 = vmatpush1.msra.mxu0 0.0
        %661 = vmatprep.subr.mxu0 0.0
        %662 = vmatpush1.msra.mxu0 0.0
        %663 = vmatprep.subr.mxu0 0.0
        %664 = vmatpush1.msra.mxu0 0.0
        %665 = vmatprep.subr.mxu0 0.0
        %666 = vmatpush1.msra.mxu0 0.0
        %667 = vmatprep.subr.mxu0 0.0
        %668 = vmatpush1.msra.mxu0 0.0
        %669 = vmatprep.subr.mxu0 0.0
        %670 = vmatpush1.msra.mxu0 0.0
        %671 = vmatprep.subr.mxu0 0.0
        %672 = vmatpush1.msra.mxu0 0.0
        %673 = vmatprep.subr.mxu0 0.0
        %674 = vmatpush1.msra.mxu0 0.0
        %675 = vmatprep.subr.mxu0 0.0
        %676 = vmatpush1.msra.mxu0 0.0
        %677 = vmatprep.subr.mxu0 0.0
        %678 = vmatpush1.msra.mxu0 0.0
        %679 = vmatprep.subr.mxu0 0.0
        %680 = vmatpush1.msra.mxu0 0.0
        %681 = vmatprep.subr.mxu0 0.0
        %682 = vmatpush1.msra.mxu0 0.0
        %683 = vmatprep.subr.mxu0 0.0
        %684 = vmatpush1.msra.mxu0 0.0
        %685 = vmatprep.subr.mxu0 0.0
        %686 = vmatpush1.msra.mxu0 0.0
        %687 = vmatprep.subr.mxu0 0.0
        %688 = vmatpush1.msra.mxu0 0.0
        %689 = vmatprep.subr.mxu0 0.0
        %690 = vmatpush1.msra.mxu0 0.0
        %691 = vmatprep.subr.mxu0 0.0
        %692 = vmatpush1.msra.mxu0 0.0
        %693 = vmatprep.subr.mxu0 0.0
        %694 = vmatpush1.msra.mxu0 0.0
        %695 = vmatprep.subr.mxu0 0.0
        %696 = vmatpush1.msra.mxu0 0.0
        %697 = vmatprep.mubr.f32.mxu0 0.0
        %698 = vmatmul.mubr.f32.gmra.mrb[0].mxu0 %v631
        %v699 = vpop.f32.mrb[0].mxu0
        %v700 = vadd.f32 %v629, %v699
        %v701 = vpop.f32.mrb[0].mxu0
        %702 = vdwg.mxu0
        %v703 = vsel %vm567, %v700, 0.0
        %704 = vadd.xlane.f32.xlu0 %v703
        %v705 = vpop.xlane.xlu0 %704
        %v706 = vmul.f32 %v705, %v574
        %v707 = vsub.f32 %v700, %v706
        %v708 = vmul.f32 %v707, %v707
        %v709 = vsel %vm567, %v708, 0.0
        %710 = vadd.xlane.f32.xlu0 %v709
        %v711 = vpop.xlane.xlu0 %710
        %v712 = vmul.f32 %v711, %v574
        %v713 = vadd.f32 %v712, 1e-05
        %v714 = vrsqrt.pop %v713
        %v715 = vmul.f32 %v707, %v714
        %v716 = vlaneseq
        %v717 = vshrl.u32 %v716, 7
        %v718 = vsub.s32 3, %v717
        %v719 = vrot.slane %v563, %v718
        %v720 = vmul.f32 %v715, %v719
        %v721 = vlaneseq
        %v722 = vshrl.u32 %v721, 7
        %v723 = vsub.s32 4, %v722
        %v724 = vrot.slane %v563, %v723
        %v725 = vadd.f32 %v720, %v724
        %vm726 = vcmp.gt.f32.partialorder %v725, 20.0
        %v727 = vmin.f32 %v725, 20.0
        %v728 = vmul.f32 %v727, 1.442695
        %v729 = vpow.pop %v728
        %v730 = vadd.f32 %v729, 1.0
        %v731 = vlog2.pop %v730
        %v732 = vmul.f32 %v731, 0.6931472
        %v733 = vmul.f32 -0.5, %v729
        %v734 = vadd.f32 %v733, 1.0
        %v735 = vmul.f32 %v734, %v729
        %v736 = vand.u32 2147483647, %v729
        %vm737 = vcmp.lt.f32.partialorder %v736, 0.0004427343
        %v738 = vsel %vm737, %v735, %v732
        %v739 = vsel %vm726, %v725, %v738
        %v740 = vtanh.pop %v739
        %v741 = vmul.f32 %v725, %v740
        %v742 = vld [vmem:[%s6] sm:$0xff]
        %v743 = vld [vmem:[%s6 + $0x8] sm:$0xff]
        %v744 = vld [vmem:[%s6 + $0x10] sm:$0xff]
        %v745 = vld [vmem:[%s6 + $0x18] sm:$0xff]
        %v746 = vlaneseq
        %v747 = vshrl.u32 %v746, 7
        %v748 = vsub.s32 0, %v747
        %v749 = vrot.slane %v566, %v748
        %v751 = vsel %vm567, %v605, 0
        %v754 = vsel %vm567, %v606, 0
        %756 = vmatprep.subr.mxu0 0.0
        %757 = vmatpush1.msra.mxu0 %v742
        %758 = vmatprep.subr.mxu0 0.0
        %759 = vmatpush1.msra.mxu0 %v743
        %760 = vmatprep.subr.mxu0 0.0
        %761 = vmatpush1.msra.mxu0 %v744
        %762 = vmatprep.subr.mxu0 0.0
        %763 = vmatpush1.msra.mxu0 %v745
        %764 = vmatprep.subr.mxu0 0.0
        %765 = vmatpush1.msra.mxu0 0.0
        %766 = vmatprep.subr.mxu0 0.0
        %767 = vmatpush1.msra.mxu0 0.0
        %768 = vmatprep.subr.mxu0 0.0
        %769 = vmatpush1.msra.mxu0 0.0
        %770 = vmatprep.subr.mxu0 0.0
        %771 = vmatpush1.msra.mxu0 0.0
        %772 = vmatprep.subr.mxu0 0.0
        %773 = vmatpush1.msra.mxu0 0.0
        %774 = vmatprep.subr.mxu0 0.0
        %775 = vmatpush1.msra.mxu0 0.0
        %776 = vmatprep.subr.mxu0 0.0
        %777 = vmatpush1.msra.mxu0 0.0
        %778 = vmatprep.subr.mxu0 0.0
        %779 = vmatpush1.msra.mxu0 0.0
        %780 = vmatprep.subr.mxu0 0.0
        %781 = vmatpush1.msra.mxu0 0.0
        %782 = vmatprep.subr.mxu0 0.0
        %783 = vmatpush1.msra.mxu0 0.0
        %784 = vmatprep.subr.mxu0 0.0
        %785 = vmatpush1.msra.mxu0 0.0
        %786 = vmatprep.subr.mxu0 0.0
        %787 = vmatpush1.msra.mxu0 0.0
        %788 = vmatprep.subr.mxu0 0.0
        %789 = vmatpush1.msra.mxu0 0.0
        %790 = vmatprep.subr.mxu0 0.0
        %791 = vmatpush1.msra.mxu0 0.0
        %792 = vmatprep.subr.mxu0 0.0
        %793 = vmatpush1.msra.mxu0 0.0
        %794 = vmatprep.subr.mxu0 0.0
        %795 = vmatpush1.msra.mxu0 0.0
        %796 = vmatprep.subr.mxu0 0.0
        %797 = vmatpush1.msra.mxu0 0.0
        %798 = vmatprep.subr.mxu0 0.0
        %799 = vmatpush1.msra.mxu0 0.0
        %800 = vmatprep.subr.mxu0 0.0
        %801 = vmatpush1.msra.mxu0 0.0
        %802 = vmatprep.subr.mxu0 0.0
        %803 = vmatpush1.msra.mxu0 0.0
        %804 = vmatprep.subr.mxu0 0.0
        %805 = vmatpush1.msra.mxu0 0.0
        %806 = vmatprep.subr.mxu0 0.0
        %807 = vmatpush1.msra.mxu0 0.0
        %808 = vmatprep.subr.mxu0 0.0
        %809 = vmatpush1.msra.mxu0 0.0
        %810 = vmatprep.subr.mxu0 0.0
        %811 = vmatpush1.msra.mxu0 0.0
        %812 = vmatprep.subr.mxu0 0.0
        %813 = vmatpush1.msra.mxu0 0.0
        %814 = vmatprep.subr.mxu0 0.0
        %815 = vmatpush1.msra.mxu0 0.0
        %816 = vmatprep.subr.mxu0 0.0
        %817 = vmatpush1.msra.mxu0 0.0
        %818 = vmatprep.subr.mxu0 0.0
        %819 = vmatpush1.msra.mxu0 0.0
        %820 = vmatprep.mubr.f32.mxu0 0.0
        %821 = vmatmul.mubr.f32.gmra.mrb[0].mxu0 %v751
        %v822 = vpop.f32.mrb[0].mxu0
        %v823 = vadd.f32 %v749, %v822
        %v824 = vpop.f32.mrb[0].mxu0
        %825 = vmatprep.mubr.f32.mxu0 0.0
        %826 = vmatmul.mubr.f32.gmra.mrb[0].mxu0 %v754
        %v827 = vpop.f32.mrb[0].mxu0
        %v828 = vadd.f32 %v749, %v827
        %v829 = vpop.f32.mrb[0].mxu0
        %830 = vdwg.mxu0
        %v831 = vsel %vm567, %v823, 0.0
        %832 = vadd.xlane.f32.xlu0 %v831
        %v833 = vpop.xlane.xlu0 %832
        %v834 = vsel %vm567, %v828, 0.0
        %835 = vadd.xlane.f32.xlu0 %v834
        %v836 = vpop.xlane.xlu0 %835
        %v837 = vmul.f32 %v833, %v574
        %v838 = vmul.f32 %v836, %v574
        %v839 = vsub.f32 %v823, %v837
        %v840 = vsub.f32 %v828, %v838
        %v841 = vmul.f32 %v839, %v839
        %v842 = vmul.f32 %v840, %v840
        %v843 = vsel %vm567, %v841, 0.0
        %844 = vadd.xlane.f32.xlu0 %v843
        %v845 = vpop.xlane.xlu0 %844
        %v846 = vsel %vm567, %v842, 0.0
        %847 = vadd.xlane.f32.xlu0 %v846
        %v848 = vpop.xlane.xlu0 %847
        %v849 = vmul.f32 %v845, %v574
        %v850 = vmul.f32 %v848, %v574
        %v851 = vadd.f32 %v849, 1e-05
        %v852 = vadd.f32 %v850, 1e-05
        %v853 = vrsqrt.pop %v851
        %v854 = vrsqrt.pop %v852
        %v855 = vmul.f32 %v839, %v853
        %v856 = vmul.f32 %v840, %v854
        %v857 = vlaneseq
        %v858 = vshrl.u32 %v857, 7
        %v859 = vsub.s32 5, %v858
        %v860 = vrot.slane %v563, %v859
        %v861 = vmul.f32 %v855, %v860
        %v862 = vmul.f32 %v856, %v860
        %v863 = vlaneseq
        %v864 = vshrl.u32 %v863, 7
        %v865 = vsub.s32 6, %v864
        %v866 = vrot.slane %v563, %v865
        %v867 = vadd.f32 %v861, %v866
        %v868 = vadd.f32 %v862, %v866
        %vm869 = vcmp.gt.f32.partialorder %v867, 20.0
        %vm870 = vcmp.gt.f32.partialorder %v868, 20.0
        %v871 = vmin.f32 %v867, 20.0
        %v872 = vmin.f32 %v868, 20.0
        %v873 = vmul.f32 %v871, 1.442695
        %v874 = vpow.pop %v873
        %v875 = vmul.f32 %v872, 1.442695
        %v876 = vpow.pop %v875
        %v877 = vadd.f32 %v874, 1.0
        %v878 = vlog2.pop %v877
        %v879 = vmul.f32 %v878, 0.6931472
        %v880 = vmul.f32 -0.5, %v874
        %v881 = vadd.f32 %v880, 1.0
        %v882 = vmul.f32 %v881, %v874
        %v883 = vand.u32 2147483647, %v874
        %vm884 = vcmp.lt.f32.partialorder %v883, 0.0004427343
        %v885 = vsel %vm884, %v882, %v879
        %v886 = vadd.f32 %v876, 1.0
        %v887 = vlog2.pop %v886
        %v888 = vmul.f32 %v887, 0.6931472
        %v889 = vmul.f32 -0.5, %v876
        %v890 = vadd.f32 %v889, 1.0
        %v891 = vmul.f32 %v890, %v876
        %v892 = vand.u32 2147483647, %v876
        %vm893 = vcmp.lt.f32.partialorder %v892, 0.0004427343
        %v894 = vsel %vm893, %v891, %v888
        %v895 = vsel %vm869, %v867, %v885
        %v896 = vsel %vm870, %v868, %v894
        %v897 = vtanh.pop %v895
        %v898 = vtanh.pop %v896
        %v899 = vmul.f32 %v867, %v897
        %v900 = vmul.f32 %v868, %v898
        %v901 = vld [vmem:[%s7] sm:$0xff]
        %v902 = vld [vmem:[%s7 + $0x8] sm:$0xff]
        %v903 = vld [vmem:[%s7 + $0x10] sm:$0xff]
        %v904 = vld [vmem:[%s7 + $0x18] sm:$0xff]
        %v905 = vlaneseq
        %v906 = vshrl.u32 %v905, 7
        %v907 = vsub.s32 1, %v906
        %v908 = vrot.slane %v566, %v907
        %v910 = vsel %vm567, %v547, 0
        %v913 = vsel %vm567, %v548, 0
        %v916 = vsel %vm567, %v549, 0
        %v919 = vsel %vm567, %v550, 0
        %v922 = vsel %vm567, %v551, 0
        %v925 = vsel %vm567, %v552, 0
        %v928 = vsel %vm567, %v553, 0
        %v931 = vsel %vm567, %v554, 0
        %v934 = vsel %vm567, %v555, 0
        %v937 = vsel %vm567, %v556, 0
        %v940 = vsel %vm567, %v557, 0
        %v943 = vsel %vm567, %v558, 0
        %v946 = vsel %vm567, %v559, 0
        %v949 = vsel %vm567, %v560, 0
        %v952 = vsel %vm567, %v561, 0
        %v955 = vsel %vm567, %v562, 0
        %957 = vmatprep.subr.mxu0 0.0
        %958 = vmatpush1.msra.mxu0 %v901
        %959 = vmatprep.subr.mxu0 0.0
        %960 = vmatpush1.msra.mxu0 %v902
        %961 = vmatprep.subr.mxu0 0.0
        %962 = vmatpush1.msra.mxu0 %v903
        %963 = vmatprep.subr.mxu0 0.0
        %964 = vmatpush1.msra.mxu0 %v904
        %965 = vmatprep.subr.mxu0 0.0
        %966 = vmatpush1.msra.mxu0 0.0
        %967 = vmatprep.subr.mxu0 0.0
        %968 = vmatpush1.msra.mxu0 0.0
        %969 = vmatprep.subr.mxu0 0.0
        %970 = vmatpush1.msra.mxu0 0.0
        %971 = vmatprep.subr.mxu0 0.0
        %972 = vmatpush1.msra.mxu0 0.0
        %973 = vmatprep.subr.mxu0 0.0
        %974 = vmatpush1.msra.mxu0 0.0
        %975 = vmatprep.subr.mxu0 0.0
        %976 = vmatpush1.msra.mxu0 0.0
        %977 = vmatprep.subr.mxu0 0.0
        %978 = vmatpush1.msra.mxu0 0.0
        %979 = vmatprep.subr.mxu0 0.0
        %980 = vmatpush1.msra.mxu0 0.0
        %981 = vmatprep.subr.mxu0 0.0
        %982 = vmatpush1.msra.mxu0 0.0
        %983 = vmatprep.subr.mxu0 0.0
        %984 = vmatpush1.msra.mxu0 0.0
        %985 = vmatprep.subr.mxu0 0.0
        %986 = vmatpush1.msra.mxu0 0.0
        %987 = vmatprep.subr.mxu0 0.0
        %988 = vmatpush1.msra.mxu0 0.0
        %989 = vmatprep.subr.mxu0 0.0
        %990 = vmatpush1.msra.mxu0 0.0
        %991 = vmatprep.subr.mxu0 0.0
        %992 = vmatpush1.msra.mxu0 0.0
        %993 = vmatprep.subr.mxu0 0.0
        %994 = vmatpush1.msra.mxu0 0.0
        %995 = vmatprep.subr.mxu0 0.0
        %996 = vmatpush1.msra.mxu0 0.0
        %997 = vmatprep.subr.mxu0 0.0
        %998 = vmatpush1.msra.mxu0 0.0
        %999 = vmatprep.subr.mxu0 0.0
        %1000 = vmatpush1.msra.mxu0 0.0
        %1001 = vmatprep.subr.mxu0 0.0
        %1002 = vmatpush1.msra.mxu0 0.0
        %1003 = vmatprep.subr.mxu0 0.0
        %1004 = vmatpush1.msra.mxu0 0.0
        %1005 = vmatprep.subr.mxu0 0.0
        %1006 = vmatpush1.msra.mxu0 0.0
        %1007 = vmatprep.subr.mxu0 0.0
        %1008 = vmatpush1.msra.mxu0 0.0
        %1009 = vmatprep.subr.mxu0 0.0
        %1010 = vmatpush1.msra.mxu0 0.0
        %1011 = vmatprep.subr.mxu0 0.0
        %1012 = vmatpush1.msra.mxu0 0.0
        %1013 = vmatprep.subr.mxu0 0.0
        %1014 = vmatpush1.msra.mxu0 0.0
        %1015 = vmatprep.subr.mxu0 0.0
        %1016 = vmatpush1.msra.mxu0 0.0
        %1017 = vmatprep.subr.mxu0 0.0
        %1018 = vmatpush1.msra.mxu0 0.0
        %1019 = vmatprep.subr.mxu0 0.0
        %1020 = vmatpush1.msra.mxu0 0.0
        %1021 = vmatprep.mubr.f32.mxu0 0.0
        %1022 = vmatmul.mubr.f32.gmra.mrb[0].mxu0 %v910
        %v1023 = vpop.f32.mrb[0].mxu0
        %v1024 = vadd.f32 %v908, %v1023
        %v1025 = vpop.f32.mrb[0].mxu0
        %1026 = vmatprep.mubr.f32.mxu0 0.0
        %1027 = vmatmul.mubr.f32.gmra.mrb[0].mxu0 %v913
        %v1028 = vpop.f32.mrb[0].mxu0
        %v1029 = vadd.f32 %v908, %v1028
        %v1030 = vpop.f32.mrb[0].mxu0
        %1031 = vmatprep.mubr.f32.mxu0 0.0
        %1032 = vmatmul.mubr.f32.gmra.mrb[0].mxu0 %v916
        %v1033 = vpop.f32.mrb[0].mxu0
        %v1034 = vadd.f32 %v908, %v1033
        %v1035 = vpop.f32.mrb[0].mxu0
        %1036 = vmatprep.mubr.f32.mxu0 0.0
        %1037 = vmatmul.mubr.f32.gmra.mrb[0].mxu0 %v919
        %v1038 = vpop.f32.mrb[0].mxu0
        %v1039 = vadd.f32 %v908, %v1038
        %v1040 = vpop.f32.mrb[0].mxu0
        %1041 = vmatprep.mubr.f32.mxu0 0.0
        %1042 = vmatmul.mubr.f32.gmra.mrb[0].mxu0 %v922
        %v1043 = vpop.f32.mrb[0].mxu0
        %v1044 = vadd.f32 %v908, %v1043
        %v1045 = vpop.f32.mrb[0].mxu0
        %1046 = vmatprep.mubr.f32.mxu0 0.0
        %1047 = vmatmul.mubr.f32.gmra.mrb[0].mxu0 %v925
        %v1048 = vpop.f32.mrb[0].mxu0
        %v1049 = vadd.f32 %v908, %v1048
        %v1050 = vpop.f32.mrb[0].mxu0
        %1051 = vmatprep.mubr.f32.mxu0 0.0
        %1052 = vmatmul.mubr.f32.gmra.mrb[0].mxu0 %v928
        %v1053 = vpop.f32.mrb[0].mxu0
        %v1054 = vadd.f32 %v908, %v1053
        %v1055 = vpop.f32.mrb[0].mxu0
        %1056 = vmatprep.mubr.f32.mxu0 0.0
        %1057 = vmatmul.mubr.f32.gmra.mrb[0].mxu0 %v931
        %v1058 = vpop.f32.mrb[0].mxu0
        %v1059 = vadd.f32 %v908, %v1058
        %v1060 = vpop.f32.mrb[0].mxu0
        %1061 = vmatprep.mubr.f32.mxu0 0.0
        %1062 = vmatmul.mubr.f32.gmra.mrb[0].mxu0 %v934
        %v1063 = vpop.f32.mrb[0].mxu0
        %v1064 = vadd.f32 %v908, %v1063
        %v1065 = vpop.f32.mrb[0].mxu0
        %1066 = vmatprep.mubr.f32.mxu0 0.0
        %1067 = vmatmul.mubr.f32.gmra.mrb[0].mxu0 %v937
        %v1068 = vpop.f32.mrb[0].mxu0
        %v1069 = vadd.f32 %v908, %v1068
        %v1070 = vpop.f32.mrb[0].mxu0
        %1071 = vmatprep.mubr.f32.mxu0 0.0
        %1072 = vmatmul.mubr.f32.gmra.mrb[0].mxu0 %v940
        %v1073 = vpop.f32.mrb[0].mxu0
        %v1074 = vadd.f32 %v908, %v1073
        %v1075 = vpop.f32.mrb[0].mxu0
        %1076 = vmatprep.mubr.f32.mxu0 0.0
        %1077 = vmatmul.mubr.f32.gmra.mrb[0].mxu0 %v943
        %v1078 = vpop.f32.mrb[0].mxu0
        %v1079 = vadd.f32 %v908, %v1078
        %v1080 = vpop.f32.mrb[0].mxu0
        %1081 = vmatprep.mubr.f32.mxu0 0.0
        %1082 = vmatmul.mubr.f32.gmra.mrb[0].mxu0 %v946
        %v1083 = vpop.f32.mrb[0].mxu0
        %v1084 = vadd.f32 %v908, %v1083
        %v1085 = vpop.f32.mrb[0].mxu0
        %1086 = vmatprep.mubr.f32.mxu0 0.0
        %1087 = vmatmul.mubr.f32.gmra.mrb[0].mxu0 %v949
        %v1088 = vpop.f32.mrb[0].mxu0
        %v1089 = vadd.f32 %v908, %v1088
        %v1090 = vpop.f32.mrb[0].mxu0
        %1091 = vmatprep.mubr.f32.mxu0 0.0
        %1092 = vmatmul.mubr.f32.gmra.mrb[0].mxu0 %v952
        %v1093 = vpop.f32.mrb[0].mxu0
        %v1094 = vadd.f32 %v908, %v1093
        %v1095 = vpop.f32.mrb[0].mxu0
        %1096 = vmatprep.mubr.f32.mxu0 0.0
        %1097 = vmatmul.mubr.f32.gmra.mrb[0].mxu0 %v955
        %v1098 = vpop.f32.mrb[0].mxu0
        %v1099 = vadd.f32 %v908, %v1098
        %v1100 = vpop.f32.mrb[0].mxu0
        %1101 = vdwg.mxu0
        %v1102 = vsel %vm567, %v1024, 0.0
        %1103 = vadd.xlane.f32.xlu0 %v1102
        %v1104 = vpop.xlane.xlu0 %1103
        %v1105 = vsel %vm567, %v1029, 0.0
        %1106 = vadd.xlane.f32.xlu0 %v1105
        %v1107 = vpop.xlane.xlu0 %1106
        %v1108 = vsel %vm567, %v1034, 0.0
        %1109 = vadd.xlane.f32.xlu0 %v1108
        %v1110 = vpop.xlane.xlu0 %1109
        %v1111 = vsel %vm567, %v1039, 0.0
        %1112 = vadd.xlane.f32.xlu0 %v1111
        %v1113 = vpop.xlane.xlu0 %1112
        %v1114 = vsel %vm567, %v1044, 0.0
        %1115 = vadd.xlane.f32.xlu0 %v1114
        %v1116 = vpop.xlane.xlu0 %1115
        %v1117 = vsel %vm567, %v1049, 0.0
        %1118 = vadd.xlane.f32.xlu0 %v1117
        %v1119 = vpop.xlane.xlu0 %1118
        %v1120 = vsel %vm567, %v1054, 0.0
        %1121 = vadd.xlane.f32.xlu0 %v1120
        %v1122 = vpop.xlane.xlu0 %1121
        %v1123 = vsel %vm567, %v1059, 0.0
        %1124 = vadd.xlane.f32.xlu0 %v1123
        %v1125 = vpop.xlane.xlu0 %1124
        %v1126 = vsel %vm567, %v1064, 0.0
        %1127 = vadd.xlane.f32.xlu0 %v1126
        %v1128 = vpop.xlane.xlu0 %1127
        %v1129 = vsel %vm567, %v1069, 0.0
        %1130 = vadd.xlane.f32.xlu0 %v1129
        %v1131 = vpop.xlane.xlu0 %1130
        %v1132 = vsel %vm567, %v1074, 0.0
        %1133 = vadd.xlane.f32.xlu0 %v1132
        %v1134 = vpop.xlane.xlu0 %1133
        %v1135 = vsel %vm567, %v1079, 0.0
        %1136 = vadd.xlane.f32.xlu0 %v1135
        %v1137 = vpop.xlane.xlu0 %1136
        %v1138 = vsel %vm567, %v1084, 0.0
        %1139 = vadd.xlane.f32.xlu0 %v1138
        %v1140 = vpop.xlane.xlu0 %1139
        %v1141 = vsel %vm567, %v1089, 0.0
        %1142 = vadd.xlane.f32.xlu0 %v1141
        %v1143 = vpop.xlane.xlu0 %1142
        %v1144 = vsel %vm567, %v1094, 0.0
        %1145 = vadd.xlane.f32.xlu0 %v1144
        %v1146 = vpop.xlane.xlu0 %1145
        %v1147 = vsel %vm567, %v1099, 0.0
        %1148 = vadd.xlane.f32.xlu0 %v1147
        %v1149 = vpop.xlane.xlu0 %1148
        %v1150 = vmul.f32 %v1104, %v574
        %v1151 = vmul.f32 %v1107, %v574
        %v1152 = vmul.f32 %v1110, %v574
        %v1153 = vmul.f32 %v1113, %v574
        %v1154 = vmul.f32 %v1116, %v574
        %v1155 = vmul.f32 %v1119, %v574
        %v1156 = vmul.f32 %v1122, %v574
        %v1157 = vmul.f32 %v1125, %v574
        %v1158 = vmul.f32 %v1128, %v574
        %v1159 = vmul.f32 %v1131, %v574
        %v1160 = vmul.f32 %v1134, %v574
        %v1161 = vmul.f32 %v1137, %v574
        %v1162 = vmul.f32 %v1140, %v574
        %v1163 = vmul.f32 %v1143, %v574
        %v1164 = vmul.f32 %v1146, %v574
        %v1165 = vmul.f32 %v1149, %v574
        %v1166 = vsub.f32 %v1024, %v1150
        %v1167 = vsub.f32 %v1029, %v1151
        %v1168 = vsub.f32 %v1034, %v1152
        %v1169 = vsub.f32 %v1039, %v1153
        %v1170 = vsub.f32 %v1044, %v1154
        %v1171 = vsub.f32 %v1049, %v1155
        %v1172 = vsub.f32 %v1054, %v1156
        %v1173 = vsub.f32 %v1059, %v1157
        %v1174 = vsub.f32 %v1064, %v1158
        %v1175 = vsub.f32 %v1069, %v1159
        %v1176 = vsub.f32 %v1074, %v1160
        %v1177 = vsub.f32 %v1079, %v1161
        %v1178 = vsub.f32 %v1084, %v1162
        %v1179 = vsub.f32 %v1089, %v1163
        %v1180 = vsub.f32 %v1094, %v1164
        %v1181 = vsub.f32 %v1099, %v1165
        %v1182 = vmul.f32 %v1166, %v1166
        %v1183 = vmul.f32 %v1167, %v1167
        %v1184 = vmul.f32 %v1168, %v1168
        %v1185 = vmul.f32 %v1169, %v1169
        %v1186 = vmul.f32 %v1170, %v1170
        %v1187 = vmul.f32 %v1171, %v1171
        %v1188 = vmul.f32 %v1172, %v1172
        %v1189 = vmul.f32 %v1173, %v1173
        %v1190 = vmul.f32 %v1174, %v1174
        %v1191 = vmul.f32 %v1175, %v1175
        %v1192 = vmul.f32 %v1176, %v1176
        %v1193 = vmul.f32 %v1177, %v1177
        %v1194 = vmul.f32 %v1178, %v1178
        %v1195 = vmul.f32 %v1179, %v1179
        %v1196 = vmul.f32 %v1180, %v1180
        %v1197 = vmul.f32 %v1181, %v1181
        %v1198 = vsel %vm567, %v1182, 0.0
        %1199 = vadd.xlane.f32.xlu0 %v1198
        %v1200 = vpop.xlane.xlu0 %1199
        %v1201 = vsel %vm567, %v1183, 0.0
        %1202 = vadd.xlane.f32.xlu0 %v1201
        %v1203 = vpop.xlane.xlu0 %1202
        %v1204 = vsel %vm567, %v1184, 0.0
        %1205 = vadd.xlane.f32.xlu0 %v1204
        %v1206 = vpop.xlane.xlu0 %1205
        %v1207 = vsel %vm567, %v1185, 0.0
        %1208 = vadd.xlane.f32.xlu0 %v1207
        %v1209 = vpop.xlane.xlu0 %1208
        %v1210 = vsel %vm567, %v1186, 0.0
        %1211 = vadd.xlane.f32.xlu0 %v1210
        %v1212 = vpop.xlane.xlu0 %1211
        %v1213 = vsel %vm567, %v1187, 0.0
        %1214 = vadd.xlane.f32.xlu0 %v1213
        %v1215 = vpop.xlane.xlu0 %1214
        %v1216 = vsel %vm567, %v1188, 0.0
        %1217 = vadd.xlane.f32.xlu0 %v1216
        %v1218 = vpop.xlane.xlu0 %1217
        %v1219 = vsel %vm567, %v1189, 0.0
        %1220 = vadd.xlane.f32.xlu0 %v1219
        %v1221 = vpop.xlane.xlu0 %1220
        %v1222 = vsel %vm567, %v1190, 0.0
        %1223 = vadd.xlane.f32.xlu0 %v1222
        %v1224 = vpop.xlane.xlu0 %1223
        %v1225 = vsel %vm567, %v1191, 0.0
        %1226 = vadd.xlane.f32.xlu0 %v1225
        %v1227 = vpop.xlane.xlu0 %1226
        %v1228 = vsel %vm567, %v1192, 0.0
        %1229 = vadd.xlane.f32.xlu0 %v1228
        %v1230 = vpop.xlane.xlu0 %1229
        %v1231 = vsel %vm567, %v1193, 0.0
        %1232 = vadd.xlane.f32.xlu0 %v1231
        %v1233 = vpop.xlane.xlu0 %1232
        %v1234 = vsel %vm567, %v1194, 0.0
        %1235 = vadd.xlane.f32.xlu0 %v1234
        %v1236 = vpop.xlane.xlu0 %1235
        %v1237 = vsel %vm567, %v1195, 0.0
        %1238 = vadd.xlane.f32.xlu0 %v1237
        %v1239 = vpop.xlane.xlu0 %1238
        %v1240 = vsel %vm567, %v1196, 0.0
        %1241 = vadd.xlane.f32.xlu0 %v1240
        %v1242 = vpop.xlane.xlu0 %1241
        %v1243 = vsel %vm567, %v1197, 0.0
        %1244 = vadd.xlane.f32.xlu0 %v1243
        %v1245 = vpop.xlane.xlu0 %1244
        %v1246 = vmul.f32 %v1200, %v574
        %v1247 = vmul.f32 %v1203, %v574
        %v1248 = vmul.f32 %v1206, %v574
        %v1249 = vmul.f32 %v1209, %v574
        %v1250 = vmul.f32 %v1212, %v574
        %v1251 = vmul.f32 %v1215, %v574
        %v1252 = vmul.f32 %v1218, %v574
        %v1253 = vmul.f32 %v1221, %v574
        %v1254 = vmul.f32 %v1224, %v574
        %v1255 = vmul.f32 %v1227, %v574
        %v1256 = vmul.f32 %v1230, %v574
        %v1257 = vmul.f32 %v1233, %v574
        %v1258 = vmul.f32 %v1236, %v574
        %v1259 = vmul.f32 %v1239, %v574
        %v1260 = vmul.f32 %v1242, %v574
        %v1261 = vmul.f32 %v1245, %v574
        %v1262 = vadd.f32 %v1246, 1e-05
        %v1263 = vadd.f32 %v1247, 1e-05
        %v1264 = vadd.f32 %v1248, 1e-05
        %v1265 = vadd.f32 %v1249, 1e-05
        %v1266 = vadd.f32 %v1250, 1e-05
        %v1267 = vadd.f32 %v1251, 1e-05
        %v1268 = vadd.f32 %v1252, 1e-05
        %v1269 = vadd.f32 %v1253, 1e-05
        %v1270 = vadd.f32 %v1254, 1e-05
        %v1271 = vadd.f32 %v1255, 1e-05
        %v1272 = vadd.f32 %v1256, 1e-05
        %v1273 = vadd.f32 %v1257, 1e-05
        %v1274 = vadd.f32 %v1258, 1e-05
        %v1275 = vadd.f32 %v1259, 1e-05
        %v1276 = vadd.f32 %v1260, 1e-05
        %v1277 = vadd.f32 %v1261, 1e-05
        %v1278 = vrsqrt.pop %v1262
        %v1279 = vrsqrt.pop %v1263
        %v1280 = vrsqrt.pop %v1264
        %v1281 = vrsqrt.pop %v1265
        %v1282 = vrsqrt.pop %v1266
        %v1283 = vrsqrt.pop %v1267
        %v1284 = vrsqrt.pop %v1268
        %v1285 = vrsqrt.pop %v1269
        %v1286 = vrsqrt.pop %v1270
        %v1287 = vrsqrt.pop %v1271
        %v1288 = vrsqrt.pop %v1272
        %v1289 = vrsqrt.pop %v1273
        %v1290 = vrsqrt.pop %v1274
        %v1291 = vrsqrt.pop %v1275
        %v1292 = vrsqrt.pop %v1276
        %v1293 = vrsqrt.pop %v1277
        %v1294 = vmul.f32 %v1166, %v1278
        %v1295 = vmul.f32 %v1167, %v1279
        %v1296 = vmul.f32 %v1168, %v1280
        %v1297 = vmul.f32 %v1169, %v1281
        %v1298 = vmul.f32 %v1170, %v1282
        %v1299 = vmul.f32 %v1171, %v1283
        %v1300 = vmul.f32 %v1172, %v1284
        %v1301 = vmul.f32 %v1173, %v1285
        %v1302 = vmul.f32 %v1174, %v1286
        %v1303 = vmul.f32 %v1175, %v1287
        %v1304 = vmul.f32 %v1176, %v1288
        %v1305 = vmul.f32 %v1177, %v1289
        %v1306 = vmul.f32 %v1178, %v1290
        %v1307 = vmul.f32 %v1179, %v1291
        %v1308 = vmul.f32 %v1180, %v1292
        %v1309 = vmul.f32 %v1181, %v1293
        %v1310 = vlaneseq
        %v1311 = vshrl.u32 %v1310, 7
        %v1312 = vsub.s32 7, %v1311
        %v1313 = vrot.slane %v563, %v1312
        %v1314 = vmul.f32 %v1294, %v1313
        %v1315 = vmul.f32 %v1295, %v1313
        %v1316 = vmul.f32 %v1296, %v1313
        %v1317 = vmul.f32 %v1297, %v1313
        %v1318 = vmul.f32 %v1298, %v1313
        %v1319 = vmul.f32 %v1299, %v1313
        %v1320 = vmul.f32 %v1300, %v1313
        %v1321 = vmul.f32 %v1301, %v1313
        %v1322 = vmul.f32 %v1302, %v1313
        %v1323 = vmul.f32 %v1303, %v1313
        %v1324 = vmul.f32 %v1304, %v1313
        %v1325 = vmul.f32 %v1305, %v1313
        %v1326 = vmul.f32 %v1306, %v1313
        %v1327 = vmul.f32 %v1307, %v1313
        %v1328 = vmul.f32 %v1308, %v1313
        %v1329 = vmul.f32 %v1309, %v1313
        %v1330 = vlaneseq
        %v1331 = vshrl.u32 %v1330, 7
        %v1332 = vsub.s32 0, %v1331
        %v1333 = vrot.slane %v564, %v1332
        %v1334 = vadd.f32 %v1314, %v1333
        %v1335 = vadd.f32 %v1315, %v1333
        %v1336 = vadd.f32 %v1316, %v1333
        %v1337 = vadd.f32 %v1317, %v1333
        %v1338 = vadd.f32 %v1318, %v1333
        %v1339 = vadd.f32 %v1319, %v1333
        %v1340 = vadd.f32 %v1320, %v1333
        %v1341 = vadd.f32 %v1321, %v1333
        %v1342 = vadd.f32 %v1322, %v1333
        %v1343 = vadd.f32 %v1323, %v1333
        %v1344 = vadd.f32 %v1324, %v1333
        %v1345 = vadd.f32 %v1325, %v1333
        %v1346 = vadd.f32 %v1326, %v1333
        %v1347 = vadd.f32 %v1327, %v1333
        %v1348 = vadd.f32 %v1328, %v1333
        %v1349 = vadd.f32 %v1329, %v1333
        %vm1350 = vcmp.gt.f32.partialorder %v1334, 20.0
        %vm1351 = vcmp.gt.f32.partialorder %v1335, 20.0
        %vm1352 = vcmp.gt.f32.partialorder %v1336, 20.0
        %vm1353 = vcmp.gt.f32.partialorder %v1337, 20.0
        %vm1354 = vcmp.gt.f32.partialorder %v1338, 20.0
        %vm1355 = vcmp.gt.f32.partialorder %v1339, 20.0
        %vm1356 = vcmp.gt.f32.partialorder %v1340, 20.0
        %vm1357 = vcmp.gt.f32.partialorder %v1341, 20.0
        %vm1358 = vcmp.gt.f32.partialorder %v1342, 20.0
        %vm1359 = vcmp.gt.f32.partialorder %v1343, 20.0
        %vm1360 = vcmp.gt.f32.partialorder %v1344, 20.0
        %vm1361 = vcmp.gt.f32.partialorder %v1345, 20.0
        %vm1362 = vcmp.gt.f32.partialorder %v1346, 20.0
        %vm1363 = vcmp.gt.f32.partialorder %v1347, 20.0
        %vm1364 = vcmp.gt.f32.partialorder %v1348, 20.0
        %vm1365 = vcmp.gt.f32.partialorder %v1349, 20.0
        %v1366 = vmin.f32 %v1334, 20.0
        %v1367 = vmin.f32 %v1335, 20.0
        %v1368 = vmin.f32 %v1336, 20.0
        %v1369 = vmin.f32 %v1337, 20.0
        %v1370 = vmin.f32 %v1338, 20.0
        %v1371 = vmin.f32 %v1339, 20.0
        %v1372 = vmin.f32 %v1340, 20.0
        %v1373 = vmin.f32 %v1341, 20.0
        %v1374 = vmin.f32 %v1342, 20.0
        %v1375 = vmin.f32 %v1343, 20.0
        %v1376 = vmin.f32 %v1344, 20.0
        %v1377 = vmin.f32 %v1345, 20.0
        %v1378 = vmin.f32 %v1346, 20.0
        %v1379 = vmin.f32 %v1347, 20.0
        %v1380 = vmin.f32 %v1348, 20.0
        %v1381 = vmin.f32 %v1349, 20.0
        %v1382 = vmul.f32 %v1366, 1.442695
        %v1383 = vpow.pop %v1382
        %v1384 = vmul.f32 %v1367, 1.442695
        %v1385 = vpow.pop %v1384
        %v1386 = vmul.f32 %v1368, 1.442695
        %v1387 = vpow.pop %v1386
        %v1388 = vmul.f32 %v1369, 1.442695
        %v1389 = vpow.pop %v1388
        %v1390 = vmul.f32 %v1370, 1.442695
        %v1391 = vpow.pop %v1390
        %v1392 = vmul.f32 %v1371, 1.442695
        %v1393 = vpow.pop %v1392
        %v1394 = vmul.f32 %v1372, 1.442695
        %v1395 = vpow.pop %v1394
        %v1396 = vmul.f32 %v1373, 1.442695
        %v1397 = vpow.pop %v1396
        %v1398 = vmul.f32 %v1374, 1.442695
        %v1399 = vpow.pop %v1398
        %v1400 = vmul.f32 %v1375, 1.442695
        %v1401 = vpow.pop %v1400
        %v1402 = vmul.f32 %v1376, 1.442695
        %v1403 = vpow.pop %v1402
        %v1404 = vmul.f32 %v1377, 1.442695
        %v1405 = vpow.pop %v1404
        %v1406 = vmul.f32 %v1378, 1.442695
        %v1407 = vpow.pop %v1406
        %v1408 = vmul.f32 %v1379, 1.442695
        %v1409 = vpow.pop %v1408
        %v1410 = vmul.f32 %v1380, 1.442695
        %v1411 = vpow.pop %v1410
        %v1412 = vmul.f32 %v1381, 1.442695
        %v1413 = vpow.pop %v1412
        %v1414 = vadd.f32 %v1383, 1.0
        %v1415 = vlog2.pop %v1414
        %v1416 = vmul.f32 %v1415, 0.6931472
        %v1417 = vmul.f32 -0.5, %v1383
        %v1418 = vadd.f32 %v1417, 1.0
        %v1419 = vmul.f32 %v1418, %v1383
        %v1420 = vand.u32 2147483647, %v1383
        %vm1421 = vcmp.lt.f32.partialorder %v1420, 0.0004427343
        %v1422 = vsel %vm1421, %v1419, %v1416
        %v1423 = vadd.f32 %v1385, 1.0
        %v1424 = vlog2.pop %v1423
        %v1425 = vmul.f32 %v1424, 0.6931472
        %v1426 = vmul.f32 -0.5, %v1385
        %v1427 = vadd.f32 %v1426, 1.0
        %v1428 = vmul.f32 %v1427, %v1385
        %v1429 = vand.u32 2147483647, %v1385
        %vm1430 = vcmp.lt.f32.partialorder %v1429, 0.0004427343
        %v1431 = vsel %vm1430, %v1428, %v1425
        %v1432 = vadd.f32 %v1387, 1.0
        %v1433 = vlog2.pop %v1432
        %v1434 = vmul.f32 %v1433, 0.6931472
        %v1435 = vmul.f32 -0.5, %v1387
        %v1436 = vadd.f32 %v1435, 1.0
        %v1437 = vmul.f32 %v1436, %v1387
        %v1438 = vand.u32 2147483647, %v1387
        %vm1439 = vcmp.lt.f32.partialorder %v1438, 0.0004427343
        %v1440 = vsel %vm1439, %v1437, %v1434
        %v1441 = vadd.f32 %v1389, 1.0
        %v1442 = vlog2.pop %v1441
        %v1443 = vmul.f32 %v1442, 0.6931472
        %v1444 = vmul.f32 -0.5, %v1389
        %v1445 = vadd.f32 %v1444, 1.0
        %v1446 = vmul.f32 %v1445, %v1389
        %v1447 = vand.u32 2147483647, %v1389
        %vm1448 = vcmp.lt.f32.partialorder %v1447, 0.0004427343
        %v1449 = vsel %vm1448, %v1446, %v1443
        %v1450 = vadd.f32 %v1391, 1.0
        %v1451 = vlog2.pop %v1450
        %v1452 = vmul.f32 %v1451, 0.6931472
        %v1453 = vmul.f32 -0.5, %v1391
        %v1454 = vadd.f32 %v1453, 1.0
        %v1455 = vmul.f32 %v1454, %v1391
        %v1456 = vand.u32 2147483647, %v1391
        %vm1457 = vcmp.lt.f32.partialorder %v1456, 0.0004427343
        %v1458 = vsel %vm1457, %v1455, %v1452
        %v1459 = vadd.f32 %v1393, 1.0
        %v1460 = vlog2.pop %v1459
        %v1461 = vmul.f32 %v1460, 0.6931472
        %v1462 = vmul.f32 -0.5, %v1393
        %v1463 = vadd.f32 %v1462, 1.0
        %v1464 = vmul.f32 %v1463, %v1393
        %v1465 = vand.u32 2147483647, %v1393
        %vm1466 = vcmp.lt.f32.partialorder %v1465, 0.0004427343
        %v1467 = vsel %vm1466, %v1464, %v1461
        %v1468 = vadd.f32 %v1395, 1.0
        %v1469 = vlog2.pop %v1468
        %v1470 = vmul.f32 %v1469, 0.6931472
        %v1471 = vmul.f32 -0.5, %v1395
        %v1472 = vadd.f32 %v1471, 1.0
        %v1473 = vmul.f32 %v1472, %v1395
        %v1474 = vand.u32 2147483647, %v1395
        %vm1475 = vcmp.lt.f32.partialorder %v1474, 0.0004427343
        %v1476 = vsel %vm1475, %v1473, %v1470
        %v1477 = vadd.f32 %v1397, 1.0
        %v1478 = vlog2.pop %v1477
        %v1479 = vmul.f32 %v1478, 0.6931472
        %v1480 = vmul.f32 -0.5, %v1397
        %v1481 = vadd.f32 %v1480, 1.0
        %v1482 = vmul.f32 %v1481, %v1397
        %v1483 = vand.u32 2147483647, %v1397
        %vm1484 = vcmp.lt.f32.partialorder %v1483, 0.0004427343
        %v1485 = vsel %vm1484, %v1482, %v1479
        %v1486 = vadd.f32 %v1399, 1.0
        %v1487 = vlog2.pop %v1486
        %v1488 = vmul.f32 %v1487, 0.6931472
        %v1489 = vmul.f32 -0.5, %v1399
        %v1490 = vadd.f32 %v1489, 1.0
        %v1491 = vmul.f32 %v1490, %v1399
        %v1492 = vand.u32 2147483647, %v1399
        %vm1493 = vcmp.lt.f32.partialorder %v1492, 0.0004427343
        %v1494 = vsel %vm1493, %v1491, %v1488
        %v1495 = vadd.f32 %v1401, 1.0
        %v1496 = vlog2.pop %v1495
        %v1497 = vmul.f32 %v1496, 0.6931472
        %v1498 = vmul.f32 -0.5, %v1401
        %v1499 = vadd.f32 %v1498, 1.0
        %v1500 = vmul.f32 %v1499, %v1401
        %v1501 = vand.u32 2147483647, %v1401
        %vm1502 = vcmp.lt.f32.partialorder %v1501, 0.0004427343
        %v1503 = vsel %vm1502, %v1500, %v1497
        %v1504 = vadd.f32 %v1403, 1.0
        %v1505 = vlog2.pop %v1504
        %v1506 = vmul.f32 %v1505, 0.6931472
        %v1507 = vmul.f32 -0.5, %v1403
        %v1508 = vadd.f32 %v1507, 1.0
        %v1509 = vmul.f32 %v1508, %v1403
        %v1510 = vand.u32 2147483647, %v1403
        %vm1511 = vcmp.lt.f32.partialorder %v1510, 0.0004427343
        %v1512 = vsel %vm1511, %v1509, %v1506
        %v1513 = vadd.f32 %v1405, 1.0
        %v1514 = vlog2.pop %v1513
        %v1515 = vmul.f32 %v1514, 0.6931472
        %v1516 = vmul.f32 -0.5, %v1405
        %v1517 = vadd.f32 %v1516, 1.0
        %v1518 = vmul.f32 %v1517, %v1405
        %v1519 = vand.u32 2147483647, %v1405
        %vm1520 = vcmp.lt.f32.partialorder %v1519, 0.0004427343
        %v1521 = vsel %vm1520, %v1518, %v1515
        %v1522 = vadd.f32 %v1407, 1.0
        %v1523 = vlog2.pop %v1522
        %v1524 = vmul.f32 %v1523, 0.6931472
        %v1525 = vmul.f32 -0.5, %v1407
        %v1526 = vadd.f32 %v1525, 1.0
        %v1527 = vmul.f32 %v1526, %v1407
        %v1528 = vand.u32 2147483647, %v1407
        %vm1529 = vcmp.lt.f32.partialorder %v1528, 0.0004427343
        %v1530 = vsel %vm1529, %v1527, %v1524
        %v1531 = vadd.f32 %v1409, 1.0
        %v1532 = vlog2.pop %v1531
        %v1533 = vmul.f32 %v1532, 0.6931472
        %v1534 = vmul.f32 -0.5, %v1409
        %v1535 = vadd.f32 %v1534, 1.0
        %v1536 = vmul.f32 %v1535, %v1409
        %v1537 = vand.u32 2147483647, %v1409
        %vm1538 = vcmp.lt.f32.partialorder %v1537, 0.0004427343
        %v1539 = vsel %vm1538, %v1536, %v1533
        %v1540 = vadd.f32 %v1411, 1.0
        %v1541 = vlog2.pop %v1540
        %v1542 = vmul.f32 %v1541, 0.6931472
        %v1543 = vmul.f32 -0.5, %v1411
        %v1544 = vadd.f32 %v1543, 1.0
        %v1545 = vmul.f32 %v1544, %v1411
        %v1546 = vand.u32 2147483647, %v1411
        %vm1547 = vcmp.lt.f32.partialorder %v1546, 0.0004427343
        %v1548 = vsel %vm1547, %v1545, %v1542
        %v1549 = vadd.f32 %v1413, 1.0
        %v1550 = vlog2.pop %v1549
        %v1551 = vmul.f32 %v1550, 0.6931472
        %v1552 = vmul.f32 -0.5, %v1413
        %v1553 = vadd.f32 %v1552, 1.0
        %v1554 = vmul.f32 %v1553, %v1413
        %v1555 = vand.u32 2147483647, %v1413
        %vm1556 = vcmp.lt.f32.partialorder %v1555, 0.0004427343
        %v1557 = vsel %vm1556, %v1554, %v1551
        %v1558 = vsel %vm1350, %v1334, %v1422
        %v1559 = vsel %vm1351, %v1335, %v1431
        %v1560 = vsel %vm1352, %v1336, %v1440
        %v1561 = vsel %vm1353, %v1337, %v1449
        %v1562 = vsel %vm1354, %v1338, %v1458
        %v1563 = vsel %vm1355, %v1339, %v1467
        %v1564 = vsel %vm1356, %v1340, %v1476
        %v1565 = vsel %vm1357, %v1341, %v1485
        %v1566 = vsel %vm1358, %v1342, %v1494
        %v1567 = vsel %vm1359, %v1343, %v1503
        %v1568 = vsel %vm1360, %v1344, %v1512
        %v1569 = vsel %vm1361, %v1345, %v1521
        %v1570 = vsel %vm1362, %v1346, %v1530
        %v1571 = vsel %vm1363, %v1347, %v1539
        %v1572 = vsel %vm1364, %v1348, %v1548
        %v1573 = vsel %vm1365, %v1349, %v1557
        %v1574 = vtanh.pop %v1558
        %v1575 = vtanh.pop %v1559
        %v1576 = vtanh.pop %v1560
        %v1577 = vtanh.pop %v1561
        %v1578 = vtanh.pop %v1562
        %v1579 = vtanh.pop %v1563
        %v1580 = vtanh.pop %v1564
        %v1581 = vtanh.pop %v1565
        %v1582 = vtanh.pop %v1566
        %v1583 = vtanh.pop %v1567
        %v1584 = vtanh.pop %v1568
        %v1585 = vtanh.pop %v1569
        %v1586 = vtanh.pop %v1570
        %v1587 = vtanh.pop %v1571
        %v1588 = vtanh.pop %v1572
        %v1589 = vtanh.pop %v1573
        %v1590 = vmul.f32 %v1334, %v1574
        %v1591 = vmul.f32 %v1335, %v1575
        %v1592 = vmul.f32 %v1336, %v1576
        %v1593 = vmul.f32 %v1337, %v1577
        %v1594 = vmul.f32 %v1338, %v1578
        %v1595 = vmul.f32 %v1339, %v1579
        %v1596 = vmul.f32 %v1340, %v1580
        %v1597 = vmul.f32 %v1341, %v1581
        %v1598 = vmul.f32 %v1342, %v1582
        %v1599 = vmul.f32 %v1343, %v1583
        %v1600 = vmul.f32 %v1344, %v1584
        %v1601 = vmul.f32 %v1345, %v1585
        %v1602 = vmul.f32 %v1346, %v1586
        %v1603 = vmul.f32 %v1347, %v1587
        %v1604 = vmul.f32 %v1348, %v1588
        %v1605 = vmul.f32 %v1349, %v1589
        %1622 = vrot.lane.b32.xlu0 %v1024, 96
        %v1623 = vpop.permute.xlu0 %1622
        %1624 = vrot.lane.b32.xlu0 %v1029, 96
        %v1625 = vpop.permute.xlu0 %1624
        %1626 = vrot.lane.b32.xlu0 %v1034, 96
        %v1627 = vpop.permute.xlu0 %1626
        %1628 = vrot.lane.b32.xlu0 %v1039, 96
        %v1629 = vpop.permute.xlu0 %1628
        %1630 = vrot.lane.b32.xlu0 %v1044, 96
        %v1631 = vpop.permute.xlu0 %1630
        %1632 = vrot.lane.b32.xlu0 %v1049, 96
        %v1633 = vpop.permute.xlu0 %1632
        %1634 = vrot.lane.b32.xlu0 %v1054, 96
        %v1635 = vpop.permute.xlu0 %1634
        %1636 = vrot.lane.b32.xlu0 %v1059, 96
        %v1637 = vpop.permute.xlu0 %1636
        %1638 = vrot.lane.b32.xlu0 %v1064, 96
        %v1639 = vpop.permute.xlu0 %1638
        %1640 = vrot.lane.b32.xlu0 %v1069, 96
        %v1641 = vpop.permute.xlu0 %1640
        %1642 = vrot.lane.b32.xlu0 %v1074, 96
        %v1643 = vpop.permute.xlu0 %1642
        %1644 = vrot.lane.b32.xlu0 %v1079, 96
        %v1645 = vpop.permute.xlu0 %1644
        %1646 = vrot.lane.b32.xlu0 %v1084, 96
        %v1647 = vpop.permute.xlu0 %1646
        %1648 = vrot.lane.b32.xlu0 %v1089, 96
        %v1649 = vpop.permute.xlu0 %1648
        %1650 = vrot.lane.b32.xlu0 %v1094, 96
        %v1651 = vpop.permute.xlu0 %1650
        %1652 = vrot.lane.b32.xlu0 %v1099, 96
        %v1653 = vpop.permute.xlu0 %1652
        %v1670 = vsel %vm567, %v1623, 0.0
        %1671 = vadd.xlane.f32.xlu0 %v1670
        %v1672 = vpop.xlane.xlu0 %1671
        %v1673 = vsel %vm567, %v1625, 0.0
        %1674 = vadd.xlane.f32.xlu0 %v1673
        %v1675 = vpop.xlane.xlu0 %1674
        %v1676 = vsel %vm567, %v1627, 0.0
        %1677 = vadd.xlane.f32.xlu0 %v1676
        %v1678 = vpop.xlane.xlu0 %1677
        %v1679 = vsel %vm567, %v1629, 0.0
        %1680 = vadd.xlane.f32.xlu0 %v1679
        %v1681 = vpop.xlane.xlu0 %1680
        %v1682 = vsel %vm567, %v1631, 0.0
        %1683 = vadd.xlane.f32.xlu0 %v1682
        %v1684 = vpop.xlane.xlu0 %1683
        %v1685 = vsel %vm567, %v1633, 0.0
        %1686 = vadd.xlane.f32.xlu0 %v1685
        %v1687 = vpop.xlane.xlu0 %1686
        %v1688 = vsel %vm567, %v1635, 0.0
        %1689 = vadd.xlane.f32.xlu0 %v1688
        %v1690 = vpop.xlane.xlu0 %1689
        %v1691 = vsel %vm567, %v1637, 0.0
        %1692 = vadd.xlane.f32.xlu0 %v1691
        %v1693 = vpop.xlane.xlu0 %1692
        %v1694 = vsel %vm567, %v1639, 0.0
        %1695 = vadd.xlane.f32.xlu0 %v1694
        %v1696 = vpop.xlane.xlu0 %1695
        %v1697 = vsel %vm567, %v1641, 0.0
        %1698 = vadd.xlane.f32.xlu0 %v1697
        %v1699 = vpop.xlane.xlu0 %1698
        %v1700 = vsel %vm567, %v1643, 0.0
        %1701 = vadd.xlane.f32.xlu0 %v1700
        %v1702 = vpop.xlane.xlu0 %1701
        %v1703 = vsel %vm567, %v1645, 0.0
        %1704 = vadd.xlane.f32.xlu0 %v1703
        %v1705 = vpop.xlane.xlu0 %1704
        %v1706 = vsel %vm567, %v1647, 0.0
        %1707 = vadd.xlane.f32.xlu0 %v1706
        %v1708 = vpop.xlane.xlu0 %1707
        %v1709 = vsel %vm567, %v1649, 0.0
        %1710 = vadd.xlane.f32.xlu0 %v1709
        %v1711 = vpop.xlane.xlu0 %1710
        %v1712 = vsel %vm567, %v1651, 0.0
        %1713 = vadd.xlane.f32.xlu0 %v1712
        %v1714 = vpop.xlane.xlu0 %1713
        %v1715 = vsel %vm567, %v1653, 0.0
        %1716 = vadd.xlane.f32.xlu0 %v1715
        %v1717 = vpop.xlane.xlu0 %1716
        %v1718 = vmul.f32 %v1672, %v574
        %v1719 = vmul.f32 %v1675, %v574
        %v1720 = vmul.f32 %v1678, %v574
        %v1721 = vmul.f32 %v1681, %v574
        %v1722 = vmul.f32 %v1684, %v574
        %v1723 = vmul.f32 %v1687, %v574
        %v1724 = vmul.f32 %v1690, %v574
        %v1725 = vmul.f32 %v1693, %v574
        %v1726 = vmul.f32 %v1696, %v574
        %v1727 = vmul.f32 %v1699, %v574
        %v1728 = vmul.f32 %v1702, %v574
        %v1729 = vmul.f32 %v1705, %v574
        %v1730 = vmul.f32 %v1708, %v574
        %v1731 = vmul.f32 %v1711, %v574
        %v1732 = vmul.f32 %v1714, %v574
        %v1733 = vmul.f32 %v1717, %v574
        %v1734 = vsub.f32 %v1024, %v1718
        %v1735 = vsub.f32 %v1029, %v1719
        %v1736 = vsub.f32 %v1034, %v1720
        %v1737 = vsub.f32 %v1039, %v1721
        %v1738 = vsub.f32 %v1044, %v1722
        %v1739 = vsub.f32 %v1049, %v1723
        %v1740 = vsub.f32 %v1054, %v1724
        %v1741 = vsub.f32 %v1059, %v1725
        %v1742 = vsub.f32 %v1064, %v1726
        %v1743 = vsub.f32 %v1069, %v1727
        %v1744 = vsub.f32 %v1074, %v1728
        %v1745 = vsub.f32 %v1079, %v1729
        %v1746 = vsub.f32 %v1084, %v1730
        %v1747 = vsub.f32 %v1089, %v1731
        %v1748 = vsub.f32 %v1094, %v1732
        %v1749 = vsub.f32 %v1099, %v1733
        %v1750 = vmul.f32 %v1734, %v1734
        %v1751 = vmul.f32 %v1735, %v1735
        %v1752 = vmul.f32 %v1736, %v1736
        %v1753 = vmul.f32 %v1737, %v1737
        %v1754 = vmul.f32 %v1738, %v1738
        %v1755 = vmul.f32 %v1739, %v1739
        %v1756 = vmul.f32 %v1740, %v1740
        %v1757 = vmul.f32 %v1741, %v1741
        %v1758 = vmul.f32 %v1742, %v1742
        %v1759 = vmul.f32 %v1743, %v1743
        %v1760 = vmul.f32 %v1744, %v1744
        %v1761 = vmul.f32 %v1745, %v1745
        %v1762 = vmul.f32 %v1746, %v1746
        %v1763 = vmul.f32 %v1747, %v1747
        %v1764 = vmul.f32 %v1748, %v1748
        %v1765 = vmul.f32 %v1749, %v1749
        %1782 = vrot.lane.b32.xlu0 %v1750, 96
        %v1783 = vpop.permute.xlu0 %1782
        %1784 = vrot.lane.b32.xlu0 %v1751, 96
        %v1785 = vpop.permute.xlu0 %1784
        %1786 = vrot.lane.b32.xlu0 %v1752, 96
        %v1787 = vpop.permute.xlu0 %1786
        %1788 = vrot.lane.b32.xlu0 %v1753, 96
        %v1789 = vpop.permute.xlu0 %1788
        %1790 = vrot.lane.b32.xlu0 %v1754, 96
        %v1791 = vpop.permute.xlu0 %1790
        %1792 = vrot.lane.b32.xlu0 %v1755, 96
        %v1793 = vpop.permute.xlu0 %1792
        %1794 = vrot.lane.b32.xlu0 %v1756, 96
        %v1795 = vpop.permute.xlu0 %1794
        %1796 = vrot.lane.b32.xlu0 %v1757, 96
        %v1797 = vpop.permute.xlu0 %1796
        %1798 = vrot.lane.b32.xlu0 %v1758, 96
        %v1799 = vpop.permute.xlu0 %1798
        %1800 = vrot.lane.b32.xlu0 %v1759, 96
        %v1801 = vpop.permute.xlu0 %1800
        %1802 = vrot.lane.b32.xlu0 %v1760, 96
        %v1803 = vpop.permute.xlu0 %1802
        %1804 = vrot.lane.b32.xlu0 %v1761, 96
        %v1805 = vpop.permute.xlu0 %1804
        %1806 = vrot.lane.b32.xlu0 %v1762, 96
        %v1807 = vpop.permute.xlu0 %1806
        %1808 = vrot.lane.b32.xlu0 %v1763, 96
        %v1809 = vpop.permute.xlu0 %1808
        %1810 = vrot.lane.b32.xlu0 %v1764, 96
        %v1811 = vpop.permute.xlu0 %1810
        %1812 = vrot.lane.b32.xlu0 %v1765, 96
        %v1813 = vpop.permute.xlu0 %1812
        %v1830 = vsel %vm567, %v1783, 0.0
        %1831 = vadd.xlane.f32.xlu0 %v1830
        %v1832 = vpop.xlane.xlu0 %1831
        %v1833 = vsel %vm567, %v1785, 0.0
        %1834 = vadd.xlane.f32.xlu0 %v1833
        %v1835 = vpop.xlane.xlu0 %1834
        %v1836 = vsel %vm567, %v1787, 0.0
        %1837 = vadd.xlane.f32.xlu0 %v1836
        %v1838 = vpop.xlane.xlu0 %1837
        %v1839 = vsel %vm567, %v1789, 0.0
        %1840 = vadd.xlane.f32.xlu0 %v1839
        %v1841 = vpop.xlane.xlu0 %1840
        %v1842 = vsel %vm567, %v1791, 0.0
        %1843 = vadd.xlane.f32.xlu0 %v1842
        %v1844 = vpop.xlane.xlu0 %1843
        %v1845 = vsel %vm567, %v1793, 0.0
        %1846 = vadd.xlane.f32.xlu0 %v1845
        %v1847 = vpop.xlane.xlu0 %1846
        %v1848 = vsel %vm567, %v1795, 0.0
        %1849 = vadd.xlane.f32.xlu0 %v1848
        %v1850 = vpop.xlane.xlu0 %1849
        %v1851 = vsel %vm567, %v1797, 0.0
        %1852 = vadd.xlane.f32.xlu0 %v1851
        %v1853 = vpop.xlane.xlu0 %1852
        %v1854 = vsel %vm567, %v1799, 0.0
        %1855 = vadd.xlane.f32.xlu0 %v1854
        %v1856 = vpop.xlane.xlu0 %1855
        %v1857 = vsel %vm567, %v1801, 0.0
        %1858 = vadd.xlane.f32.xlu0 %v1857
        %v1859 = vpop.xlane.xlu0 %1858
        %v1860 = vsel %vm567, %v1803, 0.0
        %1861 = vadd.xlane.f32.xlu0 %v1860
        %v1862 = vpop.xlane.xlu0 %1861
        %v1863 = vsel %vm567, %v1805, 0.0
        %1864 = vadd.xlane.f32.xlu0 %v1863
        %v1865 = vpop.xlane.xlu0 %1864
        %v1866 = vsel %vm567, %v1807, 0.0
        %1867 = vadd.xlane.f32.xlu0 %v1866
        %v1868 = vpop.xlane.xlu0 %1867
        %v1869 = vsel %vm567, %v1809, 0.0
        %1870 = vadd.xlane.f32.xlu0 %v1869
        %v1871 = vpop.xlane.xlu0 %1870
        %v1872 = vsel %vm567, %v1811, 0.0
        %1873 = vadd.xlane.f32.xlu0 %v1872
        %v1874 = vpop.xlane.xlu0 %1873
        %v1875 = vsel %vm567, %v1813, 0.0
        %1876 = vadd.xlane.f32.xlu0 %v1875
        %v1877 = vpop.xlane.xlu0 %1876
        %v1878 = vmul.f32 %v1832, %v574
        %v1879 = vmul.f32 %v1835, %v574
        %v1880 = vmul.f32 %v1838, %v574
        %v1881 = vmul.f32 %v1841, %v574
        %v1882 = vmul.f32 %v1844, %v574
        %v1883 = vmul.f32 %v1847, %v574
        %v1884 = vmul.f32 %v1850, %v574
        %v1885 = vmul.f32 %v1853, %v574
        %v1886 = vmul.f32 %v1856, %v574
        %v1887 = vmul.f32 %v1859, %v574
        %v1888 = vmul.f32 %v1862, %v574
        %v1889 = vmul.f32 %v1865, %v574
        %v1890 = vmul.f32 %v1868, %v574
        %v1891 = vmul.f32 %v1871, %v574
        %v1892 = vmul.f32 %v1874, %v574
        %v1893 = vmul.f32 %v1877, %v574
        %v1894 = vadd.f32 %v1878, 1e-05
        %v1895 = vadd.f32 %v1879, 1e-05
        %v1896 = vadd.f32 %v1880, 1e-05
        %v1897 = vadd.f32 %v1881, 1e-05
        %v1898 = vadd.f32 %v1882, 1e-05
        %v1899 = vadd.f32 %v1883, 1e-05
        %v1900 = vadd.f32 %v1884, 1e-05
        %v1901 = vadd.f32 %v1885, 1e-05
        %v1902 = vadd.f32 %v1886, 1e-05
        %v1903 = vadd.f32 %v1887, 1e-05
        %v1904 = vadd.f32 %v1888, 1e-05
        %v1905 = vadd.f32 %v1889, 1e-05
        %v1906 = vadd.f32 %v1890, 1e-05
        %v1907 = vadd.f32 %v1891, 1e-05
        %v1908 = vadd.f32 %v1892, 1e-05
        %v1909 = vadd.f32 %v1893, 1e-05
        %v1910 = vrsqrt.pop %v1894
        %v1911 = vrsqrt.pop %v1895
        %v1912 = vrsqrt.pop %v1896
        %v1913 = vrsqrt.pop %v1897
        %v1914 = vrsqrt.pop %v1898
        %v1915 = vrsqrt.pop %v1899
        %v1916 = vrsqrt.pop %v1900
        %v1917 = vrsqrt.pop %v1901
        %v1918 = vrsqrt.pop %v1902
        %v1919 = vrsqrt.pop %v1903
        %v1920 = vrsqrt.pop %v1904
        %v1921 = vrsqrt.pop %v1905
        %v1922 = vrsqrt.pop %v1906
        %v1923 = vrsqrt.pop %v1907
        %v1924 = vrsqrt.pop %v1908
        %v1925 = vrsqrt.pop %v1909
        %v1926 = vmul.f32 %v1734, %v1910
        %v1927 = vmul.f32 %v1735, %v1911
        %v1928 = vmul.f32 %v1736, %v1912
        %v1929 = vmul.f32 %v1737, %v1913
        %v1930 = vmul.f32 %v1738, %v1914
        %v1931 = vmul.f32 %v1739, %v1915
        %v1932 = vmul.f32 %v1740, %v1916
        %v1933 = vmul.f32 %v1741, %v1917
        %v1934 = vmul.f32 %v1742, %v1918
        %v1935 = vmul.f32 %v1743, %v1919
        %v1936 = vmul.f32 %v1744, %v1920
        %v1937 = vmul.f32 %v1745, %v1921
        %v1938 = vmul.f32 %v1746, %v1922
        %v1939 = vmul.f32 %v1747, %v1923
        %v1940 = vmul.f32 %v1748, %v1924
        %v1941 = vmul.f32 %v1749, %v1925
        %v1942 = vlaneseq
        %v1943 = vshrl.u32 %v1942, 7
        %v1944 = vsub.s32 1, %v1943
        %v1945 = vrot.slane %v564, %v1944
        %1947 = vrot.lane.b32.xlu0 %v1945, 32
        %v1948 = vpop.permute.xlu0 %1947
        %v1950 = vmul.f32 %v1926, %v1948
        %v1951 = vmul.f32 %v1927, %v1948
        %v1952 = vmul.f32 %v1928, %v1948
        %v1953 = vmul.f32 %v1929, %v1948
        %v1954 = vmul.f32 %v1930, %v1948
        %v1955 = vmul.f32 %v1931, %v1948
        %v1956 = vmul.f32 %v1932, %v1948
        %v1957 = vmul.f32 %v1933, %v1948
        %v1958 = vmul.f32 %v1934, %v1948
        %v1959 = vmul.f32 %v1935, %v1948
        %v1960 = vmul.f32 %v1936, %v1948
        %v1961 = vmul.f32 %v1937, %v1948
        %v1962 = vmul.f32 %v1938, %v1948
        %v1963 = vmul.f32 %v1939, %v1948
        %v1964 = vmul.f32 %v1940, %v1948
        %v1965 = vmul.f32 %v1941, %v1948
        %v1966 = vlaneseq
        %v1967 = vshrl.u32 %v1966, 7
        %v1968 = vsub.s32 2, %v1967
        %v1969 = vrot.slane %v564, %v1968
        %1971 = vrot.lane.b32.xlu0 %v1969, 32
        %v1972 = vpop.permute.xlu0 %1971
        %v1974 = vadd.f32 %v1950, %v1972
        %v1975 = vadd.f32 %v1951, %v1972
        %v1976 = vadd.f32 %v1952, %v1972
        %v1977 = vadd.f32 %v1953, %v1972
        %v1978 = vadd.f32 %v1954, %v1972
        %v1979 = vadd.f32 %v1955, %v1972
        %v1980 = vadd.f32 %v1956, %v1972
        %v1981 = vadd.f32 %v1957, %v1972
        %v1982 = vadd.f32 %v1958, %v1972
        %v1983 = vadd.f32 %v1959, %v1972
        %v1984 = vadd.f32 %v1960, %v1972
        %v1985 = vadd.f32 %v1961, %v1972
        %v1986 = vadd.f32 %v1962, %v1972
        %v1987 = vadd.f32 %v1963, %v1972
        %v1988 = vadd.f32 %v1964, %v1972
        %v1989 = vadd.f32 %v1965, %v1972
        %vm1990 = vcmp.gt.f32.partialorder %v1974, 20.0
        %vm1991 = vcmp.gt.f32.partialorder %v1975, 20.0
        %vm1992 = vcmp.gt.f32.partialorder %v1976, 20.0
        %vm1993 = vcmp.gt.f32.partialorder %v1977, 20.0
        %vm1994 = vcmp.gt.f32.partialorder %v1978, 20.0
        %vm1995 = vcmp.gt.f32.partialorder %v1979, 20.0
        %vm1996 = vcmp.gt.f32.partialorder %v1980, 20.0
        %vm1997 = vcmp.gt.f32.partialorder %v1981, 20.0
        %vm1998 = vcmp.gt.f32.partialorder %v1982, 20.0
        %vm1999 = vcmp.gt.f32.partialorder %v1983, 20.0
        %vm2000 = vcmp.gt.f32.partialorder %v1984, 20.0
        %vm2001 = vcmp.gt.f32.partialorder %v1985, 20.0
        %vm2002 = vcmp.gt.f32.partialorder %v1986, 20.0
        %vm2003 = vcmp.gt.f32.partialorder %v1987, 20.0
        %vm2004 = vcmp.gt.f32.partialorder %v1988, 20.0
        %vm2005 = vcmp.gt.f32.partialorder %v1989, 20.0
        %v2006 = vmin.f32 %v1974, 20.0
        %v2007 = vmin.f32 %v1975, 20.0
        %v2008 = vmin.f32 %v1976, 20.0
        %v2009 = vmin.f32 %v1977, 20.0
        %v2010 = vmin.f32 %v1978, 20.0
        %v2011 = vmin.f32 %v1979, 20.0
        %v2012 = vmin.f32 %v1980, 20.0
        %v2013 = vmin.f32 %v1981, 20.0
        %v2014 = vmin.f32 %v1982, 20.0
        %v2015 = vmin.f32 %v1983, 20.0
        %v2016 = vmin.f32 %v1984, 20.0
        %v2017 = vmin.f32 %v1985, 20.0
        %v2018 = vmin.f32 %v1986, 20.0
        %v2019 = vmin.f32 %v1987, 20.0
        %v2020 = vmin.f32 %v1988, 20.0
        %v2021 = vmin.f32 %v1989, 20.0
        %v2022 = vmul.f32 %v2006, 1.442695
        %v2023 = vpow.pop %v2022
        %v2024 = vmul.f32 %v2007, 1.442695
        %v2025 = vpow.pop %v2024
        %v2026 = vmul.f32 %v2008, 1.442695
        %v2027 = vpow.pop %v2026
        %v2028 = vmul.f32 %v2009, 1.442695
        %v2029 = vpow.pop %v2028
        %v2030 = vmul.f32 %v2010, 1.442695
        %v2031 = vpow.pop %v2030
        %v2032 = vmul.f32 %v2011, 1.442695
        %v2033 = vpow.pop %v2032
        %v2034 = vmul.f32 %v2012, 1.442695
        %v2035 = vpow.pop %v2034
        %v2036 = vmul.f32 %v2013, 1.442695
        %v2037 = vpow.pop %v2036
        %v2038 = vmul.f32 %v2014, 1.442695
        %v2039 = vpow.pop %v2038
        %v2040 = vmul.f32 %v2015, 1.442695
        %v2041 = vpow.pop %v2040
        %v2042 = vmul.f32 %v2016, 1.442695
        %v2043 = vpow.pop %v2042
        %v2044 = vmul.f32 %v2017, 1.442695
        %v2045 = vpow.pop %v2044
        %v2046 = vmul.f32 %v2018, 1.442695
        %v2047 = vpow.pop %v2046
        %v2048 = vmul.f32 %v2019, 1.442695
        %v2049 = vpow.pop %v2048
        %v2050 = vmul.f32 %v2020, 1.442695
        %v2051 = vpow.pop %v2050
        %v2052 = vmul.f32 %v2021, 1.442695
        %v2053 = vpow.pop %v2052
        %v2054 = vadd.f32 %v2023, 1.0
        %v2055 = vlog2.pop %v2054
        %v2056 = vmul.f32 %v2055, 0.6931472
        %v2057 = vmul.f32 -0.5, %v2023
        %v2058 = vadd.f32 %v2057, 1.0
        %v2059 = vmul.f32 %v2058, %v2023
        %v2060 = vand.u32 2147483647, %v2023
        %vm2061 = vcmp.lt.f32.partialorder %v2060, 0.0004427343
        %v2062 = vsel %vm2061, %v2059, %v2056
        %v2063 = vadd.f32 %v2025, 1.0
        %v2064 = vlog2.pop %v2063
        %v2065 = vmul.f32 %v2064, 0.6931472
        %v2066 = vmul.f32 -0.5, %v2025
        %v2067 = vadd.f32 %v2066, 1.0
        %v2068 = vmul.f32 %v2067, %v2025
        %v2069 = vand.u32 2147483647, %v2025
        %vm2070 = vcmp.lt.f32.partialorder %v2069, 0.0004427343
        %v2071 = vsel %vm2070, %v2068, %v2065
        %v2072 = vadd.f32 %v2027, 1.0
        %v2073 = vlog2.pop %v2072
        %v2074 = vmul.f32 %v2073, 0.6931472
        %v2075 = vmul.f32 -0.5, %v2027
        %v2076 = vadd.f32 %v2075, 1.0
        %v2077 = vmul.f32 %v2076, %v2027
        %v2078 = vand.u32 2147483647, %v2027
        %vm2079 = vcmp.lt.f32.partialorder %v2078, 0.0004427343
        %v2080 = vsel %vm2079, %v2077, %v2074
        %v2081 = vadd.f32 %v2029, 1.0
        %v2082 = vlog2.pop %v2081
        %v2083 = vmul.f32 %v2082, 0.6931472
        %v2084 = vmul.f32 -0.5, %v2029
        %v2085 = vadd.f32 %v2084, 1.0
        %v2086 = vmul.f32 %v2085, %v2029
        %v2087 = vand.u32 2147483647, %v2029
        %vm2088 = vcmp.lt.f32.partialorder %v2087, 0.0004427343
        %v2089 = vsel %vm2088, %v2086, %v2083
        %v2090 = vadd.f32 %v2031, 1.0
        %v2091 = vlog2.pop %v2090
        %v2092 = vmul.f32 %v2091, 0.6931472
        %v2093 = vmul.f32 -0.5, %v2031
        %v2094 = vadd.f32 %v2093, 1.0
        %v2095 = vmul.f32 %v2094, %v2031
        %v2096 = vand.u32 2147483647, %v2031
        %vm2097 = vcmp.lt.f32.partialorder %v2096, 0.0004427343
        %v2098 = vsel %vm2097, %v2095, %v2092
        %v2099 = vadd.f32 %v2033, 1.0
        %v2100 = vlog2.pop %v2099
        %v2101 = vmul.f32 %v2100, 0.6931472
        %v2102 = vmul.f32 -0.5, %v2033
        %v2103 = vadd.f32 %v2102, 1.0
        %v2104 = vmul.f32 %v2103, %v2033
        %v2105 = vand.u32 2147483647, %v2033
        %vm2106 = vcmp.lt.f32.partialorder %v2105, 0.0004427343
        %v2107 = vsel %vm2106, %v2104, %v2101
        %v2108 = vadd.f32 %v2035, 1.0
        %v2109 = vlog2.pop %v2108
        %v2110 = vmul.f32 %v2109, 0.6931472
        %v2111 = vmul.f32 -0.5, %v2035
        %v2112 = vadd.f32 %v2111, 1.0
        %v2113 = vmul.f32 %v2112, %v2035
        %v2114 = vand.u32 2147483647, %v2035
        %vm2115 = vcmp.lt.f32.partialorder %v2114, 0.0004427343
        %v2116 = vsel %vm2115, %v2113, %v2110
        %v2117 = vadd.f32 %v2037, 1.0
        %v2118 = vlog2.pop %v2117
        %v2119 = vmul.f32 %v2118, 0.6931472
        %v2120 = vmul.f32 -0.5, %v2037
        %v2121 = vadd.f32 %v2120, 1.0
        %v2122 = vmul.f32 %v2121, %v2037
        %v2123 = vand.u32 2147483647, %v2037
        %vm2124 = vcmp.lt.f32.partialorder %v2123, 0.0004427343
        %v2125 = vsel %vm2124, %v2122, %v2119
        %v2126 = vadd.f32 %v2039, 1.0
        %v2127 = vlog2.pop %v2126
        %v2128 = vmul.f32 %v2127, 0.6931472
        %v2129 = vmul.f32 -0.5, %v2039
        %v2130 = vadd.f32 %v2129, 1.0
        %v2131 = vmul.f32 %v2130, %v2039
        %v2132 = vand.u32 2147483647, %v2039
        %vm2133 = vcmp.lt.f32.partialorder %v2132, 0.0004427343
        %v2134 = vsel %vm2133, %v2131, %v2128
        %v2135 = vadd.f32 %v2041, 1.0
        %v2136 = vlog2.pop %v2135
        %v2137 = vmul.f32 %v2136, 0.6931472
        %v2138 = vmul.f32 -0.5, %v2041
        %v2139 = vadd.f32 %v2138, 1.0
        %v2140 = vmul.f32 %v2139, %v2041
        %v2141 = vand.u32 2147483647, %v2041
        %vm2142 = vcmp.lt.f32.partialorder %v2141, 0.0004427343
        %v2143 = vsel %vm2142, %v2140, %v2137
        %v2144 = vadd.f32 %v2043, 1.0
        %v2145 = vlog2.pop %v2144
        %v2146 = vmul.f32 %v2145, 0.6931472
        %v2147 = vmul.f32 -0.5, %v2043
        %v2148 = vadd.f32 %v2147, 1.0
        %v2149 = vmul.f32 %v2148, %v2043
        %v2150 = vand.u32 2147483647, %v2043
        %vm2151 = vcmp.lt.f32.partialorder %v2150, 0.0004427343
        %v2152 = vsel %vm2151, %v2149, %v2146
        %v2153 = vadd.f32 %v2045, 1.0
        %v2154 = vlog2.pop %v2153
        %v2155 = vmul.f32 %v2154, 0.6931472
        %v2156 = vmul.f32 -0.5, %v2045
        %v2157 = vadd.f32 %v2156, 1.0
        %v2158 = vmul.f32 %v2157, %v2045
        %v2159 = vand.u32 2147483647, %v2045
        %vm2160 = vcmp.lt.f32.partialorder %v2159, 0.0004427343
        %v2161 = vsel %vm2160, %v2158, %v2155
        %v2162 = vadd.f32 %v2047, 1.0
        %v2163 = vlog2.pop %v2162
        %v2164 = vmul.f32 %v2163, 0.6931472
        %v2165 = vmul.f32 -0.5, %v2047
        %v2166 = vadd.f32 %v2165, 1.0
        %v2167 = vmul.f32 %v2166, %v2047
        %v2168 = vand.u32 2147483647, %v2047
        %vm2169 = vcmp.lt.f32.partialorder %v2168, 0.0004427343
        %v2170 = vsel %vm2169, %v2167, %v2164
        %v2171 = vadd.f32 %v2049, 1.0
        %v2172 = vlog2.pop %v2171
        %v2173 = vmul.f32 %v2172, 0.6931472
        %v2174 = vmul.f32 -0.5, %v2049
        %v2175 = vadd.f32 %v2174, 1.0
        %v2176 = vmul.f32 %v2175, %v2049
        %v2177 = vand.u32 2147483647, %v2049
        %vm2178 = vcmp.lt.f32.partialorder %v2177, 0.0004427343
        %v2179 = vsel %vm2178, %v2176, %v2173
        %v2180 = vadd.f32 %v2051, 1.0
        %v2181 = vlog2.pop %v2180
        %v2182 = vmul.f32 %v2181, 0.6931472
        %v2183 = vmul.f32 -0.5, %v2051
        %v2184 = vadd.f32 %v2183, 1.0
        %v2185 = vmul.f32 %v2184, %v2051
        %v2186 = vand.u32 2147483647, %v2051
        %vm2187 = vcmp.lt.f32.partialorder %v2186, 0.0004427343
        %v2188 = vsel %vm2187, %v2185, %v2182
        %v2189 = vadd.f32 %v2053, 1.0
        %v2190 = vlog2.pop %v2189
        %v2191 = vmul.f32 %v2190, 0.6931472
        %v2192 = vmul.f32 -0.5, %v2053
        %v2193 = vadd.f32 %v2192, 1.0
        %v2194 = vmul.f32 %v2193, %v2053
        %v2195 = vand.u32 2147483647, %v2053
        %vm2196 = vcmp.lt.f32.partialorder %v2195, 0.0004427343
        %v2197 = vsel %vm2196, %v2194, %v2191
        %v2198 = vsel %vm1990, %v1974, %v2062
        %v2199 = vsel %vm1991, %v1975, %v2071
        %v2200 = vsel %vm1992, %v1976, %v2080
        %v2201 = vsel %vm1993, %v1977, %v2089
        %v2202 = vsel %vm1994, %v1978, %v2098
        %v2203 = vsel %vm1995, %v1979, %v2107
        %v2204 = vsel %vm1996, %v1980, %v2116
        %v2205 = vsel %vm1997, %v1981, %v2125
        %v2206 = vsel %vm1998, %v1982, %v2134
        %v2207 = vsel %vm1999, %v1983, %v2143
        %v2208 = vsel %vm2000, %v1984, %v2152
        %v2209 = vsel %vm2001, %v1985, %v2161
        %v2210 = vsel %vm2002, %v1986, %v2170
        %v2211 = vsel %vm2003, %v1987, %v2179
        %v2212 = vsel %vm2004, %v1988, %v2188
        %v2213 = vsel %vm2005, %v1989, %v2197
        %v2214 = vtanh.pop %v2198
        %v2215 = vtanh.pop %v2199
        %v2216 = vtanh.pop %v2200
        %v2217 = vtanh.pop %v2201
        %v2218 = vtanh.pop %v2202
        %v2219 = vtanh.pop %v2203
        %v2220 = vtanh.pop %v2204
        %v2221 = vtanh.pop %v2205
        %v2222 = vtanh.pop %v2206
        %v2223 = vtanh.pop %v2207
        %v2224 = vtanh.pop %v2208
        %v2225 = vtanh.pop %v2209
        %v2226 = vtanh.pop %v2210
        %v2227 = vtanh.pop %v2211
        %v2228 = vtanh.pop %v2212
        %v2229 = vtanh.pop %v2213
        %v2230 = vmul.f32 %v1974, %v2214
        %v2231 = vmul.f32 %v1975, %v2215
        %v2232 = vmul.f32 %v1976, %v2216
        %v2233 = vmul.f32 %v1977, %v2217
        %v2234 = vmul.f32 %v1978, %v2218
        %v2235 = vmul.f32 %v1979, %v2219
        %v2236 = vmul.f32 %v1980, %v2220
        %v2237 = vmul.f32 %v1981, %v2221
        %v2238 = vmul.f32 %v1982, %v2222
        %v2239 = vmul.f32 %v1983, %v2223
        %v2240 = vmul.f32 %v1984, %v2224
        %v2241 = vmul.f32 %v1985, %v2225
        %v2242 = vmul.f32 %v1986, %v2226
        %v2243 = vmul.f32 %v1987, %v2227
        %v2244 = vmul.f32 %v1988, %v2228
        %v2245 = vmul.f32 %v1989, %v2229
        %s2246 = scalar_lea.vmem %s5, 32
        %v2247 = vld [vmem:[%s2246] sm:$0xff]
        %v2248 = vld [vmem:[%s2246 + $0x8] sm:$0xff]
        %v2249 = vld [vmem:[%s2246 + $0x10] sm:$0xff]
        %v2250 = vld [vmem:[%s2246 + $0x18] sm:$0xff]
        %v2251 = vlaneseq
        %v2252 = vshrl.u32 %v2251, 7
        %v2253 = vsub.s32 5, %v2252
        %v2254 = vrot.slane %v564, %v2253
        %v2256 = vsel %vm567, %v1590, 0
        %v2259 = vsel %vm567, %v1591, 0
        %v2262 = vsel %vm567, %v1592, 0
        %v2265 = vsel %vm567, %v1593, 0
        %v2268 = vsel %vm567, %v1594, 0
        %v2271 = vsel %vm567, %v1595, 0
        %v2274 = vsel %vm567, %v1596, 0
        %v2277 = vsel %vm567, %v1597, 0
        %v2280 = vsel %vm567, %v1598, 0
        %v2283 = vsel %vm567, %v1599, 0
        %v2286 = vsel %vm567, %v1600, 0
        %v2289 = vsel %vm567, %v1601, 0
        %v2292 = vsel %vm567, %v1602, 0
        %v2295 = vsel %vm567, %v1603, 0
        %v2298 = vsel %vm567, %v1604, 0
        %v2301 = vsel %vm567, %v1605, 0
        %2303 = vmatprep.subr.mxu0 0.0
        %2304 = vmatpush1.msra.mxu0 %v2247
        %2305 = vmatprep.subr.mxu0 0.0
        %2306 = vmatpush1.msra.mxu0 %v2248
        %2307 = vmatprep.subr.mxu0 0.0
        %2308 = vmatpush1.msra.mxu0 %v2249
        %2309 = vmatprep.subr.mxu0 0.0
        %2310 = vmatpush1.msra.mxu0 %v2250
        %2311 = vmatprep.subr.mxu0 0.0
        %2312 = vmatpush1.msra.mxu0 0.0
        %2313 = vmatprep.subr.mxu0 0.0
        %2314 = vmatpush1.msra.mxu0 0.0
        %2315 = vmatprep.subr.mxu0 0.0
        %2316 = vmatpush1.msra.mxu0 0.0
        %2317 = vmatprep.subr.mxu0 0.0
        %2318 = vmatpush1.msra.mxu0 0.0
        %2319 = vmatprep.subr.mxu0 0.0
        %2320 = vmatpush1.msra.mxu0 0.0
        %2321 = vmatprep.subr.mxu0 0.0
        %2322 = vmatpush1.msra.mxu0 0.0
        %2323 = vmatprep.subr.mxu0 0.0
        %2324 = vmatpush1.msra.mxu0 0.0
        %2325 = vmatprep.subr.mxu0 0.0
        %2326 = vmatpush1.msra.mxu0 0.0
        %2327 = vmatprep.subr.mxu0 0.0
        %2328 = vmatpush1.msra.mxu0 0.0
        %2329 = vmatprep.subr.mxu0 0.0
        %2330 = vmatpush1.msra.mxu0 0.0
        %2331 = vmatprep.subr.mxu0 0.0
        %2332 = vmatpush1.msra.mxu0 0.0
        %2333 = vmatprep.subr.mxu0 0.0
        %2334 = vmatpush1.msra.mxu0 0.0
        %2335 = vmatprep.subr.mxu0 0.0
        %2336 = vmatpush1.msra.mxu0 0.0
        %2337 = vmatprep.subr.mxu0 0.0
        %2338 = vmatpush1.msra.mxu0 0.0
        %2339 = vmatprep.subr.mxu0 0.0
        %2340 = vmatpush1.msra.mxu0 0.0
        %2341 = vmatprep.subr.mxu0 0.0
        %2342 = vmatpush1.msra.mxu0 0.0
        %2343 = vmatprep.subr.mxu0 0.0
        %2344 = vmatpush1.msra.mxu0 0.0
        %2345 = vmatprep.subr.mxu0 0.0
        %2346 = vmatpush1.msra.mxu0 0.0
        %2347 = vmatprep.subr.mxu0 0.0
        %2348 = vmatpush1.msra.mxu0 0.0
        %2349 = vmatprep.subr.mxu0 0.0
        %2350 = vmatpush1.msra.mxu0 0.0
        %2351 = vmatprep.subr.mxu0 0.0
        %2352 = vmatpush1.msra.mxu0 0.0
        %2353 = vmatprep.subr.mxu0 0.0
        %2354 = vmatpush1.msra.mxu0 0.0
        %2355 = vmatprep.subr.mxu0 0.0
        %2356 = vmatpush1.msra.mxu0 0.0
        %2357 = vmatprep.subr.mxu0 0.0
        %2358 = vmatpush1.msra.mxu0 0.0
        %2359 = vmatprep.subr.mxu0 0.0
        %2360 = vmatpush1.msra.mxu0 0.0
        %2361 = vmatprep.subr.mxu0 0.0
        %2362 = vmatpush1.msra.mxu0 0.0
        %2363 = vmatprep.subr.mxu0 0.0
        %2364 = vmatpush1.msra.mxu0 0.0
        %2365 = vmatprep.subr.mxu0 0.0
        %2366 = vmatpush1.msra.mxu0 0.0
        %2367 = vmatprep.mubr.f32.mxu0 0.0
        %2368 = vmatmul.mubr.f32.gmra.mrb[0].mxu0 %v2256
        %v2369 = vpop.f32.mrb[0].mxu0
        %v2370 = vadd.f32 %v2254, %v2369
        %v2371 = vpop.f32.mrb[0].mxu0
        %2372 = vmatprep.mubr.f32.mxu0 0.0
        %2373 = vmatmul.mubr.f32.gmra.mrb[0].mxu0 %v2259
        %v2374 = vpop.f32.mrb[0].mxu0
        %v2375 = vadd.f32 %v2254, %v2374
        %v2376 = vpop.f32.mrb[0].mxu0
        %2377 = vmatprep.mubr.f32.mxu0 0.0
        %2378 = vmatmul.mubr.f32.gmra.mrb[0].mxu0 %v2262
        %v2379 = vpop.f32.mrb[0].mxu0
        %v2380 = vadd.f32 %v2254, %v2379
        %v2381 = vpop.f32.mrb[0].mxu0
        %2382 = vmatprep.mubr.f32.mxu0 0.0
        %2383 = vmatmul.mubr.f32.gmra.mrb[0].mxu0 %v2265
        %v2384 = vpop.f32.mrb[0].mxu0
        %v2385 = vadd.f32 %v2254, %v2384
        %v2386 = vpop.f32.mrb[0].mxu0
        %2387 = vmatprep.mubr.f32.mxu0 0.0
        %2388 = vmatmul.mubr.f32.gmra.mrb[0].mxu0 %v2268
        %v2389 = vpop.f32.mrb[0].mxu0
        %v2390 = vadd.f32 %v2254, %v2389
        %v2391 = vpop.f32.mrb[0].mxu0
        %2392 = vmatprep.mubr.f32.mxu0 0.0
        %2393 = vmatmul.mubr.f32.gmra.mrb[0].mxu0 %v2271
        %v2394 = vpop.f32.mrb[0].mxu0
        %v2395 = vadd.f32 %v2254, %v2394
        %v2396 = vpop.f32.mrb[0].mxu0
        %2397 = vmatprep.mubr.f32.mxu0 0.0
        %2398 = vmatmul.mubr.f32.gmra.mrb[0].mxu0 %v2274
        %v2399 = vpop.f32.mrb[0].mxu0
        %v2400 = vadd.f32 %v2254, %v2399
        %v2401 = vpop.f32.mrb[0].mxu0
        %2402 = vmatprep.mubr.f32.mxu0 0.0
        %2403 = vmatmul.mubr.f32.gmra.mrb[0].mxu0 %v2277
        %v2404 = vpop.f32.mrb[0].mxu0
        %v2405 = vadd.f32 %v2254, %v2404
        %v2406 = vpop.f32.mrb[0].mxu0
        %2407 = vmatprep.mubr.f32.mxu0 0.0
        %2408 = vmatmul.mubr.f32.gmra.mrb[0].mxu0 %v2280
        %v2409 = vpop.f32.mrb[0].mxu0
        %v2410 = vadd.f32 %v2254, %v2409
        %v2411 = vpop.f32.mrb[0].mxu0
        %2412 = vmatprep.mubr.f32.mxu0 0.0
        %2413 = vmatmul.mubr.f32.gmra.mrb[0].mxu0 %v2283
        %v2414 = vpop.f32.mrb[0].mxu0
        %v2415 = vadd.f32 %v2254, %v2414
        %v2416 = vpop.f32.mrb[0].mxu0
        %2417 = vmatprep.mubr.f32.mxu0 0.0
        %2418 = vmatmul.mubr.f32.gmra.mrb[0].mxu0 %v2286
        %v2419 = vpop.f32.mrb[0].mxu0
        %v2420 = vadd.f32 %v2254, %v2419
        %v2421 = vpop.f32.mrb[0].mxu0
        %2422 = vmatprep.mubr.f32.mxu0 0.0
        %2423 = vmatmul.mubr.f32.gmra.mrb[0].mxu0 %v2289
        %v2424 = vpop.f32.mrb[0].mxu0
        %v2425 = vadd.f32 %v2254, %v2424
        %v2426 = vpop.f32.mrb[0].mxu0
        %2427 = vmatprep.mubr.f32.mxu0 0.0
        %2428 = vmatmul.mubr.f32.gmra.mrb[0].mxu0 %v2292
        %v2429 = vpop.f32.mrb[0].mxu0
        %v2430 = vadd.f32 %v2254, %v2429
        %v2431 = vpop.f32.mrb[0].mxu0
        %2432 = vmatprep.mubr.f32.mxu0 0.0
        %2433 = vmatmul.mubr.f32.gmra.mrb[0].mxu0 %v2295
        %v2434 = vpop.f32.mrb[0].mxu0
        %v2435 = vadd.f32 %v2254, %v2434
        %v2436 = vpop.f32.mrb[0].mxu0
        %2437 = vmatprep.mubr.f32.mxu0 0.0
        %2438 = vmatmul.mubr.f32.gmra.mrb[0].mxu0 %v2298
        %v2439 = vpop.f32.mrb[0].mxu0
        %v2440 = vadd.f32 %v2254, %v2439
        %v2441 = vpop.f32.mrb[0].mxu0
        %2442 = vmatprep.mubr.f32.mxu0 0.0
        %2443 = vmatmul.mubr.f32.gmra.mrb[0].mxu0 %v2301
        %v2444 = vpop.f32.mrb[0].mxu0
        %v2445 = vadd.f32 %v2254, %v2444
        %v2446 = vpop.f32.mrb[0].mxu0
        %2447 = vdwg.mxu0
        %s2448 = scalar_lea.vmem %s5, 64
        %v2449 = vld [vmem:[%s2448] sm:$0xff]
        %v2450 = vld [vmem:[%s2448 + $0x8] sm:$0xff]
        %v2451 = vld [vmem:[%s2448 + $0x10] sm:$0xff]
        %v2452 = vld [vmem:[%s2448 + $0x18] sm:$0xff]
        %v2453 = vlaneseq
        %v2454 = vshrl.u32 %v2453, 7
        %v2455 = vsub.s32 6, %v2454
        %v2456 = vrot.slane %v564, %v2455
        %2473 = vrot.lane.b32.xlu0 %v2230, 96
        %v2474 = vpop.permute.xlu0 %2473
        %2475 = vrot.lane.b32.xlu0 %v2231, 96
        %v2476 = vpop.permute.xlu0 %2475
        %2477 = vrot.lane.b32.xlu0 %v2232, 96
        %v2478 = vpop.permute.xlu0 %2477
        %2479 = vrot.lane.b32.xlu0 %v2233, 96
        %v2480 = vpop.permute.xlu0 %2479
        %2481 = vrot.lane.b32.xlu0 %v2234, 96
        %v2482 = vpop.permute.xlu0 %2481
        %2483 = vrot.lane.b32.xlu0 %v2235, 96
        %v2484 = vpop.permute.xlu0 %2483
        %2485 = vrot.lane.b32.xlu0 %v2236, 96
        %v2486 = vpop.permute.xlu0 %2485
        %2487 = vrot.lane.b32.xlu0 %v2237, 96
        %v2488 = vpop.permute.xlu0 %2487
        %2489 = vrot.lane.b32.xlu0 %v2238, 96
        %v2490 = vpop.permute.xlu0 %2489
        %2491 = vrot.lane.b32.xlu0 %v2239, 96
        %v2492 = vpop.permute.xlu0 %2491
        %2493 = vrot.lane.b32.xlu0 %v2240, 96
        %v2494 = vpop.permute.xlu0 %2493
        %2495 = vrot.lane.b32.xlu0 %v2241, 96
        %v2496 = vpop.permute.xlu0 %2495
        %2497 = vrot.lane.b32.xlu0 %v2242, 96
        %v2498 = vpop.permute.xlu0 %2497
        %2499 = vrot.lane.b32.xlu0 %v2243, 96
        %v2500 = vpop.permute.xlu0 %2499
        %2501 = vrot.lane.b32.xlu0 %v2244, 96
        %v2502 = vpop.permute.xlu0 %2501
        %2503 = vrot.lane.b32.xlu0 %v2245, 96
        %v2504 = vpop.permute.xlu0 %2503
        %v2505 = vsel %vm567, %v2474, 0
        %v2507 = vsel %vm567, %v2476, 0
        %v2509 = vsel %vm567, %v2478, 0
        %v2511 = vsel %vm567, %v2480, 0
        %v2513 = vsel %vm567, %v2482, 0
        %v2515 = vsel %vm567, %v2484, 0
        %v2517 = vsel %vm567, %v2486, 0
        %v2519 = vsel %vm567, %v2488, 0
        %v2521 = vsel %vm567, %v2490, 0
        %v2523 = vsel %vm567, %v2492, 0
        %v2525 = vsel %vm567, %v2494, 0
        %v2527 = vsel %vm567, %v2496, 0
        %v2529 = vsel %vm567, %v2498, 0
        %v2531 = vsel %vm567, %v2500, 0
        %v2533 = vsel %vm567, %v2502, 0
        %v2535 = vsel %vm567, %v2504, 0
        %2537 = vmatprep.subr.mxu0 0.0
        %2538 = vmatpush1.msra.mxu0 %v2449
        %2539 = vmatprep.subr.mxu0 0.0
        %2540 = vmatpush1.msra.mxu0 %v2450
        %2541 = vmatprep.subr.mxu0 0.0
        %2542 = vmatpush1.msra.mxu0 %v2451
        %2543 = vmatprep.subr.mxu0 0.0
        %2544 = vmatpush1.msra.mxu0 %v2452
        %2545 = vmatprep.subr.mxu0 0.0
        %2546 = vmatpush1.msra.mxu0 0.0
        %2547 = vmatprep.subr.mxu0 0.0
        %2548 = vmatpush1.msra.mxu0 0.0
        %2549 = vmatprep.subr.mxu0 0.0
        %2550 = vmatpush1.msra.mxu0 0.0
        %2551 = vmatprep.subr.mxu0 0.0
        %2552 = vmatpush1.msra.mxu0 0.0
        %2553 = vmatprep.subr.mxu0 0.0
        %2554 = vmatpush1.msra.mxu0 0.0
        %2555 = vmatprep.subr.mxu0 0.0
        %2556 = vmatpush1.msra.mxu0 0.0
        %2557 = vmatprep.subr.mxu0 0.0
        %2558 = vmatpush1.msra.mxu0 0.0
        %2559 = vmatprep.subr.mxu0 0.0
        %2560 = vmatpush1.msra.mxu0 0.0
        %2561 = vmatprep.subr.mxu0 0.0
        %2562 = vmatpush1.msra.mxu0 0.0
        %2563 = vmatprep.subr.mxu0 0.0
        %2564 = vmatpush1.msra.mxu0 0.0
        %2565 = vmatprep.subr.mxu0 0.0
        %2566 = vmatpush1.msra.mxu0 0.0
        %2567 = vmatprep.subr.mxu0 0.0
        %2568 = vmatpush1.msra.mxu0 0.0
        %2569 = vmatprep.subr.mxu0 0.0
        %2570 = vmatpush1.msra.mxu0 0.0
        %2571 = vmatprep.subr.mxu0 0.0
        %2572 = vmatpush1.msra.mxu0 0.0
        %2573 = vmatprep.subr.mxu0 0.0
        %2574 = vmatpush1.msra.mxu0 0.0
        %2575 = vmatprep.subr.mxu0 0.0
        %2576 = vmatpush1.msra.mxu0 0.0
        %2577 = vmatprep.subr.mxu0 0.0
        %2578 = vmatpush1.msra.mxu0 0.0
        %2579 = vmatprep.subr.mxu0 0.0
        %2580 = vmatpush1.msra.mxu0 0.0
        %2581 = vmatprep.subr.mxu0 0.0
        %2582 = vmatpush1.msra.mxu0 0.0
        %2583 = vmatprep.subr.mxu0 0.0
        %2584 = vmatpush1.msra.mxu0 0.0
        %2585 = vmatprep.subr.mxu0 0.0
        %2586 = vmatpush1.msra.mxu0 0.0
        %2587 = vmatprep.subr.mxu0 0.0
        %2588 = vmatpush1.msra.mxu0 0.0
        %2589 = vmatprep.subr.mxu0 0.0
        %2590 = vmatpush1.msra.mxu0 0.0
        %2591 = vmatprep.subr.mxu0 0.0
        %2592 = vmatpush1.msra.mxu0 0.0
        %2593 = vmatprep.subr.mxu0 0.0
        %2594 = vmatpush1.msra.mxu0 0.0
        %2595 = vmatprep.subr.mxu0 0.0
        %2596 = vmatpush1.msra.mxu0 0.0
        %2597 = vmatprep.subr.mxu0 0.0
        %2598 = vmatpush1.msra.mxu0 0.0
        %2599 = vmatprep.subr.mxu0 0.0
        %2600 = vmatpush1.msra.mxu0 0.0
        %2601 = vmatprep.mubr.f32.mxu0 0.0
        %2602 = vmatmul.mubr.f32.gmra.mrb[0].mxu0 %v2505
        %v2603 = vpop.f32.mrb[0].mxu0
        %v2604 = vadd.f32 %v2456, %v2603
        %v2605 = vpop.f32.mrb[0].mxu0
        %2606 = vmatprep.mubr.f32.mxu0 0.0
        %2607 = vmatmul.mubr.f32.gmra.mrb[0].mxu0 %v2507
        %v2608 = vpop.f32.mrb[0].mxu0
        %v2609 = vadd.f32 %v2456, %v2608
        %v2610 = vpop.f32.mrb[0].mxu0
        %2611 = vmatprep.mubr.f32.mxu0 0.0
        %2612 = vmatmul.mubr.f32.gmra.mrb[0].mxu0 %v2509
        %v2613 = vpop.f32.mrb[0].mxu0
        %v2614 = vadd.f32 %v2456, %v2613
        %v2615 = vpop.f32.mrb[0].mxu0
        %2616 = vmatprep.mubr.f32.mxu0 0.0
        %2617 = vmatmul.mubr.f32.gmra.mrb[0].mxu0 %v2511
        %v2618 = vpop.f32.mrb[0].mxu0
        %v2619 = vadd.f32 %v2456, %v2618
        %v2620 = vpop.f32.mrb[0].mxu0
        %2621 = vmatprep.mubr.f32.mxu0 0.0
        %2622 = vmatmul.mubr.f32.gmra.mrb[0].mxu0 %v2513
        %v2623 = vpop.f32.mrb[0].mxu0
        %v2624 = vadd.f32 %v2456, %v2623
        %v2625 = vpop.f32.mrb[0].mxu0
        %2626 = vmatprep.mubr.f32.mxu0 0.0
        %2627 = vmatmul.mubr.f32.gmra.mrb[0].mxu0 %v2515
        %v2628 = vpop.f32.mrb[0].mxu0
        %v2629 = vadd.f32 %v2456, %v2628
        %v2630 = vpop.f32.mrb[0].mxu0
        %2631 = vmatprep.mubr.f32.mxu0 0.0
        %2632 = vmatmul.mubr.f32.gmra.mrb[0].mxu0 %v2517
        %v2633 = vpop.f32.mrb[0].mxu0
        %v2634 = vadd.f32 %v2456, %v2633
        %v2635 = vpop.f32.mrb[0].mxu0
        %2636 = vmatprep.mubr.f32.mxu0 0.0
        %2637 = vmatmul.mubr.f32.gmra.mrb[0].mxu0 %v2519
        %v2638 = vpop.f32.mrb[0].mxu0
        %v2639 = vadd.f32 %v2456, %v2638
        %v2640 = vpop.f32.mrb[0].mxu0
        %2641 = vmatprep.mubr.f32.mxu0 0.0
        %2642 = vmatmul.mubr.f32.gmra.mrb[0].mxu0 %v2521
        %v2643 = vpop.f32.mrb[0].mxu0
        %v2644 = vadd.f32 %v2456, %v2643
        %v2645 = vpop.f32.mrb[0].mxu0
        %2646 = vmatprep.mubr.f32.mxu0 0.0
        %2647 = vmatmul.mubr.f32.gmra.mrb[0].mxu0 %v2523
        %v2648 = vpop.f32.mrb[0].mxu0
        %v2649 = vadd.f32 %v2456, %v2648
        %v2650 = vpop.f32.mrb[0].mxu0
        %2651 = vmatprep.mubr.f32.mxu0 0.0
        %2652 = vmatmul.mubr.f32.gmra.mrb[0].mxu0 %v2525
        %v2653 = vpop.f32.mrb[0].mxu0
        %v2654 = vadd.f32 %v2456, %v2653
        %v2655 = vpop.f32.mrb[0].mxu0
        %2656 = vmatprep.mubr.f32.mxu0 0.0
        %2657 = vmatmul.mubr.f32.gmra.mrb[0].mxu0 %v2527
        %v2658 = vpop.f32.mrb[0].mxu0
        %v2659 = vadd.f32 %v2456, %v2658
        %v2660 = vpop.f32.mrb[0].mxu0
        %2661 = vmatprep.mubr.f32.mxu0 0.0
        %2662 = vmatmul.mubr.f32.gmra.mrb[0].mxu0 %v2529
        %v2663 = vpop.f32.mrb[0].mxu0
        %v2664 = vadd.f32 %v2456, %v2663
        %v2665 = vpop.f32.mrb[0].mxu0
        %2666 = vmatprep.mubr.f32.mxu0 0.0
        %2667 = vmatmul.mubr.f32.gmra.mrb[0].mxu0 %v2531
        %v2668 = vpop.f32.mrb[0].mxu0
        %v2669 = vadd.f32 %v2456, %v2668
        %v2670 = vpop.f32.mrb[0].mxu0
        %2671 = vmatprep.mubr.f32.mxu0 0.0
        %2672 = vmatmul.mubr.f32.gmra.mrb[0].mxu0 %v2533
        %v2673 = vpop.f32.mrb[0].mxu0
        %v2674 = vadd.f32 %v2456, %v2673
        %v2675 = vpop.f32.mrb[0].mxu0
        %2676 = vmatprep.mubr.f32.mxu0 0.0
        %2677 = vmatmul.mubr.f32.gmra.mrb[0].mxu0 %v2535
        %v2678 = vpop.f32.mrb[0].mxu0
        %v2679 = vadd.f32 %v2456, %v2678
        %v2680 = vpop.f32.mrb[0].mxu0
        %2681 = vdwg.mxu0
        %v2683 = vcombine.high %v741, %v741
        %v2685 = vunpack.c.l.s4 1966171168
        %v2686 = vunpack.c.0.s8 %v2685
        %v2687 = vlaneseq
        %v2688 = vshrl.u32 %v2687, 7
        %v2689 = vsub.s32 %v2686, %v2688
        %v2690 = vrot.slane %v741, %v2689
        %v2692 = vunpack.c.l.s4 1966171168
        %v2693 = vunpack.c.0.s8 %v2692
        %v2694 = vlaneseq
        %v2695 = vshrl.u32 %v2694, 7
        %v2696 = vsub.s32 %v2693, %v2695
        %v2697 = vrot.slane %v2683, %v2696
        %v2698 = vcombine.high %v2690, %v2690
        %v2699 = vcombine.high %v2697, %v2697
        %v2701 = vunpack.c.l.s4 1966171168
        %v2702 = vunpack.c.0.s8 %v2701
        %v2703 = vlaneseq
        %v2704 = vshrl.u32 %v2703, 7
        %v2705 = vsub.s32 %v2702, %v2704
        %v2706 = vrot.slane %v2690, %v2705
        %v2708 = vunpack.c.l.s4 1966171168
        %v2709 = vunpack.c.0.s8 %v2708
        %v2710 = vlaneseq
        %v2711 = vshrl.u32 %v2710, 7
        %v2712 = vsub.s32 %v2709, %v2711
        %v2713 = vrot.slane %v2697, %v2712
        %v2715 = vunpack.c.l.s4 1966171168
        %v2716 = vunpack.c.0.s8 %v2715
        %v2717 = vlaneseq
        %v2718 = vshrl.u32 %v2717, 7
        %v2719 = vsub.s32 %v2716, %v2718
        %v2720 = vrot.slane %v2698, %v2719
        %v2722 = vunpack.c.l.s4 1966171168
        %v2723 = vunpack.c.0.s8 %v2722
        %v2724 = vlaneseq
        %v2725 = vshrl.u32 %v2724, 7
        %v2726 = vsub.s32 %v2723, %v2725
        %v2727 = vrot.slane %v2699, %v2726
        %v2728 = vcombine.high %v2706, %v2706
        %v2729 = vcombine.high %v2713, %v2713
        %v2730 = vcombine.high %v2720, %v2720
        %v2731 = vcombine.high %v2727, %v2727
        %v2732 = vlaneseq
        %v2733 = vshrl.u32 %v2732, 7
        %v2734 = vsub.s32 0, %v2733
        %v2735 = vrot.slane %v2706, %v2734
        %v2736 = vlaneseq
        %v2737 = vshrl.u32 %v2736, 7
        %v2738 = vsub.s32 0, %v2737
        %v2739 = vrot.slane %v2720, %v2738
        %v2740 = vlaneseq
        %v2741 = vshrl.u32 %v2740, 7
        %v2742 = vsub.s32 0, %v2741
        %v2743 = vrot.slane %v2728, %v2742
        %v2744 = vlaneseq
        %v2745 = vshrl.u32 %v2744, 7
        %v2746 = vsub.s32 0, %v2745
        %v2747 = vrot.slane %v2730, %v2746
        %v2748 = vlaneseq
        %v2749 = vshrl.u32 %v2748, 7
        %v2750 = vsub.s32 0, %v2749
        %v2751 = vrot.slane %v2713, %v2750
        %v2752 = vlaneseq
        %v2753 = vshrl.u32 %v2752, 7
        %v2754 = vsub.s32 0, %v2753
        %v2755 = vrot.slane %v2727, %v2754
        %v2756 = vlaneseq
        %v2757 = vshrl.u32 %v2756, 7
        %v2758 = vsub.s32 0, %v2757
        %v2759 = vrot.slane %v2729, %v2758
        %v2760 = vlaneseq
        %v2761 = vshrl.u32 %v2760, 7
        %v2762 = vsub.s32 0, %v2761
        %v2763 = vrot.slane %v2731, %v2762
        %v2772 = vsub.f32 %v899, %v2735
        %v2773 = vsub.f32 %v900, %v2735
        %v2774 = vsub.f32 %v899, %v2739
        %v2775 = vsub.f32 %v900, %v2739
        %v2776 = vsub.f32 %v899, %v2743
        %v2777 = vsub.f32 %v900, %v2743
        %v2778 = vsub.f32 %v899, %v2747
        %v2779 = vsub.f32 %v900, %v2747
        %v2780 = vsub.f32 %v899, %v2751
        %v2781 = vsub.f32 %v900, %v2751
        %v2782 = vsub.f32 %v899, %v2755
        %v2783 = vsub.f32 %v900, %v2755
        %v2784 = vsub.f32 %v899, %v2759
        %v2785 = vsub.f32 %v900, %v2759
        %v2786 = vsub.f32 %v899, %v2763
        %v2787 = vsub.f32 %v900, %v2763
        %v2788 = vmul.f32 %v2772, %v2370
        %v2789 = vmul.f32 %v2773, %v2375
        %v2790 = vmul.f32 %v2774, %v2380
        %v2791 = vmul.f32 %v2775, %v2385
        %v2792 = vmul.f32 %v2776, %v2390
        %v2793 = vmul.f32 %v2777, %v2395
        %v2794 = vmul.f32 %v2778, %v2400
        %v2795 = vmul.f32 %v2779, %v2405
        %v2796 = vmul.f32 %v2780, %v2410
        %v2797 = vmul.f32 %v2781, %v2415
        %v2798 = vmul.f32 %v2782, %v2420
        %v2799 = vmul.f32 %v2783, %v2425
        %v2800 = vmul.f32 %v2784, %v2430
        %v2801 = vmul.f32 %v2785, %v2435
        %v2802 = vmul.f32 %v2786, %v2440
        %v2803 = vmul.f32 %v2787, %v2445
        %v2804 = vadd.f32 %v2788, %v2604
        %v2805 = vadd.f32 %v2789, %v2609
        %v2806 = vadd.f32 %v2790, %v2614
        %v2807 = vadd.f32 %v2791, %v2619
        %v2808 = vadd.f32 %v2792, %v2624
        %v2809 = vadd.f32 %v2793, %v2629
        %v2810 = vadd.f32 %v2794, %v2634
        %v2811 = vadd.f32 %v2795, %v2639
        %v2812 = vadd.f32 %v2796, %v2644
        %v2813 = vadd.f32 %v2797, %v2649
        %v2814 = vadd.f32 %v2798, %v2654
        %v2815 = vadd.f32 %v2799, %v2659
        %v2816 = vadd.f32 %v2800, %v2664
        %v2817 = vadd.f32 %v2801, %v2669
        %v2818 = vadd.f32 %v2802, %v2674
        %v2819 = vadd.f32 %v2803, %v2679
        %s2820 = scalar_lea.vmem %s5, 96
        %v2821 = vld [vmem:[%s2820] sm:$0xff]
        %v2822 = vld [vmem:[%s2820 + $0x8] sm:$0xff]
        %v2823 = vld [vmem:[%s2820 + $0x10] sm:$0xff]
        %v2824 = vld [vmem:[%s2820 + $0x18] sm:$0xff]
        %v2825 = vlaneseq
        %v2826 = vshrl.u32 %v2825, 7
        %v2827 = vsub.s32 7, %v2826
        %v2828 = vrot.slane %v564, %v2827
        %v2830 = vsel %vm567, %v2804, 0
        %v2833 = vsel %vm567, %v2805, 0
        %v2836 = vsel %vm567, %v2806, 0
        %v2839 = vsel %vm567, %v2807, 0
        %v2842 = vsel %vm567, %v2808, 0
        %v2845 = vsel %vm567, %v2809, 0
        %v2848 = vsel %vm567, %v2810, 0
        %v2851 = vsel %vm567, %v2811, 0
        %v2854 = vsel %vm567, %v2812, 0
        %v2857 = vsel %vm567, %v2813, 0
        %v2860 = vsel %vm567, %v2814, 0
        %v2863 = vsel %vm567, %v2815, 0
        %v2866 = vsel %vm567, %v2816, 0
        %v2869 = vsel %vm567, %v2817, 0
        %v2872 = vsel %vm567, %v2818, 0
        %v2875 = vsel %vm567, %v2819, 0
        %2877 = vmatprep.subr.mxu0 0.0
        %2878 = vmatpush1.msra.mxu0 %v2821
        %2879 = vmatprep.subr.mxu0 0.0
        %2880 = vmatpush1.msra.mxu0 %v2822
        %2881 = vmatprep.subr.mxu0 0.0
        %2882 = vmatpush1.msra.mxu0 %v2823
        %2883 = vmatprep.subr.mxu0 0.0
        %2884 = vmatpush1.msra.mxu0 %v2824
        %2885 = vmatprep.subr.mxu0 0.0
        %2886 = vmatpush1.msra.mxu0 0.0
        %2887 = vmatprep.subr.mxu0 0.0
        %2888 = vmatpush1.msra.mxu0 0.0
        %2889 = vmatprep.subr.mxu0 0.0
        %2890 = vmatpush1.msra.mxu0 0.0
        %2891 = vmatprep.subr.mxu0 0.0
        %2892 = vmatpush1.msra.mxu0 0.0
        %2893 = vmatprep.subr.mxu0 0.0
        %2894 = vmatpush1.msra.mxu0 0.0
        %2895 = vmatprep.subr.mxu0 0.0
        %2896 = vmatpush1.msra.mxu0 0.0
        %2897 = vmatprep.subr.mxu0 0.0
        %2898 = vmatpush1.msra.mxu0 0.0
        %2899 = vmatprep.subr.mxu0 0.0
        %2900 = vmatpush1.msra.mxu0 0.0
        %2901 = vmatprep.subr.mxu0 0.0
        %2902 = vmatpush1.msra.mxu0 0.0
        %2903 = vmatprep.subr.mxu0 0.0
        %2904 = vmatpush1.msra.mxu0 0.0
        %2905 = vmatprep.subr.mxu0 0.0
        %2906 = vmatpush1.msra.mxu0 0.0
        %2907 = vmatprep.subr.mxu0 0.0
        %2908 = vmatpush1.msra.mxu0 0.0
        %2909 = vmatprep.subr.mxu0 0.0
        %2910 = vmatpush1.msra.mxu0 0.0
        %2911 = vmatprep.subr.mxu0 0.0
        %2912 = vmatpush1.msra.mxu0 0.0
        %2913 = vmatprep.subr.mxu0 0.0
        %2914 = vmatpush1.msra.mxu0 0.0
        %2915 = vmatprep.subr.mxu0 0.0
        %2916 = vmatpush1.msra.mxu0 0.0
        %2917 = vmatprep.subr.mxu0 0.0
        %2918 = vmatpush1.msra.mxu0 0.0
        %2919 = vmatprep.subr.mxu0 0.0
        %2920 = vmatpush1.msra.mxu0 0.0
        %2921 = vmatprep.subr.mxu0 0.0
        %2922 = vmatpush1.msra.mxu0 0.0
        %2923 = vmatprep.subr.mxu0 0.0
        %2924 = vmatpush1.msra.mxu0 0.0
        %2925 = vmatprep.subr.mxu0 0.0
        %2926 = vmatpush1.msra.mxu0 0.0
        %2927 = vmatprep.subr.mxu0 0.0
        %2928 = vmatpush1.msra.mxu0 0.0
        %2929 = vmatprep.subr.mxu0 0.0
        %2930 = vmatpush1.msra.mxu0 0.0
        %2931 = vmatprep.subr.mxu0 0.0
        %2932 = vmatpush1.msra.mxu0 0.0
        %2933 = vmatprep.subr.mxu0 0.0
        %2934 = vmatpush1.msra.mxu0 0.0
        %2935 = vmatprep.subr.mxu0 0.0
        %2936 = vmatpush1.msra.mxu0 0.0
        %2937 = vmatprep.subr.mxu0 0.0
        %2938 = vmatpush1.msra.mxu0 0.0
        %2939 = vmatprep.subr.mxu0 0.0
        %2940 = vmatpush1.msra.mxu0 0.0
        %2941 = vmatprep.mubr.f32.mxu0 0.0
        %2942 = vmatmul.mubr.f32.gmra.mrb[0].mxu0 %v2830
        %v2943 = vpop.f32.mrb[0].mxu0
        %v2944 = vadd.f32 %v2828, %v2943
        %v2945 = vpop.f32.mrb[0].mxu0
        %2946 = vmatprep.mubr.f32.mxu0 0.0
        %2947 = vmatmul.mubr.f32.gmra.mrb[0].mxu0 %v2833
        %v2948 = vpop.f32.mrb[0].mxu0
        %v2949 = vadd.f32 %v2828, %v2948
        %v2950 = vpop.f32.mrb[0].mxu0
        %2951 = vmatprep.mubr.f32.mxu0 0.0
        %2952 = vmatmul.mubr.f32.gmra.mrb[0].mxu0 %v2836
        %v2953 = vpop.f32.mrb[0].mxu0
        %v2954 = vadd.f32 %v2828, %v2953
        %v2955 = vpop.f32.mrb[0].mxu0
        %2956 = vmatprep.mubr.f32.mxu0 0.0
        %2957 = vmatmul.mubr.f32.gmra.mrb[0].mxu0 %v2839
        %v2958 = vpop.f32.mrb[0].mxu0
        %v2959 = vadd.f32 %v2828, %v2958
        %v2960 = vpop.f32.mrb[0].mxu0
        %2961 = vmatprep.mubr.f32.mxu0 0.0
        %2962 = vmatmul.mubr.f32.gmra.mrb[0].mxu0 %v2842
        %v2963 = vpop.f32.mrb[0].mxu0
        %v2964 = vadd.f32 %v2828, %v2963
        %v2965 = vpop.f32.mrb[0].mxu0
        %2966 = vmatprep.mubr.f32.mxu0 0.0
        %2967 = vmatmul.mubr.f32.gmra.mrb[0].mxu0 %v2845
        %v2968 = vpop.f32.mrb[0].mxu0
        %v2969 = vadd.f32 %v2828, %v2968
        %v2970 = vpop.f32.mrb[0].mxu0
        %2971 = vmatprep.mubr.f32.mxu0 0.0
        %2972 = vmatmul.mubr.f32.gmra.mrb[0].mxu0 %v2848
        %v2973 = vpop.f32.mrb[0].mxu0
        %v2974 = vadd.f32 %v2828, %v2973
        %v2975 = vpop.f32.mrb[0].mxu0
        %2976 = vmatprep.mubr.f32.mxu0 0.0
        %2977 = vmatmul.mubr.f32.gmra.mrb[0].mxu0 %v2851
        %v2978 = vpop.f32.mrb[0].mxu0
        %v2979 = vadd.f32 %v2828, %v2978
        %v2980 = vpop.f32.mrb[0].mxu0
        %2981 = vmatprep.mubr.f32.mxu0 0.0
        %2982 = vmatmul.mubr.f32.gmra.mrb[0].mxu0 %v2854
        %v2983 = vpop.f32.mrb[0].mxu0
        %v2984 = vadd.f32 %v2828, %v2983
        %v2985 = vpop.f32.mrb[0].mxu0
        %2986 = vmatprep.mubr.f32.mxu0 0.0
        %2987 = vmatmul.mubr.f32.gmra.mrb[0].mxu0 %v2857
        %v2988 = vpop.f32.mrb[0].mxu0
        %v2989 = vadd.f32 %v2828, %v2988
        %v2990 = vpop.f32.mrb[0].mxu0
        %2991 = vmatprep.mubr.f32.mxu0 0.0
        %2992 = vmatmul.mubr.f32.gmra.mrb[0].mxu0 %v2860
        %v2993 = vpop.f32.mrb[0].mxu0
        %v2994 = vadd.f32 %v2828, %v2993
        %v2995 = vpop.f32.mrb[0].mxu0
        %2996 = vmatprep.mubr.f32.mxu0 0.0
        %2997 = vmatmul.mubr.f32.gmra.mrb[0].mxu0 %v2863
        %v2998 = vpop.f32.mrb[0].mxu0
        %v2999 = vadd.f32 %v2828, %v2998
        %v3000 = vpop.f32.mrb[0].mxu0
        %3001 = vmatprep.mubr.f32.mxu0 0.0
        %3002 = vmatmul.mubr.f32.gmra.mrb[0].mxu0 %v2866
        %v3003 = vpop.f32.mrb[0].mxu0
        %v3004 = vadd.f32 %v2828, %v3003
        %v3005 = vpop.f32.mrb[0].mxu0
        %3006 = vmatprep.mubr.f32.mxu0 0.0
        %3007 = vmatmul.mubr.f32.gmra.mrb[0].mxu0 %v2869
        %v3008 = vpop.f32.mrb[0].mxu0
        %v3009 = vadd.f32 %v2828, %v3008
        %v3010 = vpop.f32.mrb[0].mxu0
        %3011 = vmatprep.mubr.f32.mxu0 0.0
        %3012 = vmatmul.mubr.f32.gmra.mrb[0].mxu0 %v2872
        %v3013 = vpop.f32.mrb[0].mxu0
        %v3014 = vadd.f32 %v2828, %v3013
        %v3015 = vpop.f32.mrb[0].mxu0
        %3016 = vmatprep.mubr.f32.mxu0 0.0
        %3017 = vmatmul.mubr.f32.gmra.mrb[0].mxu0 %v2875
        %v3018 = vpop.f32.mrb[0].mxu0
        %v3019 = vadd.f32 %v2828, %v3018
        %v3020 = vpop.f32.mrb[0].mxu0
        %3021 = vdwg.mxu0
        %v3022 = vsel %vm567, %v2944, 0.0
        %3023 = vadd.xlane.f32.xlu0 %v3022
        %v3024 = vpop.xlane.xlu0 %3023
        %v3025 = vsel %vm567, %v2949, 0.0
        %3026 = vadd.xlane.f32.xlu0 %v3025
        %v3027 = vpop.xlane.xlu0 %3026
        %v3028 = vsel %vm567, %v2954, 0.0
        %3029 = vadd.xlane.f32.xlu0 %v3028
        %v3030 = vpop.xlane.xlu0 %3029
        %v3031 = vsel %vm567, %v2959, 0.0
        %3032 = vadd.xlane.f32.xlu0 %v3031
        %v3033 = vpop.xlane.xlu0 %3032
        %v3034 = vsel %vm567, %v2964, 0.0
        %3035 = vadd.xlane.f32.xlu0 %v3034
        %v3036 = vpop.xlane.xlu0 %3035
        %v3037 = vsel %vm567, %v2969, 0.0
        %3038 = vadd.xlane.f32.xlu0 %v3037
        %v3039 = vpop.xlane.xlu0 %3038
        %v3040 = vsel %vm567, %v2974, 0.0
        %3041 = vadd.xlane.f32.xlu0 %v3040
        %v3042 = vpop.xlane.xlu0 %3041
        %v3043 = vsel %vm567, %v2979, 0.0
        %3044 = vadd.xlane.f32.xlu0 %v3043
        %v3045 = vpop.xlane.xlu0 %3044
        %v3046 = vsel %vm567, %v2984, 0.0
        %3047 = vadd.xlane.f32.xlu0 %v3046
        %v3048 = vpop.xlane.xlu0 %3047
        %v3049 = vsel %vm567, %v2989, 0.0
        %3050 = vadd.xlane.f32.xlu0 %v3049
        %v3051 = vpop.xlane.xlu0 %3050
        %v3052 = vsel %vm567, %v2994, 0.0
        %3053 = vadd.xlane.f32.xlu0 %v3052
        %v3054 = vpop.xlane.xlu0 %3053
        %v3055 = vsel %vm567, %v2999, 0.0
        %3056 = vadd.xlane.f32.xlu0 %v3055
        %v3057 = vpop.xlane.xlu0 %3056
        %v3058 = vsel %vm567, %v3004, 0.0
        %3059 = vadd.xlane.f32.xlu0 %v3058
        %v3060 = vpop.xlane.xlu0 %3059
        %v3061 = vsel %vm567, %v3009, 0.0
        %3062 = vadd.xlane.f32.xlu0 %v3061
        %v3063 = vpop.xlane.xlu0 %3062
        %v3064 = vsel %vm567, %v3014, 0.0
        %3065 = vadd.xlane.f32.xlu0 %v3064
        %v3066 = vpop.xlane.xlu0 %3065
        %v3067 = vsel %vm567, %v3019, 0.0
        %3068 = vadd.xlane.f32.xlu0 %v3067
        %v3069 = vpop.xlane.xlu0 %3068
        %v3070 = vmul.f32 %v3024, %v574
        %v3071 = vmul.f32 %v3027, %v574
        %v3072 = vmul.f32 %v3030, %v574
        %v3073 = vmul.f32 %v3033, %v574
        %v3074 = vmul.f32 %v3036, %v574
        %v3075 = vmul.f32 %v3039, %v574
        %v3076 = vmul.f32 %v3042, %v574
        %v3077 = vmul.f32 %v3045, %v574
        %v3078 = vmul.f32 %v3048, %v574
        %v3079 = vmul.f32 %v3051, %v574
        %v3080 = vmul.f32 %v3054, %v574
        %v3081 = vmul.f32 %v3057, %v574
        %v3082 = vmul.f32 %v3060, %v574
        %v3083 = vmul.f32 %v3063, %v574
        %v3084 = vmul.f32 %v3066, %v574
        %v3085 = vmul.f32 %v3069, %v574
        %v3086 = vsub.f32 %v2944, %v3070
        %v3087 = vsub.f32 %v2949, %v3071
        %v3088 = vsub.f32 %v2954, %v3072
        %v3089 = vsub.f32 %v2959, %v3073
        %v3090 = vsub.f32 %v2964, %v3074
        %v3091 = vsub.f32 %v2969, %v3075
        %v3092 = vsub.f32 %v2974, %v3076
        %v3093 = vsub.f32 %v2979, %v3077
        %v3094 = vsub.f32 %v2984, %v3078
        %v3095 = vsub.f32 %v2989, %v3079
        %v3096 = vsub.f32 %v2994, %v3080
        %v3097 = vsub.f32 %v2999, %v3081
        %v3098 = vsub.f32 %v3004, %v3082
        %v3099 = vsub.f32 %v3009, %v3083
        %v3100 = vsub.f32 %v3014, %v3084
        %v3101 = vsub.f32 %v3019, %v3085
        %v3102 = vmul.f32 %v3086, %v3086
        %v3103 = vmul.f32 %v3087, %v3087
        %v3104 = vmul.f32 %v3088, %v3088
        %v3105 = vmul.f32 %v3089, %v3089
        %v3106 = vmul.f32 %v3090, %v3090
        %v3107 = vmul.f32 %v3091, %v3091
        %v3108 = vmul.f32 %v3092, %v3092
        %v3109 = vmul.f32 %v3093, %v3093
        %v3110 = vmul.f32 %v3094, %v3094
        %v3111 = vmul.f32 %v3095, %v3095
        %v3112 = vmul.f32 %v3096, %v3096
        %v3113 = vmul.f32 %v3097, %v3097
        %v3114 = vmul.f32 %v3098, %v3098
        %v3115 = vmul.f32 %v3099, %v3099
        %v3116 = vmul.f32 %v3100, %v3100
        %v3117 = vmul.f32 %v3101, %v3101
        %v3118 = vsel %vm567, %v3102, 0.0
        %3119 = vadd.xlane.f32.xlu0 %v3118
        %v3120 = vpop.xlane.xlu0 %3119
        %v3121 = vsel %vm567, %v3103, 0.0
        %3122 = vadd.xlane.f32.xlu0 %v3121
        %v3123 = vpop.xlane.xlu0 %3122
        %v3124 = vsel %vm567, %v3104, 0.0
        %3125 = vadd.xlane.f32.xlu0 %v3124
        %v3126 = vpop.xlane.xlu0 %3125
        %v3127 = vsel %vm567, %v3105, 0.0
        %3128 = vadd.xlane.f32.xlu0 %v3127
        %v3129 = vpop.xlane.xlu0 %3128
        %v3130 = vsel %vm567, %v3106, 0.0
        %3131 = vadd.xlane.f32.xlu0 %v3130
        %v3132 = vpop.xlane.xlu0 %3131
        %v3133 = vsel %vm567, %v3107, 0.0
        %3134 = vadd.xlane.f32.xlu0 %v3133
        %v3135 = vpop.xlane.xlu0 %3134
        %v3136 = vsel %vm567, %v3108, 0.0
        %3137 = vadd.xlane.f32.xlu0 %v3136
        %v3138 = vpop.xlane.xlu0 %3137
        %v3139 = vsel %vm567, %v3109, 0.0
        %3140 = vadd.xlane.f32.xlu0 %v3139
        %v3141 = vpop.xlane.xlu0 %3140
        %v3142 = vsel %vm567, %v3110, 0.0
        %3143 = vadd.xlane.f32.xlu0 %v3142
        %v3144 = vpop.xlane.xlu0 %3143
        %v3145 = vsel %vm567, %v3111, 0.0
        %3146 = vadd.xlane.f32.xlu0 %v3145
        %v3147 = vpop.xlane.xlu0 %3146
        %v3148 = vsel %vm567, %v3112, 0.0
        %3149 = vadd.xlane.f32.xlu0 %v3148
        %v3150 = vpop.xlane.xlu0 %3149
        %v3151 = vsel %vm567, %v3113, 0.0
        %3152 = vadd.xlane.f32.xlu0 %v3151
        %v3153 = vpop.xlane.xlu0 %3152
        %v3154 = vsel %vm567, %v3114, 0.0
        %3155 = vadd.xlane.f32.xlu0 %v3154
        %v3156 = vpop.xlane.xlu0 %3155
        %v3157 = vsel %vm567, %v3115, 0.0
        %3158 = vadd.xlane.f32.xlu0 %v3157
        %v3159 = vpop.xlane.xlu0 %3158
        %v3160 = vsel %vm567, %v3116, 0.0
        %3161 = vadd.xlane.f32.xlu0 %v3160
        %v3162 = vpop.xlane.xlu0 %3161
        %v3163 = vsel %vm567, %v3117, 0.0
        %3164 = vadd.xlane.f32.xlu0 %v3163
        %v3165 = vpop.xlane.xlu0 %3164
        %v3166 = vmul.f32 %v3120, %v574
        %v3167 = vmul.f32 %v3123, %v574
        %v3168 = vmul.f32 %v3126, %v574
        %v3169 = vmul.f32 %v3129, %v574
        %v3170 = vmul.f32 %v3132, %v574
        %v3171 = vmul.f32 %v3135, %v574
        %v3172 = vmul.f32 %v3138, %v574
        %v3173 = vmul.f32 %v3141, %v574
        %v3174 = vmul.f32 %v3144, %v574
        %v3175 = vmul.f32 %v3147, %v574
        %v3176 = vmul.f32 %v3150, %v574
        %v3177 = vmul.f32 %v3153, %v574
        %v3178 = vmul.f32 %v3156, %v574
        %v3179 = vmul.f32 %v3159, %v574
        %v3180 = vmul.f32 %v3162, %v574
        %v3181 = vmul.f32 %v3165, %v574
        %v3182 = vadd.f32 %v3166, 1e-05
        %v3183 = vadd.f32 %v3167, 1e-05
        %v3184 = vadd.f32 %v3168, 1e-05
        %v3185 = vadd.f32 %v3169, 1e-05
        %v3186 = vadd.f32 %v3170, 1e-05
        %v3187 = vadd.f32 %v3171, 1e-05
        %v3188 = vadd.f32 %v3172, 1e-05
        %v3189 = vadd.f32 %v3173, 1e-05
        %v3190 = vadd.f32 %v3174, 1e-05
        %v3191 = vadd.f32 %v3175, 1e-05
        %v3192 = vadd.f32 %v3176, 1e-05
        %v3193 = vadd.f32 %v3177, 1e-05
        %v3194 = vadd.f32 %v3178, 1e-05
        %v3195 = vadd.f32 %v3179, 1e-05
        %v3196 = vadd.f32 %v3180, 1e-05
        %v3197 = vadd.f32 %v3181, 1e-05
        %v3198 = vrsqrt.pop %v3182
        %v3199 = vrsqrt.pop %v3183
        %v3200 = vrsqrt.pop %v3184
        %v3201 = vrsqrt.pop %v3185
        %v3202 = vrsqrt.pop %v3186
        %v3203 = vrsqrt.pop %v3187
        %v3204 = vrsqrt.pop %v3188
        %v3205 = vrsqrt.pop %v3189
        %v3206 = vrsqrt.pop %v3190
        %v3207 = vrsqrt.pop %v3191
        %v3208 = vrsqrt.pop %v3192
        %v3209 = vrsqrt.pop %v3193
        %v3210 = vrsqrt.pop %v3194
        %v3211 = vrsqrt.pop %v3195
        %v3212 = vrsqrt.pop %v3196
        %v3213 = vrsqrt.pop %v3197
        %v3214 = vmul.f32 %v3086, %v3198
        %v3215 = vmul.f32 %v3087, %v3199
        %v3216 = vmul.f32 %v3088, %v3200
        %v3217 = vmul.f32 %v3089, %v3201
        %v3218 = vmul.f32 %v3090, %v3202
        %v3219 = vmul.f32 %v3091, %v3203
        %v3220 = vmul.f32 %v3092, %v3204
        %v3221 = vmul.f32 %v3093, %v3205
        %v3222 = vmul.f32 %v3094, %v3206
        %v3223 = vmul.f32 %v3095, %v3207
        %v3224 = vmul.f32 %v3096, %v3208
        %v3225 = vmul.f32 %v3097, %v3209
        %v3226 = vmul.f32 %v3098, %v3210
        %v3227 = vmul.f32 %v3099, %v3211
        %v3228 = vmul.f32 %v3100, %v3212
        %v3229 = vmul.f32 %v3101, %v3213
        %v3230 = vlaneseq
        %v3231 = vshrl.u32 %v3230, 7
        %v3232 = vsub.s32 3, %v3231
        %v3233 = vrot.slane %v564, %v3232
        %v3234 = vmul.f32 %v3214, %v3233
        %v3235 = vmul.f32 %v3215, %v3233
        %v3236 = vmul.f32 %v3216, %v3233
        %v3237 = vmul.f32 %v3217, %v3233
        %v3238 = vmul.f32 %v3218, %v3233
        %v3239 = vmul.f32 %v3219, %v3233
        %v3240 = vmul.f32 %v3220, %v3233
        %v3241 = vmul.f32 %v3221, %v3233
        %v3242 = vmul.f32 %v3222, %v3233
        %v3243 = vmul.f32 %v3223, %v3233
        %v3244 = vmul.f32 %v3224, %v3233
        %v3245 = vmul.f32 %v3225, %v3233
        %v3246 = vmul.f32 %v3226, %v3233
        %v3247 = vmul.f32 %v3227, %v3233
        %v3248 = vmul.f32 %v3228, %v3233
        %v3249 = vmul.f32 %v3229, %v3233
        %v3250 = vlaneseq
        %v3251 = vshrl.u32 %v3250, 7
        %v3252 = vsub.s32 4, %v3251
        %v3253 = vrot.slane %v564, %v3252
        %v3254 = vadd.f32 %v3234, %v3253
        %v3255 = vadd.f32 %v3235, %v3253
        %v3256 = vadd.f32 %v3236, %v3253
        %v3257 = vadd.f32 %v3237, %v3253
        %v3258 = vadd.f32 %v3238, %v3253
        %v3259 = vadd.f32 %v3239, %v3253
        %v3260 = vadd.f32 %v3240, %v3253
        %v3261 = vadd.f32 %v3241, %v3253
        %v3262 = vadd.f32 %v3242, %v3253
        %v3263 = vadd.f32 %v3243, %v3253
        %v3264 = vadd.f32 %v3244, %v3253
        %v3265 = vadd.f32 %v3245, %v3253
        %v3266 = vadd.f32 %v3246, %v3253
        %v3267 = vadd.f32 %v3247, %v3253
        %v3268 = vadd.f32 %v3248, %v3253
        %v3269 = vadd.f32 %v3249, %v3253
        %vm3270 = vcmp.gt.f32.partialorder %v3254, 20.0
        %vm3271 = vcmp.gt.f32.partialorder %v3255, 20.0
        %vm3272 = vcmp.gt.f32.partialorder %v3256, 20.0
        %vm3273 = vcmp.gt.f32.partialorder %v3257, 20.0
        %vm3274 = vcmp.gt.f32.partialorder %v3258, 20.0
        %vm3275 = vcmp.gt.f32.partialorder %v3259, 20.0
        %vm3276 = vcmp.gt.f32.partialorder %v3260, 20.0
        %vm3277 = vcmp.gt.f32.partialorder %v3261, 20.0
        %vm3278 = vcmp.gt.f32.partialorder %v3262, 20.0
        %vm3279 = vcmp.gt.f32.partialorder %v3263, 20.0
        %vm3280 = vcmp.gt.f32.partialorder %v3264, 20.0
        %vm3281 = vcmp.gt.f32.partialorder %v3265, 20.0
        %vm3282 = vcmp.gt.f32.partialorder %v3266, 20.0
        %vm3283 = vcmp.gt.f32.partialorder %v3267, 20.0
        %vm3284 = vcmp.gt.f32.partialorder %v3268, 20.0
        %vm3285 = vcmp.gt.f32.partialorder %v3269, 20.0
        %v3286 = vmin.f32 %v3254, 20.0
        %v3287 = vmin.f32 %v3255, 20.0
        %v3288 = vmin.f32 %v3256, 20.0
        %v3289 = vmin.f32 %v3257, 20.0
        %v3290 = vmin.f32 %v3258, 20.0
        %v3291 = vmin.f32 %v3259, 20.0
        %v3292 = vmin.f32 %v3260, 20.0
        %v3293 = vmin.f32 %v3261, 20.0
        %v3294 = vmin.f32 %v3262, 20.0
        %v3295 = vmin.f32 %v3263, 20.0
        %v3296 = vmin.f32 %v3264, 20.0
        %v3297 = vmin.f32 %v3265, 20.0
        %v3298 = vmin.f32 %v3266, 20.0
        %v3299 = vmin.f32 %v3267, 20.0
        %v3300 = vmin.f32 %v3268, 20.0
        %v3301 = vmin.f32 %v3269, 20.0
        %v3302 = vmul.f32 %v3286, 1.442695
        %v3303 = vpow.pop %v3302
        %v3304 = vmul.f32 %v3287, 1.442695
        %v3305 = vpow.pop %v3304
        %v3306 = vmul.f32 %v3288, 1.442695
        %v3307 = vpow.pop %v3306
        %v3308 = vmul.f32 %v3289, 1.442695
        %v3309 = vpow.pop %v3308
        %v3310 = vmul.f32 %v3290, 1.442695
        %v3311 = vpow.pop %v3310
        %v3312 = vmul.f32 %v3291, 1.442695
        %v3313 = vpow.pop %v3312
        %v3314 = vmul.f32 %v3292, 1.442695
        %v3315 = vpow.pop %v3314
        %v3316 = vmul.f32 %v3293, 1.442695
        %v3317 = vpow.pop %v3316
        %v3318 = vmul.f32 %v3294, 1.442695
        %v3319 = vpow.pop %v3318
        %v3320 = vmul.f32 %v3295, 1.442695
        %v3321 = vpow.pop %v3320
        %v3322 = vmul.f32 %v3296, 1.442695
        %v3323 = vpow.pop %v3322
        %v3324 = vmul.f32 %v3297, 1.442695
        %v3325 = vpow.pop %v3324
        %v3326 = vmul.f32 %v3298, 1.442695
        %v3327 = vpow.pop %v3326
        %v3328 = vmul.f32 %v3299, 1.442695
        %v3329 = vpow.pop %v3328
        %v3330 = vmul.f32 %v3300, 1.442695
        %v3331 = vpow.pop %v3330
        %v3332 = vmul.f32 %v3301, 1.442695
        %v3333 = vpow.pop %v3332
        %v3334 = vadd.f32 %v3303, 1.0
        %v3335 = vlog2.pop %v3334
        %v3336 = vmul.f32 %v3335, 0.6931472
        %v3337 = vmul.f32 -0.5, %v3303
        %v3338 = vadd.f32 %v3337, 1.0
        %v3339 = vmul.f32 %v3338, %v3303
        %v3340 = vand.u32 2147483647, %v3303
        %vm3341 = vcmp.lt.f32.partialorder %v3340, 0.0004427343
        %v3342 = vsel %vm3341, %v3339, %v3336
        %v3343 = vadd.f32 %v3305, 1.0
        %v3344 = vlog2.pop %v3343
        %v3345 = vmul.f32 %v3344, 0.6931472
        %v3346 = vmul.f32 -0.5, %v3305
        %v3347 = vadd.f32 %v3346, 1.0
        %v3348 = vmul.f32 %v3347, %v3305
        %v3349 = vand.u32 2147483647, %v3305
        %vm3350 = vcmp.lt.f32.partialorder %v3349, 0.0004427343
        %v3351 = vsel %vm3350, %v3348, %v3345
        %v3352 = vadd.f32 %v3307, 1.0
        %v3353 = vlog2.pop %v3352
        %v3354 = vmul.f32 %v3353, 0.6931472
        %v3355 = vmul.f32 -0.5, %v3307
        %v3356 = vadd.f32 %v3355, 1.0
        %v3357 = vmul.f32 %v3356, %v3307
        %v3358 = vand.u32 2147483647, %v3307
        %vm3359 = vcmp.lt.f32.partialorder %v3358, 0.0004427343
        %v3360 = vsel %vm3359, %v3357, %v3354
        %v3361 = vadd.f32 %v3309, 1.0
        %v3362 = vlog2.pop %v3361
        %v3363 = vmul.f32 %v3362, 0.6931472
        %v3364 = vmul.f32 -0.5, %v3309
        %v3365 = vadd.f32 %v3364, 1.0
        %v3366 = vmul.f32 %v3365, %v3309
        %v3367 = vand.u32 2147483647, %v3309
        %vm3368 = vcmp.lt.f32.partialorder %v3367, 0.0004427343
        %v3369 = vsel %vm3368, %v3366, %v3363
        %v3370 = vadd.f32 %v3311, 1.0
        %v3371 = vlog2.pop %v3370
        %v3372 = vmul.f32 %v3371, 0.6931472
        %v3373 = vmul.f32 -0.5, %v3311
        %v3374 = vadd.f32 %v3373, 1.0
        %v3375 = vmul.f32 %v3374, %v3311
        %v3376 = vand.u32 2147483647, %v3311
        %vm3377 = vcmp.lt.f32.partialorder %v3376, 0.0004427343
        %v3378 = vsel %vm3377, %v3375, %v3372
        %v3379 = vadd.f32 %v3313, 1.0
        %v3380 = vlog2.pop %v3379
        %v3381 = vmul.f32 %v3380, 0.6931472
        %v3382 = vmul.f32 -0.5, %v3313
        %v3383 = vadd.f32 %v3382, 1.0
        %v3384 = vmul.f32 %v3383, %v3313
        %v3385 = vand.u32 2147483647, %v3313
        %vm3386 = vcmp.lt.f32.partialorder %v3385, 0.0004427343
        %v3387 = vsel %vm3386, %v3384, %v3381
        %v3388 = vadd.f32 %v3315, 1.0
        %v3389 = vlog2.pop %v3388
        %v3390 = vmul.f32 %v3389, 0.6931472
        %v3391 = vmul.f32 -0.5, %v3315
        %v3392 = vadd.f32 %v3391, 1.0
        %v3393 = vmul.f32 %v3392, %v3315
        %v3394 = vand.u32 2147483647, %v3315
        %vm3395 = vcmp.lt.f32.partialorder %v3394, 0.0004427343
        %v3396 = vsel %vm3395, %v3393, %v3390
        %v3397 = vadd.f32 %v3317, 1.0
        %v3398 = vlog2.pop %v3397
        %v3399 = vmul.f32 %v3398, 0.6931472
        %v3400 = vmul.f32 -0.5, %v3317
        %v3401 = vadd.f32 %v3400, 1.0
        %v3402 = vmul.f32 %v3401, %v3317
        %v3403 = vand.u32 2147483647, %v3317
        %vm3404 = vcmp.lt.f32.partialorder %v3403, 0.0004427343
        %v3405 = vsel %vm3404, %v3402, %v3399
        %v3406 = vadd.f32 %v3319, 1.0
        %v3407 = vlog2.pop %v3406
        %v3408 = vmul.f32 %v3407, 0.6931472
        %v3409 = vmul.f32 -0.5, %v3319
        %v3410 = vadd.f32 %v3409, 1.0
        %v3411 = vmul.f32 %v3410, %v3319
        %v3412 = vand.u32 2147483647, %v3319
        %vm3413 = vcmp.lt.f32.partialorder %v3412, 0.0004427343
        %v3414 = vsel %vm3413, %v3411, %v3408
        %v3415 = vadd.f32 %v3321, 1.0
        %v3416 = vlog2.pop %v3415
        %v3417 = vmul.f32 %v3416, 0.6931472
        %v3418 = vmul.f32 -0.5, %v3321
        %v3419 = vadd.f32 %v3418, 1.0
        %v3420 = vmul.f32 %v3419, %v3321
        %v3421 = vand.u32 2147483647, %v3321
        %vm3422 = vcmp.lt.f32.partialorder %v3421, 0.0004427343
        %v3423 = vsel %vm3422, %v3420, %v3417
        %v3424 = vadd.f32 %v3323, 1.0
        %v3425 = vlog2.pop %v3424
        %v3426 = vmul.f32 %v3425, 0.6931472
        %v3427 = vmul.f32 -0.5, %v3323
        %v3428 = vadd.f32 %v3427, 1.0
        %v3429 = vmul.f32 %v3428, %v3323
        %v3430 = vand.u32 2147483647, %v3323
        %vm3431 = vcmp.lt.f32.partialorder %v3430, 0.0004427343
        %v3432 = vsel %vm3431, %v3429, %v3426
        %v3433 = vadd.f32 %v3325, 1.0
        %v3434 = vlog2.pop %v3433
        %v3435 = vmul.f32 %v3434, 0.6931472
        %v3436 = vmul.f32 -0.5, %v3325
        %v3437 = vadd.f32 %v3436, 1.0
        %v3438 = vmul.f32 %v3437, %v3325
        %v3439 = vand.u32 2147483647, %v3325
        %vm3440 = vcmp.lt.f32.partialorder %v3439, 0.0004427343
        %v3441 = vsel %vm3440, %v3438, %v3435
        %v3442 = vadd.f32 %v3327, 1.0
        %v3443 = vlog2.pop %v3442
        %v3444 = vmul.f32 %v3443, 0.6931472
        %v3445 = vmul.f32 -0.5, %v3327
        %v3446 = vadd.f32 %v3445, 1.0
        %v3447 = vmul.f32 %v3446, %v3327
        %v3448 = vand.u32 2147483647, %v3327
        %vm3449 = vcmp.lt.f32.partialorder %v3448, 0.0004427343
        %v3450 = vsel %vm3449, %v3447, %v3444
        %v3451 = vadd.f32 %v3329, 1.0
        %v3452 = vlog2.pop %v3451
        %v3453 = vmul.f32 %v3452, 0.6931472
        %v3454 = vmul.f32 -0.5, %v3329
        %v3455 = vadd.f32 %v3454, 1.0
        %v3456 = vmul.f32 %v3455, %v3329
        %v3457 = vand.u32 2147483647, %v3329
        %vm3458 = vcmp.lt.f32.partialorder %v3457, 0.0004427343
        %v3459 = vsel %vm3458, %v3456, %v3453
        %v3460 = vadd.f32 %v3331, 1.0
        %v3461 = vlog2.pop %v3460
        %v3462 = vmul.f32 %v3461, 0.6931472
        %v3463 = vmul.f32 -0.5, %v3331
        %v3464 = vadd.f32 %v3463, 1.0
        %v3465 = vmul.f32 %v3464, %v3331
        %v3466 = vand.u32 2147483647, %v3331
        %vm3467 = vcmp.lt.f32.partialorder %v3466, 0.0004427343
        %v3468 = vsel %vm3467, %v3465, %v3462
        %v3469 = vadd.f32 %v3333, 1.0
        %v3470 = vlog2.pop %v3469
        %v3471 = vmul.f32 %v3470, 0.6931472
        %v3472 = vmul.f32 -0.5, %v3333
        %v3473 = vadd.f32 %v3472, 1.0
        %v3474 = vmul.f32 %v3473, %v3333
        %v3475 = vand.u32 2147483647, %v3333
        %vm3476 = vcmp.lt.f32.partialorder %v3475, 0.0004427343
        %v3477 = vsel %vm3476, %v3474, %v3471
        %v3478 = vsel %vm3270, %v3254, %v3342
        %v3479 = vsel %vm3271, %v3255, %v3351
        %v3480 = vsel %vm3272, %v3256, %v3360
        %v3481 = vsel %vm3273, %v3257, %v3369
        %v3482 = vsel %vm3274, %v3258, %v3378
        %v3483 = vsel %vm3275, %v3259, %v3387
        %v3484 = vsel %vm3276, %v3260, %v3396
        %v3485 = vsel %vm3277, %v3261, %v3405
        %v3486 = vsel %vm3278, %v3262, %v3414
        %v3487 = vsel %vm3279, %v3263, %v3423
        %v3488 = vsel %vm3280, %v3264, %v3432
        %v3489 = vsel %vm3281, %v3265, %v3441
        %v3490 = vsel %vm3282, %v3266, %v3450
        %v3491 = vsel %vm3283, %v3267, %v3459
        %v3492 = vsel %vm3284, %v3268, %v3468
        %v3493 = vsel %vm3285, %v3269, %v3477
        %v3494 = vtanh.pop %v3478
        %v3495 = vtanh.pop %v3479
        %v3496 = vtanh.pop %v3480
        %v3497 = vtanh.pop %v3481
        %v3498 = vtanh.pop %v3482
        %v3499 = vtanh.pop %v3483
        %v3500 = vtanh.pop %v3484
        %v3501 = vtanh.pop %v3485
        %v3502 = vtanh.pop %v3486
        %v3503 = vtanh.pop %v3487
        %v3504 = vtanh.pop %v3488
        %v3505 = vtanh.pop %v3489
        %v3506 = vtanh.pop %v3490
        %v3507 = vtanh.pop %v3491
        %v3508 = vtanh.pop %v3492
        %v3509 = vtanh.pop %v3493
        %v3510 = vmul.f32 %v3254, %v3494
        %v3511 = vmul.f32 %v3255, %v3495
        %v3512 = vmul.f32 %v3256, %v3496
        %v3513 = vmul.f32 %v3257, %v3497
        %v3514 = vmul.f32 %v3258, %v3498
        %v3515 = vmul.f32 %v3259, %v3499
        %v3516 = vmul.f32 %v3260, %v3500
        %v3517 = vmul.f32 %v3261, %v3501
        %v3518 = vmul.f32 %v3262, %v3502
        %v3519 = vmul.f32 %v3263, %v3503
        %v3520 = vmul.f32 %v3264, %v3504
        %v3521 = vmul.f32 %v3265, %v3505
        %v3522 = vmul.f32 %v3266, %v3506
        %v3523 = vmul.f32 %v3267, %v3507
        %v3524 = vmul.f32 %v3268, %v3508
        %v3525 = vmul.f32 %v3269, %v3509
        %s3526 = scalar_lea.vmem %s5, 128
        %v3527 = vld [vmem:[%s3526] sm:$0xff]
        %v3528 = vld [vmem:[%s3526 + $0x8] sm:$0xff]
        %v3529 = vld [vmem:[%s3526 + $0x10] sm:$0xff]
        %v3530 = vld [vmem:[%s3526 + $0x18] sm:$0xff]
        %v3531 = vlaneseq
        %v3532 = vshrl.u32 %v3531, 7
        %v3533 = vsub.s32 0, %v3532
        %v3534 = vrot.slane %v565, %v3533
        %v3536 = vsel %vm567, %v3510, 0
        %v3539 = vsel %vm567, %v3511, 0
        %v3542 = vsel %vm567, %v3512, 0
        %v3545 = vsel %vm567, %v3513, 0
        %v3548 = vsel %vm567, %v3514, 0
        %v3551 = vsel %vm567, %v3515, 0
        %v3554 = vsel %vm567, %v3516, 0
        %v3557 = vsel %vm567, %v3517, 0
        %v3560 = vsel %vm567, %v3518, 0
        %v3563 = vsel %vm567, %v3519, 0
        %v3566 = vsel %vm567, %v3520, 0
        %v3569 = vsel %vm567, %v3521, 0
        %v3572 = vsel %vm567, %v3522, 0
        %v3575 = vsel %vm567, %v3523, 0
        %v3578 = vsel %vm567, %v3524, 0
        %v3581 = vsel %vm567, %v3525, 0
        %3583 = vmatprep.subr.mxu0 0.0
        %3584 = vmatpush1.msra.mxu0 %v3527
        %3585 = vmatprep.subr.mxu0 0.0
        %3586 = vmatpush1.msra.mxu0 %v3528
        %3587 = vmatprep.subr.mxu0 0.0
        %3588 = vmatpush1.msra.mxu0 %v3529
        %3589 = vmatprep.subr.mxu0 0.0
        %3590 = vmatpush1.msra.mxu0 %v3530
        %3591 = vmatprep.subr.mxu0 0.0
        %3592 = vmatpush1.msra.mxu0 0.0
        %3593 = vmatprep.subr.mxu0 0.0
        %3594 = vmatpush1.msra.mxu0 0.0
        %3595 = vmatprep.subr.mxu0 0.0
        %3596 = vmatpush1.msra.mxu0 0.0
        %3597 = vmatprep.subr.mxu0 0.0
        %3598 = vmatpush1.msra.mxu0 0.0
        %3599 = vmatprep.subr.mxu0 0.0
        %3600 = vmatpush1.msra.mxu0 0.0
        %3601 = vmatprep.subr.mxu0 0.0
        %3602 = vmatpush1.msra.mxu0 0.0
        %3603 = vmatprep.subr.mxu0 0.0
        %3604 = vmatpush1.msra.mxu0 0.0
        %3605 = vmatprep.subr.mxu0 0.0
        %3606 = vmatpush1.msra.mxu0 0.0
        %3607 = vmatprep.subr.mxu0 0.0
        %3608 = vmatpush1.msra.mxu0 0.0
        %3609 = vmatprep.subr.mxu0 0.0
        %3610 = vmatpush1.msra.mxu0 0.0
        %3611 = vmatprep.subr.mxu0 0.0
        %3612 = vmatpush1.msra.mxu0 0.0
        %3613 = vmatprep.subr.mxu0 0.0
        %3614 = vmatpush1.msra.mxu0 0.0
        %3615 = vmatprep.subr.mxu0 0.0
        %3616 = vmatpush1.msra.mxu0 0.0
        %3617 = vmatprep.subr.mxu0 0.0
        %3618 = vmatpush1.msra.mxu0 0.0
        %3619 = vmatprep.subr.mxu0 0.0
        %3620 = vmatpush1.msra.mxu0 0.0
        %3621 = vmatprep.subr.mxu0 0.0
        %3622 = vmatpush1.msra.mxu0 0.0
        %3623 = vmatprep.subr.mxu0 0.0
        %3624 = vmatpush1.msra.mxu0 0.0
        %3625 = vmatprep.subr.mxu0 0.0
        %3626 = vmatpush1.msra.mxu0 0.0
        %3627 = vmatprep.subr.mxu0 0.0
        %3628 = vmatpush1.msra.mxu0 0.0
        %3629 = vmatprep.subr.mxu0 0.0
        %3630 = vmatpush1.msra.mxu0 0.0
        %3631 = vmatprep.subr.mxu0 0.0
        %3632 = vmatpush1.msra.mxu0 0.0
        %3633 = vmatprep.subr.mxu0 0.0
        %3634 = vmatpush1.msra.mxu0 0.0
        %3635 = vmatprep.subr.mxu0 0.0
        %3636 = vmatpush1.msra.mxu0 0.0
        %3637 = vmatprep.subr.mxu0 0.0
        %3638 = vmatpush1.msra.mxu0 0.0
        %3639 = vmatprep.subr.mxu0 0.0
        %3640 = vmatpush1.msra.mxu0 0.0
        %3641 = vmatprep.subr.mxu0 0.0
        %3642 = vmatpush1.msra.mxu0 0.0
        %3643 = vmatprep.subr.mxu0 0.0
        %3644 = vmatpush1.msra.mxu0 0.0
        %3645 = vmatprep.subr.mxu0 0.0
        %3646 = vmatpush1.msra.mxu0 0.0
        %3647 = vmatprep.mubr.f32.mxu0 0.0
        %3648 = vmatmul.mubr.f32.gmra.mrb[0].mxu0 %v3536
        %v3649 = vpop.f32.mrb[0].mxu0
        %v3650 = vadd.f32 %v3534, %v3649
        %v3651 = vpop.f32.mrb[0].mxu0
        %3652 = vmatprep.mubr.f32.mxu0 0.0
        %3653 = vmatmul.mubr.f32.gmra.mrb[0].mxu0 %v3539
        %v3654 = vpop.f32.mrb[0].mxu0
        %v3655 = vadd.f32 %v3534, %v3654
        %v3656 = vpop.f32.mrb[0].mxu0
        %3657 = vmatprep.mubr.f32.mxu0 0.0
        %3658 = vmatmul.mubr.f32.gmra.mrb[0].mxu0 %v3542
        %v3659 = vpop.f32.mrb[0].mxu0
        %v3660 = vadd.f32 %v3534, %v3659
        %v3661 = vpop.f32.mrb[0].mxu0
        %3662 = vmatprep.mubr.f32.mxu0 0.0
        %3663 = vmatmul.mubr.f32.gmra.mrb[0].mxu0 %v3545
        %v3664 = vpop.f32.mrb[0].mxu0
        %v3665 = vadd.f32 %v3534, %v3664
        %v3666 = vpop.f32.mrb[0].mxu0
        %3667 = vmatprep.mubr.f32.mxu0 0.0
        %3668 = vmatmul.mubr.f32.gmra.mrb[0].mxu0 %v3548
        %v3669 = vpop.f32.mrb[0].mxu0
        %v3670 = vadd.f32 %v3534, %v3669
        %v3671 = vpop.f32.mrb[0].mxu0
        %3672 = vmatprep.mubr.f32.mxu0 0.0
        %3673 = vmatmul.mubr.f32.gmra.mrb[0].mxu0 %v3551
        %v3674 = vpop.f32.mrb[0].mxu0
        %v3675 = vadd.f32 %v3534, %v3674
        %v3676 = vpop.f32.mrb[0].mxu0
        %3677 = vmatprep.mubr.f32.mxu0 0.0
        %3678 = vmatmul.mubr.f32.gmra.mrb[0].mxu0 %v3554
        %v3679 = vpop.f32.mrb[0].mxu0
        %v3680 = vadd.f32 %v3534, %v3679
        %v3681 = vpop.f32.mrb[0].mxu0
        %3682 = vmatprep.mubr.f32.mxu0 0.0
        %3683 = vmatmul.mubr.f32.gmra.mrb[0].mxu0 %v3557
        %v3684 = vpop.f32.mrb[0].mxu0
        %v3685 = vadd.f32 %v3534, %v3684
        %v3686 = vpop.f32.mrb[0].mxu0
        %3687 = vmatprep.mubr.f32.mxu0 0.0
        %3688 = vmatmul.mubr.f32.gmra.mrb[0].mxu0 %v3560
        %v3689 = vpop.f32.mrb[0].mxu0
        %v3690 = vadd.f32 %v3534, %v3689
        %v3691 = vpop.f32.mrb[0].mxu0
        %3692 = vmatprep.mubr.f32.mxu0 0.0
        %3693 = vmatmul.mubr.f32.gmra.mrb[0].mxu0 %v3563
        %v3694 = vpop.f32.mrb[0].mxu0
        %v3695 = vadd.f32 %v3534, %v3694
        %v3696 = vpop.f32.mrb[0].mxu0
        %3697 = vmatprep.mubr.f32.mxu0 0.0
        %3698 = vmatmul.mubr.f32.gmra.mrb[0].mxu0 %v3566
        %v3699 = vpop.f32.mrb[0].mxu0
        %v3700 = vadd.f32 %v3534, %v3699
        %v3701 = vpop.f32.mrb[0].mxu0
        %3702 = vmatprep.mubr.f32.mxu0 0.0
        %3703 = vmatmul.mubr.f32.gmra.mrb[0].mxu0 %v3569
        %v3704 = vpop.f32.mrb[0].mxu0
        %v3705 = vadd.f32 %v3534, %v3704
        %v3706 = vpop.f32.mrb[0].mxu0
        %3707 = vmatprep.mubr.f32.mxu0 0.0
        %3708 = vmatmul.mubr.f32.gmra.mrb[0].mxu0 %v3572
        %v3709 = vpop.f32.mrb[0].mxu0
        %v3710 = vadd.f32 %v3534, %v3709
        %v3711 = vpop.f32.mrb[0].mxu0
        %3712 = vmatprep.mubr.f32.mxu0 0.0
        %3713 = vmatmul.mubr.f32.gmra.mrb[0].mxu0 %v3575
        %v3714 = vpop.f32.mrb[0].mxu0
        %v3715 = vadd.f32 %v3534, %v3714
        %v3716 = vpop.f32.mrb[0].mxu0
        %3717 = vmatprep.mubr.f32.mxu0 0.0
        %3718 = vmatmul.mubr.f32.gmra.mrb[0].mxu0 %v3578
        %v3719 = vpop.f32.mrb[0].mxu0
        %v3720 = vadd.f32 %v3534, %v3719
        %v3721 = vpop.f32.mrb[0].mxu0
        %3722 = vmatprep.mubr.f32.mxu0 0.0
        %3723 = vmatmul.mubr.f32.gmra.mrb[0].mxu0 %v3581
        %v3724 = vpop.f32.mrb[0].mxu0
        %v3725 = vadd.f32 %v3534, %v3724
        %v3726 = vpop.f32.mrb[0].mxu0
        %3727 = vdwg.mxu0
        %v3728 = vsel %vm567, %v3650, -inf
        %v3729 = vsel %vm567, %v3655, -inf
        %v3730 = vmax.f32 %v3728, %v3729
        %v3731 = vrot.slane %v3730, 4
        %v3732 = vmax.f32 %v3730, %v3731
        %v3733 = vrot.slane %v3732, 2
        %v3734 = vmax.f32 %v3732, %v3733
        %v3735 = vrot.slane %v3734, 1
        %v3736 = vmax.f32 %v3734, %v3735
        %v3737 = vsel %vm567, %v3660, -inf
        %v3738 = vsel %vm567, %v3665, -inf
        %v3739 = vmax.f32 %v3737, %v3738
        %v3740 = vrot.slane %v3739, 4
        %v3741 = vmax.f32 %v3739, %v3740
        %v3742 = vrot.slane %v3741, 2
        %v3743 = vmax.f32 %v3741, %v3742
        %v3744 = vrot.slane %v3743, 1
        %v3745 = vmax.f32 %v3743, %v3744
        %v3746 = vsel %vm567, %v3670, -inf
        %v3747 = vsel %vm567, %v3675, -inf
        %v3748 = vmax.f32 %v3746, %v3747
        %v3749 = vrot.slane %v3748, 4
        %v3750 = vmax.f32 %v3748, %v3749
        %v3751 = vrot.slane %v3750, 2
        %v3752 = vmax.f32 %v3750, %v3751
        %v3753 = vrot.slane %v3752, 1
        %v3754 = vmax.f32 %v3752, %v3753
        %v3755 = vsel %vm567, %v3680, -inf
        %v3756 = vsel %vm567, %v3685, -inf
        %v3757 = vmax.f32 %v3755, %v3756
        %v3758 = vrot.slane %v3757, 4
        %v3759 = vmax.f32 %v3757, %v3758
        %v3760 = vrot.slane %v3759, 2
        %v3761 = vmax.f32 %v3759, %v3760
        %v3762 = vrot.slane %v3761, 1
        %v3763 = vmax.f32 %v3761, %v3762
        %v3764 = vsel %vm567, %v3690, -inf
        %v3765 = vsel %vm567, %v3695, -inf
        %v3766 = vmax.f32 %v3764, %v3765
        %v3767 = vrot.slane %v3766, 4
        %v3768 = vmax.f32 %v3766, %v3767
        %v3769 = vrot.slane %v3768, 2
        %v3770 = vmax.f32 %v3768, %v3769
        %v3771 = vrot.slane %v3770, 1
        %v3772 = vmax.f32 %v3770, %v3771
        %v3773 = vsel %vm567, %v3700, -inf
        %v3774 = vsel %vm567, %v3705, -inf
        %v3775 = vmax.f32 %v3773, %v3774
        %v3776 = vrot.slane %v3775, 4
        %v3777 = vmax.f32 %v3775, %v3776
        %v3778 = vrot.slane %v3777, 2
        %v3779 = vmax.f32 %v3777, %v3778
        %v3780 = vrot.slane %v3779, 1
        %v3781 = vmax.f32 %v3779, %v3780
        %v3782 = vsel %vm567, %v3710, -inf
        %v3783 = vsel %vm567, %v3715, -inf
        %v3784 = vmax.f32 %v3782, %v3783
        %v3785 = vrot.slane %v3784, 4
        %v3786 = vmax.f32 %v3784, %v3785
        %v3787 = vrot.slane %v3786, 2
        %v3788 = vmax.f32 %v3786, %v3787
        %v3789 = vrot.slane %v3788, 1
        %v3790 = vmax.f32 %v3788, %v3789
        %v3791 = vsel %vm567, %v3720, -inf
        %v3792 = vsel %vm567, %v3725, -inf
        %v3793 = vmax.f32 %v3791, %v3792
        %v3794 = vrot.slane %v3793, 4
        %v3795 = vmax.f32 %v3793, %v3794
        %v3796 = vrot.slane %v3795, 2
        %v3797 = vmax.f32 %v3795, %v3796
        %v3798 = vrot.slane %v3797, 1
        %v3799 = vmax.f32 %v3797, %v3798
        %v3800 = vsub.f32 %v3650, %v3736
        %v3801 = vsub.f32 %v3655, %v3736
        %v3802 = vsub.f32 %v3660, %v3745
        %v3803 = vsub.f32 %v3665, %v3745
        %v3804 = vsub.f32 %v3670, %v3754
        %v3805 = vsub.f32 %v3675, %v3754
        %v3806 = vsub.f32 %v3680, %v3763
        %v3807 = vsub.f32 %v3685, %v3763
        %v3808 = vsub.f32 %v3690, %v3772
        %v3809 = vsub.f32 %v3695, %v3772
        %v3810 = vsub.f32 %v3700, %v3781
        %v3811 = vsub.f32 %v3705, %v3781
        %v3812 = vsub.f32 %v3710, %v3790
        %v3813 = vsub.f32 %v3715, %v3790
        %v3814 = vsub.f32 %v3720, %v3799
        %v3815 = vsub.f32 %v3725, %v3799
        %v3816 = vmul.f32 %v3800, 1.442695
        %v3817 = vpow.pop %v3816
        %v3818 = vmul.f32 %v3801, 1.442695
        %v3819 = vpow.pop %v3818
        %v3820 = vmul.f32 %v3802, 1.442695
        %v3821 = vpow.pop %v3820
        %v3822 = vmul.f32 %v3803, 1.442695
        %v3823 = vpow.pop %v3822
        %v3824 = vmul.f32 %v3804, 1.442695
        %v3825 = vpow.pop %v3824
        %v3826 = vmul.f32 %v3805, 1.442695
        %v3827 = vpow.pop %v3826
        %v3828 = vmul.f32 %v3806, 1.442695
        %v3829 = vpow.pop %v3828
        %v3830 = vmul.f32 %v3807, 1.442695
        %v3831 = vpow.pop %v3830
        %v3832 = vmul.f32 %v3808, 1.442695
        %v3833 = vpow.pop %v3832
        %v3834 = vmul.f32 %v3809, 1.442695
        %v3835 = vpow.pop %v3834
        %v3836 = vmul.f32 %v3810, 1.442695
        %v3837 = vpow.pop %v3836
        %v3838 = vmul.f32 %v3811, 1.442695
        %v3839 = vpow.pop %v3838
        %v3840 = vmul.f32 %v3812, 1.442695
        %v3841 = vpow.pop %v3840
        %v3842 = vmul.f32 %v3813, 1.442695
        %v3843 = vpow.pop %v3842
        %v3844 = vmul.f32 %v3814, 1.442695
        %v3845 = vpow.pop %v3844
        %v3846 = vmul.f32 %v3815, 1.442695
        %v3847 = vpow.pop %v3846
        %3849 = vset.pattern.permute.xlu0 0
        %3850 = vperm.xlu0 %3849, %v544
        %v3851 = vpop.permute.xlu0 %3850
        %3854 = vset.pattern.permute.xlu0 0
        %3855 = vperm.xlu0 %3854, %v545
        %v3856 = vpop.permute.xlu0 %3855
        %v3858 = vmul.f32 %v3817, %v3851
        %v3859 = vmul.f32 %v3819, %v3856
        %v3860 = vmul.f32 %v3821, %v3851
        %v3861 = vmul.f32 %v3823, %v3856
        %v3862 = vmul.f32 %v3825, %v3851
        %v3863 = vmul.f32 %v3827, %v3856
        %v3864 = vmul.f32 %v3829, %v3851
        %v3865 = vmul.f32 %v3831, %v3856
        %v3866 = vmul.f32 %v3833, %v3851
        %v3867 = vmul.f32 %v3835, %v3856
        %v3868 = vmul.f32 %v3837, %v3851
        %v3869 = vmul.f32 %v3839, %v3856
        %v3870 = vmul.f32 %v3841, %v3851
        %v3871 = vmul.f32 %v3843, %v3856
        %v3872 = vmul.f32 %v3845, %v3851
        %v3873 = vmul.f32 %v3847, %v3856
        %v3874 = vsel %vm567, %v3858, 0.0
        %v3875 = vsel %vm567, %v3859, 0.0
        %v3876 = vadd.f32 %v3874, %v3875
        %v3877 = vrot.slane %v3876, 4
        %v3878 = vadd.f32 %v3876, %v3877
        %v3879 = vrot.slane %v3878, 2
        %v3880 = vadd.f32 %v3878, %v3879
        %v3881 = vrot.slane %v3880, 1
        %v3882 = vadd.f32 %v3880, %v3881
        %v3883 = vsel %vm567, %v3860, 0.0
        %v3884 = vsel %vm567, %v3861, 0.0
        %v3885 = vadd.f32 %v3883, %v3884
        %v3886 = vrot.slane %v3885, 4
        %v3887 = vadd.f32 %v3885, %v3886
        %v3888 = vrot.slane %v3887, 2
        %v3889 = vadd.f32 %v3887, %v3888
        %v3890 = vrot.slane %v3889, 1
        %v3891 = vadd.f32 %v3889, %v3890
        %v3892 = vsel %vm567, %v3862, 0.0
        %v3893 = vsel %vm567, %v3863, 0.0
        %v3894 = vadd.f32 %v3892, %v3893
        %v3895 = vrot.slane %v3894, 4
        %v3896 = vadd.f32 %v3894, %v3895
        %v3897 = vrot.slane %v3896, 2
        %v3898 = vadd.f32 %v3896, %v3897
        %v3899 = vrot.slane %v3898, 1
        %v3900 = vadd.f32 %v3898, %v3899
        %v3901 = vsel %vm567, %v3864, 0.0
        %v3902 = vsel %vm567, %v3865, 0.0
        %v3903 = vadd.f32 %v3901, %v3902
        %v3904 = vrot.slane %v3903, 4
        %v3905 = vadd.f32 %v3903, %v3904
        %v3906 = vrot.slane %v3905, 2
        %v3907 = vadd.f32 %v3905, %v3906
        %v3908 = vrot.slane %v3907, 1
        %v3909 = vadd.f32 %v3907, %v3908
        %v3910 = vsel %vm567, %v3866, 0.0
        %v3911 = vsel %vm567, %v3867, 0.0
        %v3912 = vadd.f32 %v3910, %v3911
        %v3913 = vrot.slane %v3912, 4
        %v3914 = vadd.f32 %v3912, %v3913
        %v3915 = vrot.slane %v3914, 2
        %v3916 = vadd.f32 %v3914, %v3915
        %v3917 = vrot.slane %v3916, 1
        %v3918 = vadd.f32 %v3916, %v3917
        %v3919 = vsel %vm567, %v3868, 0.0
        %v3920 = vsel %vm567, %v3869, 0.0
        %v3921 = vadd.f32 %v3919, %v3920
        %v3922 = vrot.slane %v3921, 4
        %v3923 = vadd.f32 %v3921, %v3922
        %v3924 = vrot.slane %v3923, 2
        %v3925 = vadd.f32 %v3923, %v3924
        %v3926 = vrot.slane %v3925, 1
        %v3927 = vadd.f32 %v3925, %v3926
        %v3928 = vsel %vm567, %v3870, 0.0
        %v3929 = vsel %vm567, %v3871, 0.0
        %v3930 = vadd.f32 %v3928, %v3929
        %v3931 = vrot.slane %v3930, 4
        %v3932 = vadd.f32 %v3930, %v3931
        %v3933 = vrot.slane %v3932, 2
        %v3934 = vadd.f32 %v3932, %v3933
        %v3935 = vrot.slane %v3934, 1
        %v3936 = vadd.f32 %v3934, %v3935
        %v3937 = vsel %vm567, %v3872, 0.0
        %v3938 = vsel %vm567, %v3873, 0.0
        %v3939 = vadd.f32 %v3937, %v3938
        %v3940 = vrot.slane %v3939, 4
        %v3941 = vadd.f32 %v3939, %v3940
        %v3942 = vrot.slane %v3941, 2
        %v3943 = vadd.f32 %v3941, %v3942
        %v3944 = vrot.slane %v3943, 1
        %v3945 = vadd.f32 %v3943, %v3944
        %v3946 = vrcp.pop %v3882
        %v3947 = vrcp.pop %v3891
        %v3948 = vrcp.pop %v3900
        %v3949 = vrcp.pop %v3909
        %v3950 = vrcp.pop %v3918
        %v3951 = vrcp.pop %v3927
        %v3952 = vrcp.pop %v3936
        %v3953 = vrcp.pop %v3945
        %v3954 = vmul.f32 %v3858, %v3946
        %v3955 = vmul.f32 %v3859, %v3946
        %v3956 = vmul.f32 %v3860, %v3947
        %v3957 = vmul.f32 %v3861, %v3947
        %v3958 = vmul.f32 %v3862, %v3948
        %v3959 = vmul.f32 %v3863, %v3948
        %v3960 = vmul.f32 %v3864, %v3949
        %v3961 = vmul.f32 %v3865, %v3949
        %v3962 = vmul.f32 %v3866, %v3950
        %v3963 = vmul.f32 %v3867, %v3950
        %v3964 = vmul.f32 %v3868, %v3951
        %v3965 = vmul.f32 %v3869, %v3951
        %v3966 = vmul.f32 %v3870, %v3952
        %v3967 = vmul.f32 %v3871, %v3952
        %v3968 = vmul.f32 %v3872, %v3953
        %v3969 = vmul.f32 %v3873, %v3953
        %3972 = vrot.lane.b32.xlu0 %v823, 96
        %v3973 = vpop.permute.xlu0 %3972
        %3974 = vrot.lane.b32.xlu0 %v828, 96
        %v3975 = vpop.permute.xlu0 %3974
        %v3978 = vmul.f32 %v3954, %v3973
        %v3979 = vmul.f32 %v3955, %v3975
        %v3980 = vmul.f32 %v3956, %v3973
        %v3981 = vmul.f32 %v3957, %v3975
        %v3982 = vmul.f32 %v3958, %v3973
        %v3983 = vmul.f32 %v3959, %v3975
        %v3984 = vmul.f32 %v3960, %v3973
        %v3985 = vmul.f32 %v3961, %v3975
        %v3986 = vmul.f32 %v3962, %v3973
        %v3987 = vmul.f32 %v3963, %v3975
        %v3988 = vmul.f32 %v3964, %v3973
        %v3989 = vmul.f32 %v3965, %v3975
        %v3990 = vmul.f32 %v3966, %v3973
        %v3991 = vmul.f32 %v3967, %v3975
        %v3992 = vmul.f32 %v3968, %v3973
        %v3993 = vmul.f32 %v3969, %v3975
        %v3994 = vsel %vm567, %v3978, 0.0
        %v3995 = vsel %vm567, %v3979, 0.0
        %v3996 = vadd.f32 %v3994, %v3995
        %v3997 = vrot.slane %v3996, 4
        %v3998 = vadd.f32 %v3996, %v3997
        %v3999 = vrot.slane %v3998, 2
        %v4000 = vadd.f32 %v3998, %v3999
        %v4001 = vrot.slane %v4000, 1
        %v4002 = vadd.f32 %v4000, %v4001
        %v4003 = vsel %vm567, %v3980, 0.0
        %v4004 = vsel %vm567, %v3981, 0.0
        %v4005 = vadd.f32 %v4003, %v4004
        %v4006 = vrot.slane %v4005, 4
        %v4007 = vadd.f32 %v4005, %v4006
        %v4008 = vrot.slane %v4007, 2
        %v4009 = vadd.f32 %v4007, %v4008
        %v4010 = vrot.slane %v4009, 1
        %v4011 = vadd.f32 %v4009, %v4010
        %v4012 = vsel %vm567, %v3982, 0.0
        %v4013 = vsel %vm567, %v3983, 0.0
        %v4014 = vadd.f32 %v4012, %v4013
        %v4015 = vrot.slane %v4014, 4
        %v4016 = vadd.f32 %v4014, %v4015
        %v4017 = vrot.slane %v4016, 2
        %v4018 = vadd.f32 %v4016, %v4017
        %v4019 = vrot.slane %v4018, 1
        %v4020 = vadd.f32 %v4018, %v4019
        %v4021 = vsel %vm567, %v3984, 0.0
        %v4022 = vsel %vm567, %v3985, 0.0
        %v4023 = vadd.f32 %v4021, %v4022
        %v4024 = vrot.slane %v4023, 4
        %v4025 = vadd.f32 %v4023, %v4024
        %v4026 = vrot.slane %v4025, 2
        %v4027 = vadd.f32 %v4025, %v4026
        %v4028 = vrot.slane %v4027, 1
        %v4029 = vadd.f32 %v4027, %v4028
        %v4030 = vsel %vm567, %v3986, 0.0
        %v4031 = vsel %vm567, %v3987, 0.0
        %v4032 = vadd.f32 %v4030, %v4031
        %v4033 = vrot.slane %v4032, 4
        %v4034 = vadd.f32 %v4032, %v4033
        %v4035 = vrot.slane %v4034, 2
        %v4036 = vadd.f32 %v4034, %v4035
        %v4037 = vrot.slane %v4036, 1
        %v4038 = vadd.f32 %v4036, %v4037
        %v4039 = vsel %vm567, %v3988, 0.0
        %v4040 = vsel %vm567, %v3989, 0.0
        %v4041 = vadd.f32 %v4039, %v4040
        %v4042 = vrot.slane %v4041, 4
        %v4043 = vadd.f32 %v4041, %v4042
        %v4044 = vrot.slane %v4043, 2
        %v4045 = vadd.f32 %v4043, %v4044
        %v4046 = vrot.slane %v4045, 1
        %v4047 = vadd.f32 %v4045, %v4046
        %v4048 = vsel %vm567, %v3990, 0.0
        %v4049 = vsel %vm567, %v3991, 0.0
        %v4050 = vadd.f32 %v4048, %v4049
        %v4051 = vrot.slane %v4050, 4
        %v4052 = vadd.f32 %v4050, %v4051
        %v4053 = vrot.slane %v4052, 2
        %v4054 = vadd.f32 %v4052, %v4053
        %v4055 = vrot.slane %v4054, 1
        %v4056 = vadd.f32 %v4054, %v4055
        %v4057 = vsel %vm567, %v3992, 0.0
        %v4058 = vsel %vm567, %v3993, 0.0
        %v4059 = vadd.f32 %v4057, %v4058
        %v4060 = vrot.slane %v4059, 4
        %v4061 = vadd.f32 %v4059, %v4060
        %v4062 = vrot.slane %v4061, 2
        %v4063 = vadd.f32 %v4061, %v4062
        %v4064 = vrot.slane %v4063, 1
        %v4065 = vadd.f32 %v4063, %v4064
        %vm4066 = vcmp.gt.f32.partialorder %v546, 0.0
        %v4067 = vsel %vm4066, 1, 0
        %v4068 = vcvt.s32.f32 %v4067
        %4070 = vset.pattern.permute.xlu0 0
        %4071 = vperm.xlu0 %4070, %v4068
        %v4072 = vpop.permute.xlu0 %4071
        %v4073 = vrot.slane %v4072, 1
        %v4074 = vrot.slane %v4072, 2
        %v4075 = vrot.slane %v4072, 3
        %v4076 = vrot.slane %v4072, 4
        %v4077 = vrot.slane %v4072, 5
        %v4078 = vrot.slane %v4072, 6
        %v4079 = vrot.slane %v4072, 7
        %v4088 = vmul.f32 %v4002, %v4072
        %v4089 = vmul.f32 %v4011, %v4073
        %v4090 = vmul.f32 %v4020, %v4074
        %v4091 = vmul.f32 %v4029, %v4075
        %v4092 = vmul.f32 %v4038, %v4076
        %v4093 = vmul.f32 %v4047, %v4077
        %v4094 = vmul.f32 %v4056, %v4078
        %v4095 = vmul.f32 %v4065, %v4079
        %s4096 = scalar_lea.vmem %s5, 160
        %v4097 = vld [vmem:[%s4096] sm:$0xff]
        %v4098 = vld [vmem:[%s4096 + $0x8] sm:$0xff]
        %v4099 = vld [vmem:[%s4096 + $0x10] sm:$0xff]
        %v4100 = vld [vmem:[%s4096 + $0x18] sm:$0xff]
        %v4109 = vrot.slane %v4089, 7
        %vm4110 = vcmask 1041409
        %v4111 = vsel %vm4110, %v4109, %v4088
        %v4112 = vrot.slane %v4090, 6
        %vm4113 = vcmask 1042434
        %v4114 = vsel %vm4113, %v4112, %v4111
        %v4115 = vrot.slane %v4091, 5
        %vm4116 = vcmask 1043459
        %v4117 = vsel %vm4116, %v4115, %v4114
        %v4118 = vrot.slane %v4092, 4
        %vm4119 = vcmask 1044484
        %v4120 = vsel %vm4119, %v4118, %v4117
        %v4121 = vrot.slane %v4093, 3
        %vm4122 = vcmask 1045509
        %v4123 = vsel %vm4122, %v4121, %v4120
        %v4124 = vrot.slane %v4094, 2
        %vm4125 = vcmask 1046534
        %v4126 = vsel %vm4125, %v4124, %v4123
        %v4127 = vrot.slane %v4095, 1
        %vm4128 = vcmask 1047559
        %v4129 = vsel %vm4128, %v4127, %v4126
        %v4130 = vsel %vm567, %v4129, 0
        %4132 = vmatprep.subr.mxu0 0.0
        %4133 = vmatpush1.msra.mxu0 %v4097
        %4134 = vmatprep.subr.mxu0 0.0
        %4135 = vmatpush1.msra.mxu0 %v4098
        %4136 = vmatprep.subr.mxu0 0.0
        %4137 = vmatpush1.msra.mxu0 %v4099
        %4138 = vmatprep.subr.mxu0 0.0
        %4139 = vmatpush1.msra.mxu0 %v4100
        %4140 = vmatprep.subr.mxu0 0.0
        %4141 = vmatpush1.msra.mxu0 0.0
        %4142 = vmatprep.subr.mxu0 0.0
        %4143 = vmatpush1.msra.mxu0 0.0
        %4144 = vmatprep.subr.mxu0 0.0
        %4145 = vmatpush1.msra.mxu0 0.0
        %4146 = vmatprep.subr.mxu0 0.0
        %4147 = vmatpush1.msra.mxu0 0.0
        %4148 = vmatprep.subr.mxu0 0.0
        %4149 = vmatpush1.msra.mxu0 0.0
        %4150 = vmatprep.subr.mxu0 0.0
        %4151 = vmatpush1.msra.mxu0 0.0
        %4152 = vmatprep.subr.mxu0 0.0
        %4153 = vmatpush1.msra.mxu0 0.0
        %4154 = vmatprep.subr.mxu0 0.0
        %4155 = vmatpush1.msra.mxu0 0.0
        %4156 = vmatprep.subr.mxu0 0.0
        %4157 = vmatpush1.msra.mxu0 0.0
        %4158 = vmatprep.subr.mxu0 0.0
        %4159 = vmatpush1.msra.mxu0 0.0
        %4160 = vmatprep.subr.mxu0 0.0
        %4161 = vmatpush1.msra.mxu0 0.0
        %4162 = vmatprep.subr.mxu0 0.0
        %4163 = vmatpush1.msra.mxu0 0.0
        %4164 = vmatprep.subr.mxu0 0.0
        %4165 = vmatpush1.msra.mxu0 0.0
        %4166 = vmatprep.subr.mxu0 0.0
        %4167 = vmatpush1.msra.mxu0 0.0
        %4168 = vmatprep.subr.mxu0 0.0
        %4169 = vmatpush1.msra.mxu0 0.0
        %4170 = vmatprep.subr.mxu0 0.0
        %4171 = vmatpush1.msra.mxu0 0.0
        %4172 = vmatprep.subr.mxu0 0.0
        %4173 = vmatpush1.msra.mxu0 0.0
        %4174 = vmatprep.subr.mxu0 0.0
        %4175 = vmatpush1.msra.mxu0 0.0
        %4176 = vmatprep.subr.mxu0 0.0
        %4177 = vmatpush1.msra.mxu0 0.0
        %4178 = vmatprep.subr.mxu0 0.0
        %4179 = vmatpush1.msra.mxu0 0.0
        %4180 = vmatprep.subr.mxu0 0.0
        %4181 = vmatpush1.msra.mxu0 0.0
        %4182 = vmatprep.subr.mxu0 0.0
        %4183 = vmatpush1.msra.mxu0 0.0
        %4184 = vmatprep.subr.mxu0 0.0
        %4185 = vmatpush1.msra.mxu0 0.0
        %4186 = vmatprep.subr.mxu0 0.0
        %4187 = vmatpush1.msra.mxu0 0.0
        %4188 = vmatprep.subr.mxu0 0.0
        %4189 = vmatpush1.msra.mxu0 0.0
        %4190 = vmatprep.subr.mxu0 0.0
        %4191 = vmatpush1.msra.mxu0 0.0
        %4192 = vmatprep.subr.mxu0 0.0
        %4193 = vmatpush1.msra.mxu0 0.0
        %4194 = vmatprep.subr.mxu0 0.0
        %4195 = vmatpush1.msra.mxu0 0.0
        %4196 = vmatprep.mubr.f32.mxu0 0.0
        %4197 = vmatmul.mubr.f32.gmra.mrb[0].mxu0 %v4130
        %v4198 = vpop.f32.mrb[0].mxu0
        %v4199 = vadd.f32 0.0, %v4198
        %v4200 = vpop.f32.mrb[0].mxu0
        %4201 = vdwg.mxu0
        %v4202 = vadd.f32 %v543, %v4199
        %v4203 = vlaneseq
        %v4204 = vshrl.u32 %v4203, 7
        %v4205 = vsub.s32 1, %v4204
        %v4206 = vrot.slane %v565, %v4205
        %v4207 = vadd.f32 %v4202, %v4206
        %v4208 = vsel %vm567, %v4207, 0.0
        %4209 = vadd.xlane.f32.xlu0 %v4208
        %v4210 = vpop.xlane.xlu0 %4209
        %v4211 = vmul.f32 %v4210, %v574
        %v4212 = vsub.f32 %v4207, %v4211
        %v4213 = vmul.f32 %v4212, %v4212
        %v4214 = vsel %vm567, %v4213, 0.0
        %4215 = vadd.xlane.f32.xlu0 %v4214
        %v4216 = vpop.xlane.xlu0 %4215
        %v4217 = vmul.f32 %v4216, %v574
        %v4218 = vadd.f32 %v4217, 1e-05
        %v4219 = vrsqrt.pop %v4218
        %v4220 = vmul.f32 %v4212, %v4219
        %v4221 = vmul.f32 %v4220, %v598
        %v4222 = vadd.f32 %v4221, %v604
        %s4223 = scalar_lea.vmem %s5, 192
        %v4224 = vld [vmem:[%s4223] sm:$0xff]
        %v4225 = vld [vmem:[%s4223 + $0x8] sm:$0xff]
        %v4226 = vld [vmem:[%s4223 + $0x10] sm:$0xff]
        %v4227 = vld [vmem:[%s4223 + $0x18] sm:$0xff]
        %v4228 = vlaneseq
        %v4229 = vshrl.u32 %v4228, 7
        %v4230 = vsub.s32 2, %v4229
        %v4231 = vrot.slane %v565, %v4230
        %v4233 = vsel %vm567, %v4222, 0
        %4235 = vmatprep.subr.mxu0 0.0
        %4236 = vmatpush1.msra.mxu0 %v4224
        %4237 = vmatprep.subr.mxu0 0.0
        %4238 = vmatpush1.msra.mxu0 %v4225
        %4239 = vmatprep.subr.mxu0 0.0
        %4240 = vmatpush1.msra.mxu0 %v4226
        %4241 = vmatprep.subr.mxu0 0.0
        %4242 = vmatpush1.msra.mxu0 %v4227
        %4243 = vmatprep.subr.mxu0 0.0
        %4244 = vmatpush1.msra.mxu0 0.0
        %4245 = vmatprep.subr.mxu0 0.0
        %4246 = vmatpush1.msra.mxu0 0.0
        %4247 = vmatprep.subr.mxu0 0.0
        %4248 = vmatpush1.msra.mxu0 0.0
        %4249 = vmatprep.subr.mxu0 0.0
        %4250 = vmatpush1.msra.mxu0 0.0
        %4251 = vmatprep.subr.mxu0 0.0
        %4252 = vmatpush1.msra.mxu0 0.0
        %4253 = vmatprep.subr.mxu0 0.0
        %4254 = vmatpush1.msra.mxu0 0.0
        %4255 = vmatprep.subr.mxu0 0.0
        %4256 = vmatpush1.msra.mxu0 0.0
        %4257 = vmatprep.subr.mxu0 0.0
        %4258 = vmatpush1.msra.mxu0 0.0
        %4259 = vmatprep.subr.mxu0 0.0
        %4260 = vmatpush1.msra.mxu0 0.0
        %4261 = vmatprep.subr.mxu0 0.0
        %4262 = vmatpush1.msra.mxu0 0.0
        %4263 = vmatprep.subr.mxu0 0.0
        %4264 = vmatpush1.msra.mxu0 0.0
        %4265 = vmatprep.subr.mxu0 0.0
        %4266 = vmatpush1.msra.mxu0 0.0
        %4267 = vmatprep.subr.mxu0 0.0
        %4268 = vmatpush1.msra.mxu0 0.0
        %4269 = vmatprep.subr.mxu0 0.0
        %4270 = vmatpush1.msra.mxu0 0.0
        %4271 = vmatprep.subr.mxu0 0.0
        %4272 = vmatpush1.msra.mxu0 0.0
        %4273 = vmatprep.subr.mxu0 0.0
        %4274 = vmatpush1.msra.mxu0 0.0
        %4275 = vmatprep.subr.mxu0 0.0
        %4276 = vmatpush1.msra.mxu0 0.0
        %4277 = vmatprep.subr.mxu0 0.0
        %4278 = vmatpush1.msra.mxu0 0.0
        %4279 = vmatprep.subr.mxu0 0.0
        %4280 = vmatpush1.msra.mxu0 0.0
        %4281 = vmatprep.subr.mxu0 0.0
        %4282 = vmatpush1.msra.mxu0 0.0
        %4283 = vmatprep.subr.mxu0 0.0
        %4284 = vmatpush1.msra.mxu0 0.0
        %4285 = vmatprep.subr.mxu0 0.0
        %4286 = vmatpush1.msra.mxu0 0.0
        %4287 = vmatprep.subr.mxu0 0.0
        %4288 = vmatpush1.msra.mxu0 0.0
        %4289 = vmatprep.subr.mxu0 0.0
        %4290 = vmatpush1.msra.mxu0 0.0
        %4291 = vmatprep.subr.mxu0 0.0
        %4292 = vmatpush1.msra.mxu0 0.0
        %4293 = vmatprep.subr.mxu0 0.0
        %4294 = vmatpush1.msra.mxu0 0.0
        %4295 = vmatprep.subr.mxu0 0.0
        %4296 = vmatpush1.msra.mxu0 0.0
        %4297 = vmatprep.subr.mxu0 0.0
        %4298 = vmatpush1.msra.mxu0 0.0
        %4299 = vmatprep.mubr.f32.mxu0 0.0
        %4300 = vmatmul.mubr.f32.gmra.mrb[0].mxu0 %v4233
        %v4301 = vpop.f32.mrb[0].mxu0
        %v4302 = vadd.f32 %v4231, %v4301
        %v4303 = vpop.f32.mrb[0].mxu0
        %4304 = vdwg.mxu0
        %vm4305 = vcmp.gt.f32.partialorder %v4302, 20.0
        %v4306 = vmin.f32 %v4302, 20.0
        %v4307 = vmul.f32 %v4306, 1.442695
        %v4308 = vpow.pop %v4307
        %v4309 = vadd.f32 %v4308, 1.0
        %v4310 = vlog2.pop %v4309
        %v4311 = vmul.f32 %v4310, 0.6931472
        %v4312 = vmul.f32 -0.5, %v4308
        %v4313 = vadd.f32 %v4312, 1.0
        %v4314 = vmul.f32 %v4313, %v4308
        %v4315 = vand.u32 2147483647, %v4308
        %vm4316 = vcmp.lt.f32.partialorder %v4315, 0.0004427343
        %v4317 = vsel %vm4316, %v4314, %v4311
        %v4318 = vsel %vm4305, %v4302, %v4317
        %v4319 = vtanh.pop %v4318
        %v4320 = vmul.f32 %v4302, %v4319
        %v4321 = vadd.f32 %v4207, %v4320
        %v4322 = vsel %vm567, %v4321, 0.0
        %4323 = vadd.xlane.f32.xlu0 %v4322
        %v4324 = vpop.xlane.xlu0 %4323
        %v4325 = vmul.f32 %v4324, %v574
        %v4326 = vsub.f32 %v4321, %v4325
        %v4327 = vmul.f32 %v4326, %v4326
        %v4328 = vsel %vm567, %v4327, 0.0
        %4329 = vadd.xlane.f32.xlu0 %v4328
        %v4330 = vpop.xlane.xlu0 %4329
        %v4331 = vmul.f32 %v4330, %v574
        %v4332 = vadd.f32 %v4331, 1e-05
        %v4333 = vrsqrt.pop %v4332
        %v4334 = vmul.f32 %v4326, %v4333
        %v4335 = vmul.f32 %v4334, %v598
        %v4336 = vadd.f32 %v4335, %v604
        %4337 = vst.msk [vmem:[%s483] sm:$0xff] %vm567, %v4336
        %4338 = vst.msk [vmem:[%s539] sm:$0xff] %vm567, %v2804
        %4339 = vst.msk [vmem:[%s539 + $0x8] sm:$0xff] %vm567, %v2805
        %4340 = vst.msk [vmem:[%s539 + $0x10] sm:$0xff] %vm567, %v2806
        %4341 = vst.msk [vmem:[%s539 + $0x18] sm:$0xff] %vm567, %v2807
        %4342 = vst.msk [vmem:[%s539 + $0x20] sm:$0xff] %vm567, %v2808
        %4343 = vst.msk [vmem:[%s539 + $0x28] sm:$0xff] %vm567, %v2809
        %4344 = vst.msk [vmem:[%s539 + $0x30] sm:$0xff] %vm567, %v2810
        %4345 = vst.msk [vmem:[%s539 + $0x38] sm:$0xff] %vm567, %v2811
        %4346 = vst.msk [vmem:[%s539 + $0x40] sm:$0xff] %vm567, %v2812
        %4347 = vst.msk [vmem:[%s539 + $0x48] sm:$0xff] %vm567, %v2813
        %4348 = vst.msk [vmem:[%s539 + $0x50] sm:$0xff] %vm567, %v2814
        %4349 = vst.msk [vmem:[%s539 + $0x58] sm:$0xff] %vm567, %v2815
        %4350 = vst.msk [vmem:[%s539 + $0x60] sm:$0xff] %vm567, %v2816
        %4351 = vst.msk [vmem:[%s539 + $0x68] sm:$0xff] %vm567, %v2817
        %4352 = vst.msk [vmem:[%s539 + $0x70] sm:$0xff] %vm567, %v2818
        %4353 = vst.msk [vmem:[%s539 + $0x78] sm:$0xff] %vm567, %v2819
        %s4354 = sand.u32 %s289, 1
        %s4355 = scalar_lea.sflag [#allocation3], %s4354
        %s4356 = sand.u32 %s289, 1
        %s4357 = smul.addr %s4356, 8
        %s4358 = scalar_lea.vmem [#allocation2], %s4357
        %s4359 = smul.u32 16, %s31
        %p4360 = scmp.lt.s32.totalorder %s30, 1
        %s4361 = scalar_select %p4360, %s30, 1
        %p4362 = scmp.lt.s32.totalorder %s4359, 31
        %s4363 = scalar_select %p4362, %s4359, 31
        %s4364 = smul.addr %s4361, 32
        %s4365 = sadd.s32 %s4363, %s4364
        %s4366 = smul.addr %s4365, 8
        %s4367 = scalar_lea.vmem %s11, %s4366
        // Predicated region
        $region61: #{tpu_custom_call.1} parent=59 // pred_check
          %p4368 = pneg %p299
        $region62: #{tpu_custom_call.1} parent=59 // pred_check_branch
          %4370 = sbr.rel (%p4368) target = $region64
        $region63: #{tpu_custom_call.1} parent=59 // pred_region
          %s4372 = ssub.s32 128, 128
          %4373 = vsyncadd %s4355, %s4372
          %s4374 = smul.addr %s30, 2
          %s4375 = sadd.s32 %s31, %s4374
          %s4376 = smul.addr %s4375, 128
          %s4377 = scalar_lea.hbm %s10, %s4376
          %s4379 = sshll.u32 %s4358, 4
          %s4380 = int_to_ptr.vmem [resolvable:$true] %s4379
          %4382 = dma.vmem_to_hbm [thread:$0]  %s4380, 128, %s4377, %s4355
        $region64: #{tpu_custom_call.1} parent=59 // pred_fallthru
          _
        // Predicated region
        $region65: #{tpu_custom_call.1} parent=59 // pred_check
          %p4383 = pneg %p327
        $region66: #{tpu_custom_call.1} parent=59 // pred_check_branch
          %4385 = sbr.rel (%p4383) target = $region68
        $region67: #{tpu_custom_call.1} parent=59 // pred_region
          %s4386 = smul.u32 16, %s31
        $region68: #{tpu_custom_call.1} parent=59 // pred_fallthru
          _
      $region60: #{tpu_custom_call.1} parent=5 // pred_fallthru
        _
      %p4387 = scmp.le.s32.totalorder 2, %s21
      // Predicated region
      $region69: #{tpu_custom_call.1} parent=5 // pred_check
        %p4388 = pneg %p4387
      $region70: #{tpu_custom_call.1} parent=5 // pred_check_branch
        %4390 = sbr.rel (%p4388) target = $region72
      $region71: #{tpu_custom_call.1} parent=5 // pred_region
        %s4391 = ssub.s32 %s21, 2
        // Predicated region
        $region73: #{tpu_custom_call.1} parent=71 // pred_check
          %p4392 = pneg %p305
        $region74: #{tpu_custom_call.1} parent=71 // pred_check_branch
          %4394 = sbr.rel (%p4392) target = $region76
        $region75: #{tpu_custom_call.1} parent=71 // pred_region
          %s4395 = sand.u32 %s290, 1
          %s4396 = scalar_lea.sflag [#allocation3], %s4395
          %s4397 = sand.u32 %s290, 1
          %s4398 = smul.addr %s4397, 8
          %s4399 = scalar_lea.vmem [#allocation2], %s4398
          %4400 = dma.done %s4396, 128
        $region76: #{tpu_custom_call.1} parent=71 // pred_fallthru
          _
        // Predicated region
        $region77: #{tpu_custom_call.1} parent=71 // pred_check
          %p4401 = pneg %p333
        $region78: #{tpu_custom_call.1} parent=71 // pred_check_branch
          %4403 = sbr.rel (%p4401) target = $region80
        $region79: #{tpu_custom_call.1} parent=71 // pred_region
          %s4404 = smul.u32 16, %s33
          %p4405 = scmp.lt.s32.totalorder %s32, 1
          %s4406 = scalar_select %p4405, %s32, 1
          %p4407 = scmp.lt.s32.totalorder %s4404, 31
          %s4408 = scalar_select %p4407, %s4404, 31
          %s4409 = smul.addr %s4406, 32
          %s4410 = sadd.s32 %s4408, %s4409
          %s4411 = smul.addr %s4410, 8
          %s4412 = scalar_lea.vmem %s11, %s4411
        $region80: #{tpu_custom_call.1} parent=71 // pred_fallthru
          _
      $region72: #{tpu_custom_call.1} parent=5 // pred_fallthru
        _
    $region6: #{tpu_custom_call.1} parent=1 // loop_footer
      %s25 = sadd.s32 1, %s21
    $region7: #{tpu_custom_call.1} parent=1 // loop_footer_branch
      %20 = sbr.rel target = $region3
    $region8: #{tpu_custom_call.1} parent=1 // loop_exit
      _
    %4413 = vsyncpa [#allocation3], 1
    %s4414 = scalar_lea.sflag [#allocation3], 1
    %4415 = vsyncpa %s4414, 1

</llo_original>
